<compile_context>
chip_gen: v6e
topology: v6e:2x2x1
jax: 0.10.0
libtpu: 0.0.40
codegen_flags: <defaults>
</compile_context>

<pallas_src>
import math

import jax
import jax.numpy as jnp
from jax.experimental import pallas as pl
from jax.experimental.pallas import tpu as pltpu

# ---- small synthetic configuration (same structure as sEMGtransformer) -----
# original defaults: patch_size=64, seq_len=4000//64, C=4 sEMG channels,
# d_model=512, nhead=8, dim_feedforward=2048, num_layers=1.
PATCH = 8
C_IN = 4
SEQ_LEN = 8                    # == L // PATCH (original: 4000 // patch_size)
L_IN = SEQ_LEN * PATCH
D_MODEL = 32
NHEAD = 4
HEAD_DIM = D_MODEL // NHEAD
D_FF = 64
T = SEQ_LEN + 1                # real tokens including the CLS token
T_PAD = 16                     # token rows per batch, padded to sublane multiple
OUT_PAD = 128                  # lane-dense logits slab; real logits are [:, :2]
LN_EPS = 1e-5
NEG = -1e30                    # softmax mask value for padded key columns


def _ln_normalize(x):
    # LayerNorm without the affine part (weight/bias folded into the next
    # projection by the wrapper).
    mu = jnp.mean(x, axis=-1, keepdims=True)
    xc = x - mu
    var = jnp.mean(xc * xc, axis=-1, keepdims=True)
    return xc * jax.lax.rsqrt(var + LN_EPS)


def _erf(x):
    # TODO(synk): lax.erf has no guaranteed Mosaic lowering; exact erf-GELU is
    # computed with a float32-accurate polynomial (A&S 7.1.26, |err| < 1.5e-7).
    a1, a2, a3, a4, a5 = (0.254829592, -0.284496736, 1.421413741,
                          -1.453152027, 1.061405429)
    p = 0.3275911
    z = jnp.abs(x)
    t = 1.0 / (1.0 + p * z)
    poly = ((((a5 * t + a4) * t + a3) * t + a2) * t + a1) * t
    y = 1.0 - poly * jnp.exp(-z * z)
    return jnp.where(x < 0.0, -y, y)


def _gelu(x):  # exact (erf-based) GELU, matching torch nn.GELU() default
    return 0.5 * x * (1.0 + _erf(x * (1.0 / math.sqrt(2.0))))


def semg_kernel(
    xp_ref, add_ref, w_in_ref,
    wqkv_ref, bqkv_ref, wo_ref, bo_ref,
    w1_ref, b1_ref, w2_ref, b2_ref,
    kmask_ref, pool_ref, wh_ref, bh_ref,
    o_ref,
):
    bb = xp_ref.shape[0] // T_PAD          # batches handled by this grid step

    # --- patch embedding for all (batch, token) rows at once ---------------
    # cls / pad rows of xp are zero, so the additive constant alone supplies
    # (cls + pos[0]) / 0 there; patch rows get (x @ W_in) + b_in + pos[1+s].
    x2 = jnp.dot(xp_ref[...], w_in_ref[...], preferred_element_type=jnp.float32)
    x2 = x2 + add_ref[...]                                     # (bb*T_PAD, D)

    # --- pre-LN multi-head self-attention block ----------------------------
    h2 = _ln_normalize(x2)                  # LN affine folded into wqkv/bqkv
    qkv2 = jnp.dot(h2, wqkv_ref[...],
                   preferred_element_type=jnp.float32) + bqkv_ref[...]  # (bb*T_PAD, 3D)
    qkv3 = qkv2.reshape(bb, T_PAD, 3 * D_MODEL)
    kmask = kmask_ref[...]                                     # (1, T_PAD, T_PAD)
    heads = []
    for hh in range(NHEAD):                                    # static unrolled head loop
        lo = hh * HEAD_DIM
        q = qkv3[:, :, lo:lo + HEAD_DIM]                       # 1/sqrt(hd) folded into wqkv
        k = qkv3[:, :, D_MODEL + lo:D_MODEL + lo + HEAD_DIM]
        v = qkv3[:, :, 2 * D_MODEL + lo:2 * D_MODEL + lo + HEAD_DIM]
        s = jnp.einsum("bqe,bke->bqk", q, k, preferred_element_type=jnp.float32)
        s = s + kmask                                          # kill padded key columns
        s = s - jnp.max(s, axis=-1, keepdims=True)
        p = jnp.exp(s)
        p = p * pl.reciprocal(jnp.sum(p, axis=-1, keepdims=True), approx=True)
        heads.append(jnp.einsum("bqk,bke->bqe", p, v,
                                preferred_element_type=jnp.float32))
    o3 = jnp.concatenate(heads, axis=-1)                       # (bb, T_PAD, D)
    o2 = o3.reshape(bb * T_PAD, D_MODEL)
    x2 = x2 + jnp.dot(o2, wo_ref[...],
                      preferred_element_type=jnp.float32) + bo_ref[...]

    # --- pre-LN feed-forward block (exact GELU) ----------------------------
    h2 = _ln_normalize(x2)                  # LN affine folded into w1/b1
    f = jnp.dot(h2, w1_ref[...], preferred_element_type=jnp.float32) + b1_ref[...]
    f = _gelu(f)
    x2 = x2 + jnp.dot(f, w2_ref[...],
                      preferred_element_type=jnp.float32) + b2_ref[...]

    # --- mean over the T real tokens (as a matmul) + lane-dense head -------
    pooled = jnp.dot(pool_ref[...], x2, preferred_element_type=jnp.float32)  # (bb, D)
    o_ref[...] = (jnp.dot(pooled, wh_ref[...],
                          preferred_element_type=jnp.float32) + bh_ref[...])


def init_params(key):
    ks = jax.random.split(key, 20)

    def nrm(k, shape, scale):
        return scale * jax.random.normal(k, shape, dtype=jnp.float32)

    p = {}
    p["cls"] = jax.random.uniform(ks[0], (1, D_MODEL), dtype=jnp.float32)  # torch.rand
    p["pos"] = jax.random.normal(ks[1], (T, D_MODEL), dtype=jnp.float32)   # torch.randn
    p["w_in"] = nrm(ks[2], (C_IN * PATCH, D_MODEL), 0.06)  # Linear stored as (in, out)
    p["b_in"] = nrm(ks[3], (1, D_MODEL), 0.02)
    p["ln1w"] = jnp.ones((1, D_MODEL), jnp.float32)
    p["ln1b"] = jnp.zeros((1, D_MODEL), jnp.float32)
    p["wq"] = nrm(ks[4], (D_MODEL, D_MODEL), 0.08)         # == in_proj_weight[:D].T
    p["bq"] = nrm(ks[5], (1, D_MODEL), 0.02)
    p["wk"] = nrm(ks[6], (D_MODEL, D_MODEL), 0.08)
    p["bk"] = nrm(ks[7], (1, D_MODEL), 0.02)
    p["wv"] = nrm(ks[8], (D_MODEL, D_MODEL), 0.08)
    p["bv"] = nrm(ks[9], (1, D_MODEL), 0.02)
    p["wo"] = nrm(ks[10], (D_MODEL, D_MODEL), 0.08)        # == out_proj.weight.T
    p["bo"] = nrm(ks[11], (1, D_MODEL), 0.02)
    p["ln2w"] = jnp.ones((1, D_MODEL), jnp.float32)
    p["ln2b"] = jnp.zeros((1, D_MODEL), jnp.float32)
    p["w1"] = nrm(ks[12], (D_MODEL, D_FF), 0.08)
    p["b1"] = nrm(ks[13], (1, D_FF), 0.02)
    p["w2"] = nrm(ks[14], (D_FF, D_MODEL), 0.08)
    p["b2"] = nrm(ks[15], (1, D_MODEL), 0.02)
    p["wh"] = nrm(ks[16], (D_MODEL, 2), 0.08)
    p["bh"] = nrm(ks[17], (1, 2), 0.02)
    return p


def semg_transformer_forward(x, params):
    B, C, L = x.shape
    assert C == C_IN
    Lt = (L // PATCH) * PATCH
    x = x[:, :, :Lt]
    S = Lt // PATCH
    assert S == SEQ_LEN, "L must yield seq_len patches (L ~ 4000 in the original)"

    # ---------- wrapper-side layout plumbing (constant / tiny under jit) ----
    # patchify: (B, C, S, P) -> (B, S, C, P) -> (B, S, C*P)
    xp = x.reshape(B, C, S, PATCH).transpose(0, 2, 1, 3).reshape(B, S, C * PATCH)
    # pad each batch's token axis to T_PAD rows: [patches(8) | cls slot | pads]
    xp_pad = jnp.zeros((B, T_PAD, C * PATCH), jnp.float32).at[:, :S, :].set(xp)
    xp2 = xp_pad.reshape(B * T_PAD, C * PATCH)

    # batch-block size: process b_blk batches (b_blk*T_PAD token rows) per step
    if B <= 8:
        b_blk = B
    else:
        assert B % 8 == 0, "demo wrapper requires B <= 8 or B % 8 == 0"
        b_blk = 8
    n_blk = B // b_blk

    # additive constant per token row: b_in + pos for patch rows, cls + pos[0]
    # for the cls row (NOT passed through input_project), zeros for pad rows.
    add_const = jnp.concatenate([
        params["b_in"] + params["pos"][1:T],
        params["cls"] + params["pos"][0:1],
        jnp.zeros((T_PAD - T, D_MODEL), jnp.float32),
    ], axis=0)                                                # (T_PAD, D)
    add2 = jnp.tile(add_const, (b_blk, 1))                    # (b_blk*T_PAD, D)

    # fused QKV projection; 1/sqrt(head_dim) folded into the Q slice, and the
    # LayerNorm affine (ln1 weight/bias) folded in as well (exact rewrite):
    #   (n(x)*w + b) @ W + c  ==  n(x) @ (w^T * W) + (b @ W + c)
    scale = 1.0 / math.sqrt(HEAD_DIM)
    wqkv = jnp.concatenate(
        [params["wq"] * scale, params["wk"], params["wv"]], axis=1)   # (D, 3D)
    bqkv = jnp.concatenate(
        [params["bq"] * scale, params["bk"], params["bv"]], axis=1)   # (1, 3D)
    wqkv_f = params["ln1w"].reshape(D_MODEL, 1) * wqkv
    bqkv_f = params["ln1b"] @ wqkv + bqkv

    # same folding for the FFN first projection (ln2 affine)
    w1_f = params["ln2w"].reshape(D_MODEL, 1) * params["w1"]
    b1_f = params["ln2b"] @ params["w1"] + params["b1"]

    # softmax mask for padded key columns + mean-pool matrix over real tokens
    col = jnp.arange(T_PAD, dtype=jnp.int32)
    kmask = jnp.where(col < T, 0.0, NEG).astype(jnp.float32)
    kmask = jnp.broadcast_to(kmask[None, :], (T_PAD, T_PAD))[None]    # (1,TP,TP)
    pool_row = jnp.where(col < T, 1.0 / T, 0.0).astype(jnp.float32)   # (T_PAD,)
    pool = jnp.kron(jnp.eye(b_blk, dtype=jnp.float32),
                    pool_row[None, :])                        # (b_blk, b_blk*T_PAD)

    # lane-dense classification head: pad the 2 logit columns to OUT_PAD lanes
    wh_pad = jnp.zeros((D_MODEL, OUT_PAD), jnp.float32).at[:, :2].set(params["wh"])
    bh_pad = jnp.zeros((1, OUT_PAD), jnp.float32).at[:, :2].set(params["bh"])

    def fullspec(shape):
        nd = len(shape)
        return pl.BlockSpec(shape, lambda i, _nd=nd: (0,) * _nd)

    in_specs = [
        pl.BlockSpec((b_blk * T_PAD, C_IN * PATCH), lambda i: (i, 0)),   # xp2
        fullspec((b_blk * T_PAD, D_MODEL)),                              # add2
        fullspec((C_IN * PATCH, D_MODEL)),                               # w_in
        fullspec((D_MODEL, 3 * D_MODEL)), fullspec((1, 3 * D_MODEL)),    # wqkv, bqkv
        fullspec((D_MODEL, D_MODEL)), fullspec((1, D_MODEL)),            # wo, bo
        fullspec((D_MODEL, D_FF)), fullspec((1, D_FF)),                  # ffn 1
        fullspec((D_FF, D_MODEL)), fullspec((1, D_MODEL)),               # ffn 2
        fullspec((1, T_PAD, T_PAD)),                                     # kmask
        fullspec((b_blk, b_blk * T_PAD)),                                # pool
        fullspec((D_MODEL, OUT_PAD)), fullspec((1, OUT_PAD)),            # head
    ]

    grid_spec = pltpu.PrefetchScalarGridSpec(
        num_scalar_prefetch=0,
        grid=(n_blk,),
        in_specs=in_specs,
        out_specs=pl.BlockSpec((b_blk, OUT_PAD), lambda i: (i, 0)),
    )

    fn = pl.pallas_call(
        semg_kernel,
        out_shape=jax.ShapeDtypeStruct((B, OUT_PAD), jnp.float32),
        grid_spec=grid_spec,
        compiler_params=pltpu.CompilerParams(
            # per-block output tiles make the batch axis safe to shard across
            # the two v7x TensorCores; neutral on single-TC v5e/v6e.
            dimension_semantics=("parallel",)),
    )
    out = fn(
        xp2, add2, params["w_in"],
        wqkv_f, bqkv_f, params["wo"], params["bo"],
        w1_f, b1_f, params["w2"], params["b2"],
        kmask, pool, wh_pad, bh_pad,
    )
    return out[:, :2]


def reference_forward(x, params):
    """Pure-JAX (XLA) reference matching the PyTorch module, for validation."""
    B, C, L = x.shape
    Lt = (L // PATCH) * PATCH
    x = x[:, :, :Lt]
    S = Lt // PATCH
    xp = x.reshape(B, C, S, PATCH).transpose(0, 2, 1, 3).reshape(B, S, C * PATCH)
    h = xp @ params["w_in"] + params["b_in"]                        # (B, S, D)
    cls = jnp.broadcast_to(params["cls"][None], (B, 1, D_MODEL))
    h = jnp.concatenate([cls, h], axis=1) + params["pos"][None]     # (B, T, D)

    def ln(y, w, b):
        mu = y.mean(-1, keepdims=True)
        var = ((y - mu) ** 2).mean(-1, keepdims=True)
        return (y - mu) * jax.lax.rsqrt(var + LN_EPS) * w + b

    hn = ln(h, params["ln1w"], params["ln1b"])
    q = (hn @ params["wq"] + params["bq"]).reshape(B, T + 0, NHEAD, HEAD_DIM)
    k = (hn @ params["wk"] + params["bk"]).reshape(B, T + 0, NHEAD, HEAD_DIM)
    v = (hn @ params["wv"] + params["bv"]).reshape(B, T + 0, NHEAD, HEAD_DIM)
    q = q.transpose(0, 2, 1, 3)
    k = k.transpose(0, 2, 1, 3)
    v = v.transpose(0, 2, 1, 3)
    s = jnp.einsum("bhqe,bhke->bhqk", q, k) / math.sqrt(HEAD_DIM)
    p = jax.nn.softmax(s, axis=-1)
    o = jnp.einsum("bhqk,bhke->bhqe", p, v).transpose(0, 2, 1, 3).reshape(B, T, D_MODEL)
    h = h + o @ params["wo"] + params["bo"]
    hn = ln(h, params["ln2w"], params["ln2b"])
    f = jax.nn.gelu(hn @ params["w1"] + params["b1"], approximate=False)
    h = h + f @ params["w2"] + params["b2"]
    pooled = h.mean(axis=1)
    return pooled @ params["wh"] + params["bh"]


if __name__ == "__main__":
    key = jax.random.PRNGKey(0)
    kx, kp = jax.random.split(key)
    x = jax.random.normal(kx, (2, C_IN, L_IN), dtype=jnp.float32)  # (B, C, L)
    params = init_params(kp)

    out = jax.jit(semg_transformer_forward)(x, params)
    out = jax.block_until_ready(out)
    assert out.shape == (2, 2) and out.dtype == jnp.float32

    ref = jax.jit(reference_forward)(x, params)
    ref = jax.block_until_ready(ref)
    assert bool(jnp.all(jnp.isfinite(out)))
    assert bool(jnp.allclose(out, ref, atol=1e-2, rtol=1e-2)), (
        f"mismatch: max abs diff {float(jnp.max(jnp.abs(out - ref)))}")

    print("KERNEL_OK")
</pallas_src>

<mosaic_0001>
module attributes {stable_mosaic.version = 11 : i64} {
  func.func @semg_kernel(%arg0: i32, %arg1: memref<32x32xf32, #tpu.memory_space<vmem>>, %arg2: memref<32x32xf32, #tpu.memory_space<vmem>>, %arg3: memref<32x32xf32, #tpu.memory_space<vmem>>, %arg4: memref<32x96xf32, #tpu.memory_space<vmem>>, %arg5: memref<1x96xf32, #tpu.memory_space<vmem>>, %arg6: memref<32x32xf32, #tpu.memory_space<vmem>>, %arg7: memref<1x32xf32, #tpu.memory_space<vmem>>, %arg8: memref<32x64xf32, #tpu.memory_space<vmem>>, %arg9: memref<1x64xf32, #tpu.memory_space<vmem>>, %arg10: memref<64x32xf32, #tpu.memory_space<vmem>>, %arg11: memref<1x32xf32, #tpu.memory_space<vmem>>, %arg12: memref<1x16x16xf32, #tpu.memory_space<vmem>>, %arg13: memref<2x32xf32, #tpu.memory_space<vmem>>, %arg14: memref<32x128xf32, #tpu.memory_space<vmem>>, %arg15: memref<1x128xf32, #tpu.memory_space<vmem>>, %arg16: memref<2x128xf32, #tpu.memory_space<vmem>>) attributes {dimension_semantics = [#tpu.dimension_semantics<parallel>], iteration_bounds = array<i64: 1>, scalar_prefetch = 0 : i64, scratch_operands = 0 : i64, tpu.core_type = #tpu.core_type<tc>, window_params = [{transform_indices = @transform_0, window_bounds = array<i64: 32, 32>}, {pipeline_mode = #tpu.pipeline_mode<synchronous>, transform_indices = @transform_1, window_bounds = array<i64: 32, 32>}, {pipeline_mode = #tpu.pipeline_mode<synchronous>, transform_indices = @transform_2, window_bounds = array<i64: 32, 32>}, {pipeline_mode = #tpu.pipeline_mode<synchronous>, transform_indices = @transform_3, window_bounds = array<i64: 32, 96>}, {pipeline_mode = #tpu.pipeline_mode<synchronous>, transform_indices = @transform_4, window_bounds = array<i64: 1, 96>}, {pipeline_mode = #tpu.pipeline_mode<synchronous>, transform_indices = @transform_5, window_bounds = array<i64: 32, 32>}, {pipeline_mode = #tpu.pipeline_mode<synchronous>, transform_indices = @transform_6, window_bounds = array<i64: 1, 32>}, {pipeline_mode = #tpu.pipeline_mode<synchronous>, transform_indices = @transform_7, window_bounds = array<i64: 32, 64>}, {pipeline_mode = #tpu.pipeline_mode<synchronous>, transform_indices = @transform_8, window_bounds = array<i64: 1, 64>}, {pipeline_mode = #tpu.pipeline_mode<synchronous>, transform_indices = @transform_9, window_bounds = array<i64: 64, 32>}, {pipeline_mode = #tpu.pipeline_mode<synchronous>, transform_indices = @transform_10, window_bounds = array<i64: 1, 32>}, {pipeline_mode = #tpu.pipeline_mode<synchronous>, transform_indices = @transform_11, window_bounds = array<i64: 1, 16, 16>}, {pipeline_mode = #tpu.pipeline_mode<synchronous>, transform_indices = @transform_12, window_bounds = array<i64: 2, 32>}, {pipeline_mode = #tpu.pipeline_mode<synchronous>, transform_indices = @transform_13, window_bounds = array<i64: 32, 128>}, {pipeline_mode = #tpu.pipeline_mode<synchronous>, transform_indices = @transform_14, window_bounds = array<i64: 1, 128>}, {transform_indices = @transform_15, window_bounds = array<i64: 2, 128>}]} {
    %c0 = arith.constant 0 : index
    %c0_0 = arith.constant 0 : index
    %0 = vector.load %arg1[%c0, %c0_0] : memref<32x32xf32, #tpu.memory_space<vmem>>, vector<32x32xf32>
    %c0_1 = arith.constant 0 : index
    %c0_2 = arith.constant 0 : index
    %1 = vector.load %arg3[%c0_1, %c0_2] : memref<32x32xf32, #tpu.memory_space<vmem>>, vector<32x32xf32>
    %cst = arith.constant dense<0.000000e+00> : vector<32x32xf32>
    %2 = tpu.matmul %0, %1, %cst {dimension_numbers = #tpu.dot_dimension_numbers<[1], [0], [0], [1], [0, 0, 1, 1], [], []>} : vector<32x32xf32>, vector<32x32xf32>, vector<32x32xf32> -> vector<32x32xf32>
    %c0_3 = arith.constant 0 : index
    %c0_4 = arith.constant 0 : index
    %3 = vector.load %arg2[%c0_3, %c0_4] : memref<32x32xf32, #tpu.memory_space<vmem>>, vector<32x32xf32>
    %4 = arith.addf %2, %3 : vector<32x32xf32>
    %cst_5 = arith.constant dense<0.000000e+00> : vector<32xf32>
    %5 = vector.multi_reduction <add>, %4, %cst_5 [1] : vector<32x32xf32> to vector<32xf32>
    %6 = vector.shape_cast %5 : vector<32xf32> to vector<32x1xf32>
    %cst_6 = arith.constant 3.200000e+01 : f32
    %7 = vector.broadcast %cst_6 : f32 to vector<32x1xf32>
    %8 = arith.divf %6, %7 : vector<32x1xf32>
    %9 = vector.broadcast %8 : vector<32x1xf32> to vector<32x32xf32>
    %10 = arith.subf %4, %9 : vector<32x32xf32>
    %11 = arith.mulf %10, %10 : vector<32x32xf32>
    %cst_7 = arith.constant dense<0.000000e+00> : vector<32xf32>
    %12 = vector.multi_reduction <add>, %11, %cst_7 [1] : vector<32x32xf32> to vector<32xf32>
    %13 = vector.shape_cast %12 : vector<32xf32> to vector<32x1xf32>
    %cst_8 = arith.constant 3.200000e+01 : f32
    %14 = vector.broadcast %cst_8 : f32 to vector<32x1xf32>
    %15 = arith.divf %13, %14 : vector<32x1xf32>
    %cst_9 = arith.constant 9.99999974E-6 : f32
    %16 = vector.broadcast %cst_9 : f32 to vector<32x1xf32>
    %17 = arith.addf %15, %16 : vector<32x1xf32>
    %18 = math.rsqrt %17 : vector<32x1xf32>
    %19 = vector.broadcast %18 : vector<32x1xf32> to vector<32x32xf32>
    %20 = arith.mulf %10, %19 : vector<32x32xf32>
    %c0_10 = arith.constant 0 : index
    %c0_11 = arith.constant 0 : index
    %21 = vector.load %arg4[%c0_10, %c0_11] : memref<32x96xf32, #tpu.memory_space<vmem>>, vector<32x96xf32>
    %cst_12 = arith.constant dense<0.000000e+00> : vector<32x96xf32>
    %22 = tpu.matmul %20, %21, %cst_12 {dimension_numbers = #tpu.dot_dimension_numbers<[1], [0], [0], [1], [0, 0, 1, 1], [], []>} : vector<32x32xf32>, vector<32x96xf32>, vector<32x96xf32> -> vector<32x96xf32>
    %c0_13 = arith.constant 0 : index
    %c0_14 = arith.constant 0 : index
    %23 = vector.load %arg5[%c0_13, %c0_14] : memref<1x96xf32, #tpu.memory_space<vmem>>, vector<1x96xf32>
    %24 = vector.broadcast %23 : vector<1x96xf32> to vector<32x96xf32>
    %25 = arith.addf %22, %24 : vector<32x96xf32>
    %26 = vector.shape_cast %25 : vector<32x96xf32> to vector<2x16x96xf32>
    %c0_15 = arith.constant 0 : index
    %c0_16 = arith.constant 0 : index
    %c0_17 = arith.constant 0 : index
    %27 = vector.load %arg12[%c0_15, %c0_16, %c0_17] : memref<1x16x16xf32, #tpu.memory_space<vmem>>, vector<1x16x16xf32>
    %28 = vector.extract_strided_slice %26 {offsets = [0, 0, 0], sizes = [2, 16, 8], strides = [1, 1, 1]} : vector<2x16x96xf32> to vector<2x16x8xf32>
    %29 = vector.extract_strided_slice %26 {offsets = [0, 0, 32], sizes = [2, 16, 8], strides = [1, 1, 1]} : vector<2x16x96xf32> to vector<2x16x8xf32>
    %30 = vector.extract_strided_slice %26 {offsets = [0, 0, 64], sizes = [2, 16, 8], strides = [1, 1, 1]} : vector<2x16x96xf32> to vector<2x16x8xf32>
    "tpu.trace_start"() <{level = 10 : i32, message = "bqe,bke->bqk"}> : () -> ()
    %cst_18 = arith.constant dense<0.000000e+00> : vector<2x16x16xf32>
    %31 = tpu.matmul %28, %29, %cst_18 {dimension_numbers = #tpu.dot_dimension_numbers<[2], [2], [1], [1], [0, 0, 0, 1, 1, 1], [0], [0]>} : vector<2x16x8xf32>, vector<2x16x8xf32>, vector<2x16x16xf32> -> vector<2x16x16xf32>
    "tpu.trace_stop"() : () -> ()
    %32 = vector.broadcast %27 : vector<1x16x16xf32> to vector<2x16x16xf32>
    %33 = arith.addf %31, %32 : vector<2x16x16xf32>
    %cst_19 = arith.constant dense<0xFF800000> : vector<2x16xf32>
    %34 = vector.multi_reduction <maximumf>, %33, %cst_19 [2] : vector<2x16x16xf32> to vector<2x16xf32>
    %35 = vector.shape_cast %34 : vector<2x16xf32> to vector<2x16x1xf32>
    %36 = vector.broadcast %35 : vector<2x16x1xf32> to vector<2x16x16xf32>
    %37 = arith.subf %33, %36 : vector<2x16x16xf32>
    %38 = math.exp %37 : vector<2x16x16xf32>
    %cst_20 = arith.constant dense<0.000000e+00> : vector<2x16xf32>
    %39 = vector.multi_reduction <add>, %38, %cst_20 [2] : vector<2x16x16xf32> to vector<2x16xf32>
    %40 = vector.shape_cast %39 : vector<2x16xf32> to vector<2x16x1xf32>
    %41 = tpu.reciprocal %40 {approx = true} : vector<2x16x1xf32> -> vector<2x16x1xf32>
    %42 = vector.broadcast %41 : vector<2x16x1xf32> to vector<2x16x16xf32>
    %43 = arith.mulf %38, %42 : vector<2x16x16xf32>
    "tpu.trace_start"() <{level = 10 : i32, message = "bqk,bke->bqe"}> : () -> ()
    %cst_21 = arith.constant dense<0.000000e+00> : vector<2x16x8xf32>
    %44 = tpu.matmul %43, %30, %cst_21 {dimension_numbers = #tpu.dot_dimension_numbers<[2], [1], [1], [2], [0, 0, 0, 1, 1, 2], [0], [0]>} : vector<2x16x16xf32>, vector<2x16x8xf32>, vector<2x16x8xf32> -> vector<2x16x8xf32>
    "tpu.trace_stop"() : () -> ()
    %45 = vector.extract_strided_slice %26 {offsets = [0, 0, 8], sizes = [2, 16, 8], strides = [1, 1, 1]} : vector<2x16x96xf32> to vector<2x16x8xf32>
    %46 = vector.extract_strided_slice %26 {offsets = [0, 0, 40], sizes = [2, 16, 8], strides = [1, 1, 1]} : vector<2x16x96xf32> to vector<2x16x8xf32>
    %47 = vector.extract_strided_slice %26 {offsets = [0, 0, 72], sizes = [2, 16, 8], strides = [1, 1, 1]} : vector<2x16x96xf32> to vector<2x16x8xf32>
    "tpu.trace_start"() <{level = 10 : i32, message = "bqe,bke->bqk"}> : () -> ()
    %cst_22 = arith.constant dense<0.000000e+00> : vector<2x16x16xf32>
    %48 = tpu.matmul %45, %46, %cst_22 {dimension_numbers = #tpu.dot_dimension_numbers<[2], [2], [1], [1], [0, 0, 0, 1, 1, 1], [0], [0]>} : vector<2x16x8xf32>, vector<2x16x8xf32>, vector<2x16x16xf32> -> vector<2x16x16xf32>
    "tpu.trace_stop"() : () -> ()
    %49 = vector.broadcast %27 : vector<1x16x16xf32> to vector<2x16x16xf32>
    %50 = arith.addf %48, %49 : vector<2x16x16xf32>
    %cst_23 = arith.constant dense<0xFF800000> : vector<2x16xf32>
    %51 = vector.multi_reduction <maximumf>, %50, %cst_23 [2] : vector<2x16x16xf32> to vector<2x16xf32>
    %52 = vector.shape_cast %51 : vector<2x16xf32> to vector<2x16x1xf32>
    %53 = vector.broadcast %52 : vector<2x16x1xf32> to vector<2x16x16xf32>
    %54 = arith.subf %50, %53 : vector<2x16x16xf32>
    %55 = math.exp %54 : vector<2x16x16xf32>
    %cst_24 = arith.constant dense<0.000000e+00> : vector<2x16xf32>
    %56 = vector.multi_reduction <add>, %55, %cst_24 [2] : vector<2x16x16xf32> to vector<2x16xf32>
    %57 = vector.shape_cast %56 : vector<2x16xf32> to vector<2x16x1xf32>
    %58 = tpu.reciprocal %57 {approx = true} : vector<2x16x1xf32> -> vector<2x16x1xf32>
    %59 = vector.broadcast %58 : vector<2x16x1xf32> to vector<2x16x16xf32>
    %60 = arith.mulf %55, %59 : vector<2x16x16xf32>
    "tpu.trace_start"() <{level = 10 : i32, message = "bqk,bke->bqe"}> : () -> ()
    %cst_25 = arith.constant dense<0.000000e+00> : vector<2x16x8xf32>
    %61 = tpu.matmul %60, %47, %cst_25 {dimension_numbers = #tpu.dot_dimension_numbers<[2], [1], [1], [2], [0, 0, 0, 1, 1, 2], [0], [0]>} : vector<2x16x16xf32>, vector<2x16x8xf32>, vector<2x16x8xf32> -> vector<2x16x8xf32>
    "tpu.trace_stop"() : () -> ()
    %62 = vector.extract_strided_slice %26 {offsets = [0, 0, 16], sizes = [2, 16, 8], strides = [1, 1, 1]} : vector<2x16x96xf32> to vector<2x16x8xf32>
    %63 = vector.extract_strided_slice %26 {offsets = [0, 0, 48], sizes = [2, 16, 8], strides = [1, 1, 1]} : vector<2x16x96xf32> to vector<2x16x8xf32>
    %64 = vector.extract_strided_slice %26 {offsets = [0, 0, 80], sizes = [2, 16, 8], strides = [1, 1, 1]} : vector<2x16x96xf32> to vector<2x16x8xf32>
    "tpu.trace_start"() <{level = 10 : i32, message = "bqe,bke->bqk"}> : () -> ()
    %cst_26 = arith.constant dense<0.000000e+00> : vector<2x16x16xf32>
    %65 = tpu.matmul %62, %63, %cst_26 {dimension_numbers = #tpu.dot_dimension_numbers<[2], [2], [1], [1], [0, 0, 0, 1, 1, 1], [0], [0]>} : vector<2x16x8xf32>, vector<2x16x8xf32>, vector<2x16x16xf32> -> vector<2x16x16xf32>
    "tpu.trace_stop"() : () -> ()
    %66 = vector.broadcast %27 : vector<1x16x16xf32> to vector<2x16x16xf32>
    %67 = arith.addf %65, %66 : vector<2x16x16xf32>
    %cst_27 = arith.constant dense<0xFF800000> : vector<2x16xf32>
    %68 = vector.multi_reduction <maximumf>, %67, %cst_27 [2] : vector<2x16x16xf32> to vector<2x16xf32>
    %69 = vector.shape_cast %68 : vector<2x16xf32> to vector<2x16x1xf32>
    %70 = vector.broadcast %69 : vector<2x16x1xf32> to vector<2x16x16xf32>
    %71 = arith.subf %67, %70 : vector<2x16x16xf32>
    %72 = math.exp %71 : vector<2x16x16xf32>
    %cst_28 = arith.constant dense<0.000000e+00> : vector<2x16xf32>
    %73 = vector.multi_reduction <add>, %72, %cst_28 [2] : vector<2x16x16xf32> to vector<2x16xf32>
    %74 = vector.shape_cast %73 : vector<2x16xf32> to vector<2x16x1xf32>
    %75 = tpu.reciprocal %74 {approx = true} : vector<2x16x1xf32> -> vector<2x16x1xf32>
    %76 = vector.broadcast %75 : vector<2x16x1xf32> to vector<2x16x16xf32>
    %77 = arith.mulf %72, %76 : vector<2x16x16xf32>
    "tpu.trace_start"() <{level = 10 : i32, message = "bqk,bke->bqe"}> : () -> ()
    %cst_29 = arith.constant dense<0.000000e+00> : vector<2x16x8xf32>
    %78 = tpu.matmul %77, %64, %cst_29 {dimension_numbers = #tpu.dot_dimension_numbers<[2], [1], [1], [2], [0, 0, 0, 1, 1, 2], [0], [0]>} : vector<2x16x16xf32>, vector<2x16x8xf32>, vector<2x16x8xf32> -> vector<2x16x8xf32>
    "tpu.trace_stop"() : () -> ()
    %79 = vector.extract_strided_slice %26 {offsets = [0, 0, 24], sizes = [2, 16, 8], strides = [1, 1, 1]} : vector<2x16x96xf32> to vector<2x16x8xf32>
    %80 = vector.extract_strided_slice %26 {offsets = [0, 0, 56], sizes = [2, 16, 8], strides = [1, 1, 1]} : vector<2x16x96xf32> to vector<2x16x8xf32>
    %81 = vector.extract_strided_slice %26 {offsets = [0, 0, 88], sizes = [2, 16, 8], strides = [1, 1, 1]} : vector<2x16x96xf32> to vector<2x16x8xf32>
    "tpu.trace_start"() <{level = 10 : i32, message = "bqe,bke->bqk"}> : () -> ()
    %cst_30 = arith.constant dense<0.000000e+00> : vector<2x16x16xf32>
    %82 = tpu.matmul %79, %80, %cst_30 {dimension_numbers = #tpu.dot_dimension_numbers<[2], [2], [1], [1], [0, 0, 0, 1, 1, 1], [0], [0]>} : vector<2x16x8xf32>, vector<2x16x8xf32>, vector<2x16x16xf32> -> vector<2x16x16xf32>
    "tpu.trace_stop"() : () -> ()
    %83 = vector.broadcast %27 : vector<1x16x16xf32> to vector<2x16x16xf32>
    %84 = arith.addf %82, %83 : vector<2x16x16xf32>
    %cst_31 = arith.constant dense<0xFF800000> : vector<2x16xf32>
    %85 = vector.multi_reduction <maximumf>, %84, %cst_31 [2] : vector<2x16x16xf32> to vector<2x16xf32>
    %86 = vector.shape_cast %85 : vector<2x16xf32> to vector<2x16x1xf32>
    %87 = vector.broadcast %86 : vector<2x16x1xf32> to vector<2x16x16xf32>
    %88 = arith.subf %84, %87 : vector<2x16x16xf32>
    %89 = math.exp %88 : vector<2x16x16xf32>
    %cst_32 = arith.constant dense<0.000000e+00> : vector<2x16xf32>
    %90 = vector.multi_reduction <add>, %89, %cst_32 [2] : vector<2x16x16xf32> to vector<2x16xf32>
    %91 = vector.shape_cast %90 : vector<2x16xf32> to vector<2x16x1xf32>
    %92 = tpu.reciprocal %91 {approx = true} : vector<2x16x1xf32> -> vector<2x16x1xf32>
    %93 = vector.broadcast %92 : vector<2x16x1xf32> to vector<2x16x16xf32>
    %94 = arith.mulf %89, %93 : vector<2x16x16xf32>
    "tpu.trace_start"() <{level = 10 : i32, message = "bqk,bke->bqe"}> : () -> ()
    %cst_33 = arith.constant dense<0.000000e+00> : vector<2x16x8xf32>
    %95 = tpu.matmul %94, %81, %cst_33 {dimension_numbers = #tpu.dot_dimension_numbers<[2], [1], [1], [2], [0, 0, 0, 1, 1, 2], [0], [0]>} : vector<2x16x16xf32>, vector<2x16x8xf32>, vector<2x16x8xf32> -> vector<2x16x8xf32>
    "tpu.trace_stop"() : () -> ()
    %96 = tpu.concatenate %44, %61, %78, %95 in 2 : vector<2x16x8xf32>, vector<2x16x8xf32>, vector<2x16x8xf32>, vector<2x16x8xf32> -> vector<2x16x32xf32>
    %97 = vector.shape_cast %96 : vector<2x16x32xf32> to vector<32x32xf32>
    %c0_34 = arith.constant 0 : index
    %c0_35 = arith.constant 0 : index
    %98 = vector.load %arg6[%c0_34, %c0_35] : memref<32x32xf32, #tpu.memory_space<vmem>>, vector<32x32xf32>
    %cst_36 = arith.constant dense<0.000000e+00> : vector<32x32xf32>
    %99 = tpu.matmul %97, %98, %cst_36 {dimension_numbers = #tpu.dot_dimension_numbers<[1], [0], [0], [1], [0, 0, 1, 1], [], []>} : vector<32x32xf32>, vector<32x32xf32>, vector<32x32xf32> -> vector<32x32xf32>
    %100 = arith.addf %4, %99 : vector<32x32xf32>
    %c0_37 = arith.constant 0 : index
    %c0_38 = arith.constant 0 : index
    %101 = vector.load %arg7[%c0_37, %c0_38] : memref<1x32xf32, #tpu.memory_space<vmem>>, vector<1x32xf32>
    %102 = vector.broadcast %101 : vector<1x32xf32> to vector<32x32xf32>
    %103 = arith.addf %100, %102 : vector<32x32xf32>
    %cst_39 = arith.constant dense<0.000000e+00> : vector<32xf32>
    %104 = vector.multi_reduction <add>, %103, %cst_39 [1] : vector<32x32xf32> to vector<32xf32>
    %105 = vector.shape_cast %104 : vector<32xf32> to vector<32x1xf32>
    %cst_40 = arith.constant 3.200000e+01 : f32
    %106 = vector.broadcast %cst_40 : f32 to vector<32x1xf32>
    %107 = arith.divf %105, %106 : vector<32x1xf32>
    %108 = vector.broadcast %107 : vector<32x1xf32> to vector<32x32xf32>
    %109 = arith.subf %103, %108 : vector<32x32xf32>
    %110 = arith.mulf %109, %109 : vector<32x32xf32>
    %cst_41 = arith.constant dense<0.000000e+00> : vector<32xf32>
    %111 = vector.multi_reduction <add>, %110, %cst_41 [1] : vector<32x32xf32> to vector<32xf32>
    %112 = vector.shape_cast %111 : vector<32xf32> to vector<32x1xf32>
    %cst_42 = arith.constant 3.200000e+01 : f32
    %113 = vector.broadcast %cst_42 : f32 to vector<32x1xf32>
    %114 = arith.divf %112, %113 : vector<32x1xf32>
    %cst_43 = arith.constant 9.99999974E-6 : f32
    %115 = vector.broadcast %cst_43 : f32 to vector<32x1xf32>
    %116 = arith.addf %114, %115 : vector<32x1xf32>
    %117 = math.rsqrt %116 : vector<32x1xf32>
    %118 = vector.broadcast %117 : vector<32x1xf32> to vector<32x32xf32>
    %119 = arith.mulf %109, %118 : vector<32x32xf32>
    %c0_44 = arith.constant 0 : index
    %c0_45 = arith.constant 0 : index
    %120 = vector.load %arg8[%c0_44, %c0_45] : memref<32x64xf32, #tpu.memory_space<vmem>>, vector<32x64xf32>
    %cst_46 = arith.constant dense<0.000000e+00> : vector<32x64xf32>
    %121 = tpu.matmul %119, %120, %cst_46 {dimension_numbers = #tpu.dot_dimension_numbers<[1], [0], [0], [1], [0, 0, 1, 1], [], []>} : vector<32x32xf32>, vector<32x64xf32>, vector<32x64xf32> -> vector<32x64xf32>
    %c0_47 = arith.constant 0 : index
    %c0_48 = arith.constant 0 : index
    %122 = vector.load %arg9[%c0_47, %c0_48] : memref<1x64xf32, #tpu.memory_space<vmem>>, vector<1x64xf32>
    %123 = vector.broadcast %122 : vector<1x64xf32> to vector<32x64xf32>
    %124 = arith.addf %121, %123 : vector<32x64xf32>
    %cst_49 = arith.constant 5.000000e-01 : f32
    %125 = vector.broadcast %cst_49 : f32 to vector<32x64xf32>
    %126 = arith.mulf %125, %124 : vector<32x64xf32>
    %cst_50 = arith.constant 0.707106769 : f32
    %127 = vector.broadcast %cst_50 : f32 to vector<32x64xf32>
    %128 = arith.mulf %124, %127 : vector<32x64xf32>
    %129 = math.absf %128 : vector<32x64xf32>
    %cst_51 = arith.constant 0.327591091 : f32
    %130 = vector.broadcast %cst_51 : f32 to vector<32x64xf32>
    %131 = arith.mulf %130, %129 : vector<32x64xf32>
    %cst_52 = arith.constant 1.000000e+00 : f32
    %132 = vector.broadcast %cst_52 : f32 to vector<32x64xf32>
    %133 = arith.addf %132, %131 : vector<32x64xf32>
    %cst_53 = arith.constant 1.000000e+00 : f32
    %134 = vector.broadcast %cst_53 : f32 to vector<32x64xf32>
    %135 = arith.divf %134, %133 : vector<32x64xf32>
    %cst_54 = arith.constant 1.06140542 : f32
    %136 = vector.broadcast %cst_54 : f32 to vector<32x64xf32>
    %137 = arith.mulf %136, %135 : vector<32x64xf32>
    %cst_55 = arith.constant -1.45315206 : f32
    %138 = vector.broadcast %cst_55 : f32 to vector<32x64xf32>
    %139 = arith.addf %137, %138 : vector<32x64xf32>
    %140 = arith.mulf %139, %135 : vector<32x64xf32>
    %cst_56 = arith.constant 1.42141378 : f32
    %141 = vector.broadcast %cst_56 : f32 to vector<32x64xf32>
    %142 = arith.addf %140, %141 : vector<32x64xf32>
    %143 = arith.mulf %142, %135 : vector<32x64xf32>
    %cst_57 = arith.constant -0.284496725 : f32
    %144 = vector.broadcast %cst_57 : f32 to vector<32x64xf32>
    %145 = arith.addf %143, %144 : vector<32x64xf32>
    %146 = arith.mulf %145, %135 : vector<32x64xf32>
    %cst_58 = arith.constant 0.254829586 : f32
    %147 = vector.broadcast %cst_58 : f32 to vector<32x64xf32>
    %148 = arith.addf %146, %147 : vector<32x64xf32>
    %149 = arith.mulf %148, %135 : vector<32x64xf32>
    %cst_59 = arith.constant 0.000000e+00 : f32
    %150 = vector.broadcast %cst_59 : f32 to vector<32x64xf32>
    %151 = arith.subf %150, %129 : vector<32x64xf32>
    %152 = arith.mulf %151, %129 : vector<32x64xf32>
    %153 = math.exp %152 : vector<32x64xf32>
    %154 = arith.mulf %149, %153 : vector<32x64xf32>
    %cst_60 = arith.constant 1.000000e+00 : f32
    %155 = vector.broadcast %cst_60 : f32 to vector<32x64xf32>
    %156 = arith.subf %155, %154 : vector<32x64xf32>
    %cst_61 = arith.constant 0.000000e+00 : f32
    %157 = vector.broadcast %cst_61 : f32 to vector<32x64xf32>
    %158 = arith.cmpf olt, %128, %157 : vector<32x64xf32>
    %cst_62 = arith.constant 0.000000e+00 : f32
    %159 = vector.broadcast %cst_62 : f32 to vector<32x64xf32>
    %160 = arith.subf %159, %156 : vector<32x64xf32>
    %161 = arith.select %158, %160, %156 : vector<32x64xi1>, vector<32x64xf32>
    %cst_63 = arith.constant 1.000000e+00 : f32
    %162 = vector.broadcast %cst_63 : f32 to vector<32x64xf32>
    %163 = arith.addf %162, %161 : vector<32x64xf32>
    %164 = arith.mulf %126, %163 : vector<32x64xf32>
    %c0_64 = arith.constant 0 : index
    %c0_65 = arith.constant 0 : index
    %165 = vector.load %arg10[%c0_64, %c0_65] : memref<64x32xf32, #tpu.memory_space<vmem>>, vector<64x32xf32>
    %cst_66 = arith.constant dense<0.000000e+00> : vector<32x32xf32>
    %166 = tpu.matmul %164, %165, %cst_66 {dimension_numbers = #tpu.dot_dimension_numbers<[1], [0], [0], [1], [0, 0, 1, 1], [], []>} : vector<32x64xf32>, vector<64x32xf32>, vector<32x32xf32> -> vector<32x32xf32>
    %167 = arith.addf %103, %166 : vector<32x32xf32>
    %c0_67 = arith.constant 0 : index
    %c0_68 = arith.constant 0 : index
    %168 = vector.load %arg11[%c0_67, %c0_68] : memref<1x32xf32, #tpu.memory_space<vmem>>, vector<1x32xf32>
    %169 = vector.broadcast %168 : vector<1x32xf32> to vector<32x32xf32>
    %170 = arith.addf %167, %169 : vector<32x32xf32>
    %c0_69 = arith.constant 0 : index
    %c0_70 = arith.constant 0 : index
    %171 = vector.load %arg13[%c0_69, %c0_70] : memref<2x32xf32, #tpu.memory_space<vmem>>, vector<2x32xf32>
    %cst_71 = arith.constant dense<0.000000e+00> : vector<2x32xf32>
    %172 = tpu.matmul %171, %170, %cst_71 {dimension_numbers = #tpu.dot_dimension_numbers<[1], [0], [0], [1], [0, 0, 1, 1], [], []>} : vector<2x32xf32>, vector<32x32xf32>, vector<2x32xf32> -> vector<2x32xf32>
    %c0_72 = arith.constant 0 : index
    %c0_73 = arith.constant 0 : index
    %173 = vector.load %arg14[%c0_72, %c0_73] : memref<32x128xf32, #tpu.memory_space<vmem>>, vector<32x128xf32>
    %cst_74 = arith.constant dense<0.000000e+00> : vector<2x128xf32>
    %174 = tpu.matmul %172, %173, %cst_74 {dimension_numbers = #tpu.dot_dimension_numbers<[1], [0], [0], [1], [0, 0, 1, 1], [], []>} : vector<2x32xf32>, vector<32x128xf32>, vector<2x128xf32> -> vector<2x128xf32>
    %c0_75 = arith.constant 0 : index
    %c0_76 = arith.constant 0 : index
    %175 = vector.load %arg15[%c0_75, %c0_76] : memref<1x128xf32, #tpu.memory_space<vmem>>, vector<1x128xf32>
    %176 = vector.broadcast %175 : vector<1x128xf32> to vector<2x128xf32>
    %177 = arith.addf %174, %176 : vector<2x128xf32>
    %c0_77 = arith.constant 0 : index
    %c0_78 = arith.constant 0 : index
    %178 = vector.load %arg16[%c0_77, %c0_78] : memref<2x128xf32, #tpu.memory_space<vmem>>, vector<2x128xf32>
    tpu.vector_store %arg16[%c0_77, %c0_78], %177 {strides = array<i32>} : memref<2x128xf32, #tpu.memory_space<vmem>>, vector<2x128xf32>,
    return
  }
  func.func @transform_0(%arg0: i32) -> (i32, i32) {
    %c0_i32 = arith.constant 0 : i32
    %c0_i32_0 = arith.constant 0 : i32
    return %arg0, %c0_i32 : i32, i32
  }
  func.func @transform_1(%arg0: i32) -> (i32, i32) {
    %c0_i32 = arith.constant 0 : i32
    %c0_i32_0 = arith.constant 0 : i32
    %c0_i32_1 = arith.constant 0 : i32
    return %c0_i32, %c0_i32_0 : i32, i32
  }
  func.func @transform_2(%arg0: i32) -> (i32, i32) {
    %c0_i32 = arith.constant 0 : i32
    %c0_i32_0 = arith.constant 0 : i32
    %c0_i32_1 = arith.constant 0 : i32
    return %c0_i32, %c0_i32_0 : i32, i32
  }
  func.func @transform_3(%arg0: i32) -> (i32, i32) {
    %c0_i32 = arith.constant 0 : i32
    %c0_i32_0 = arith.constant 0 : i32
    %c0_i32_1 = arith.constant 0 : i32
    return %c0_i32, %c0_i32_0 : i32, i32
  }
  func.func @transform_4(%arg0: i32) -> (i32, i32) {
    %c0_i32 = arith.constant 0 : i32
    %c0_i32_0 = arith.constant 0 : i32
    %c0_i32_1 = arith.constant 0 : i32
    return %c0_i32, %c0_i32_0 : i32, i32
  }
  func.func @transform_5(%arg0: i32) -> (i32, i32) {
    %c0_i32 = arith.constant 0 : i32
    %c0_i32_0 = arith.constant 0 : i32
    %c0_i32_1 = arith.constant 0 : i32
    return %c0_i32, %c0_i32_0 : i32, i32
  }
  func.func @transform_6(%arg0: i32) -> (i32, i32) {
    %c0_i32 = arith.constant 0 : i32
    %c0_i32_0 = arith.constant 0 : i32
    %c0_i32_1 = arith.constant 0 : i32
    return %c0_i32, %c0_i32_0 : i32, i32
  }
  func.func @transform_7(%arg0: i32) -> (i32, i32) {
    %c0_i32 = arith.constant 0 : i32
    %c0_i32_0 = arith.constant 0 : i32
    %c0_i32_1 = arith.constant 0 : i32
    return %c0_i32, %c0_i32_0 : i32, i32
  }
  func.func @transform_8(%arg0: i32) -> (i32, i32) {
    %c0_i32 = arith.constant 0 : i32
    %c0_i32_0 = arith.constant 0 : i32
    %c0_i32_1 = arith.constant 0 : i32
    return %c0_i32, %c0_i32_0 : i32, i32
  }
  func.func @transform_9(%arg0: i32) -> (i32, i32) {
    %c0_i32 = arith.constant 0 : i32
    %c0_i32_0 = arith.constant 0 : i32
    %c0_i32_1 = arith.constant 0 : i32
    return %c0_i32, %c0_i32_0 : i32, i32
  }
  func.func @transform_10(%arg0: i32) -> (i32, i32) {
    %c0_i32 = arith.constant 0 : i32
    %c0_i32_0 = arith.constant 0 : i32
    %c0_i32_1 = arith.constant 0 : i32
    return %c0_i32, %c0_i32_0 : i32, i32
  }
  func.func @transform_11(%arg0: i32) -> (i32, i32, i32) {
    %c0_i32 = arith.constant 0 : i32
    %c0_i32_0 = arith.constant 0 : i32
    %c0_i32_1 = arith.constant 0 : i32
    %c0_i32_2 = arith.constant 0 : i32
    return %c0_i32, %c0_i32_0, %c0_i32_1 : i32, i32, i32
  }
  func.func @transform_12(%arg0: i32) -> (i32, i32) {
    %c0_i32 = arith.constant 0 : i32
    %c0_i32_0 = arith.constant 0 : i32
    %c0_i32_1 = arith.constant 0 : i32
    return %c0_i32, %c0_i32_0 : i32, i32
  }
  func.func @transform_13(%arg0: i32) -> (i32, i32) {
    %c0_i32 = arith.constant 0 : i32
    %c0_i32_0 = arith.constant 0 : i32
    %c0_i32_1 = arith.constant 0 : i32
    return %c0_i32, %c0_i32_0 : i32, i32
  }
  func.func @transform_14(%arg0: i32) -> (i32, i32) {
    %c0_i32 = arith.constant 0 : i32
    %c0_i32_0 = arith.constant 0 : i32
    %c0_i32_1 = arith.constant 0 : i32
    return %c0_i32, %c0_i32_0 : i32, i32
  }
  func.func @transform_15(%arg0: i32) -> (i32, i32) {
    %c0_i32 = arith.constant 0 : i32
    %c0_i32_0 = arith.constant 0 : i32
    return %arg0, %c0_i32 : i32, i32
  }
}

</mosaic_0001>

<llo_original>
// kernel: semg_transformer_forward.1
$region0: #{semg_transformer_forward.1}
  #allocation0 [shape = 'u32[]', space=smem, size = 0x4, offset = 0x4, fixed_abs, tag = 'smem constant byte address 0x4 - core index']
  #allocation1 [shape = 'u32[144,128]{1,0:T(1,128)}', space=vmem, size = 0x12000, scoped, tag = 'internal scratch']
  %s0 = inlined_call_operand.vmem [shape: f32[32,32], index: 0, kind: input, shape index: {}]
  %s1 = inlined_call_operand.vmem [shape: f32[32,32], index: 1, kind: input, shape index: {}]
  %s2 = inlined_call_operand.vmem [shape: f32[32,32], index: 2, kind: input, shape index: {}]
  %s3 = inlined_call_operand.vmem [shape: f32[32,96], index: 3, kind: input, shape index: {}]
  %s4 = inlined_call_operand.vmem [shape: f32[1,96], index: 4, kind: input, shape index: {}]
  %s5 = inlined_call_operand.vmem [shape: f32[32,32], index: 5, kind: input, shape index: {}]
  %s6 = inlined_call_operand.vmem [shape: f32[1,32], index: 6, kind: input, shape index: {}]
  %s7 = inlined_call_operand.vmem [shape: f32[32,64], index: 7, kind: input, shape index: {}]
  %s8 = inlined_call_operand.vmem [shape: f32[1,64], index: 8, kind: input, shape index: {}]
  %s9 = inlined_call_operand.vmem [shape: f32[64,32], index: 9, kind: input, shape index: {}]
  %s10 = inlined_call_operand.vmem [shape: f32[1,32], index: 10, kind: input, shape index: {}]
  %s11 = inlined_call_operand.vmem [shape: f32[1,16,16], index: 11, kind: input, shape index: {}]
  %s12 = inlined_call_operand.vmem [shape: f32[2,32], index: 12, kind: input, shape index: {}]
  %s13 = inlined_call_operand.vmem [shape: f32[32,128], index: 13, kind: input, shape index: {}]
  %s14 = inlined_call_operand.vmem [shape: f32[1,128], index: 14, kind: input, shape index: {}]
  %s15 = inlined_call_operand.hbm [shape: f32[2,128], index: 15, kind: output, shape index: {}]
  %s16 = sld [smem:[#allocation0]]
  $region70: #{semg_transformer_forward.1} parent=0
    _
  %s18 = ssub.s32 1, %s16
  %s19 = scalar_select 0, %s18, %s16
  $region1: #{semg_transformer_forward.1} parent=0
    #allocation2 [shape = 'u8[1024]{0}', space=vmem, size = 0x400, scoped, tag = 'output window, operand 0, single buffered']
    #allocation3 [shape = 's32[1]{0}', space=sflag, size = 0x4, scoped, tag = 'scoped memory for semg_transformer_forward.1']
    %20 = vsyncpa [#allocation3], 0
    // Predicated region
    $region2: #{semg_transformer_forward.1} parent=1 // pred_check
      _
    $region3: #{semg_transformer_forward.1} parent=1 // pred_check_branch
      %22 = sbr.rel (0) target = $region5
    $region4: #{semg_transformer_forward.1} parent=1 // pred_region
      _
    $region5: #{semg_transformer_forward.1} parent=1 // pred_fallthru
      _
    // Predicated region
    $region6: #{semg_transformer_forward.1} parent=1 // pred_check
      _
    $region7: #{semg_transformer_forward.1} parent=1 // pred_check_branch
      %24 = sbr.rel (0) target = $region9
    $region8: #{semg_transformer_forward.1} parent=1 // pred_region
      _
    $region9: #{semg_transformer_forward.1} parent=1 // pred_fallthru
      _
    // Predicated region
    $region10: #{semg_transformer_forward.1} parent=1 // pred_check
      _
    $region11: #{semg_transformer_forward.1} parent=1 // pred_check_branch
      %26 = sbr.rel (0) target = $region13
    $region12: #{semg_transformer_forward.1} parent=1 // pred_region
      _
    $region13: #{semg_transformer_forward.1} parent=1 // pred_fallthru
      _
    // Predicated region
    $region14: #{semg_transformer_forward.1} parent=1 // pred_check
      _
    $region15: #{semg_transformer_forward.1} parent=1 // pred_check_branch
      %28 = sbr.rel (0) target = $region17
    $region16: #{semg_transformer_forward.1} parent=1 // pred_region
      _
    $region17: #{semg_transformer_forward.1} parent=1 // pred_fallthru
      _
    // Predicated region
    $region18: #{semg_transformer_forward.1} parent=1 // pred_check
      _
    $region19: #{semg_transformer_forward.1} parent=1 // pred_check_branch
      %30 = sbr.rel (0) target = $region21
    $region20: #{semg_transformer_forward.1} parent=1 // pred_region
      _
    $region21: #{semg_transformer_forward.1} parent=1 // pred_fallthru
      _
    // Predicated region
    $region22: #{semg_transformer_forward.1} parent=1 // pred_check
      _
    $region23: #{semg_transformer_forward.1} parent=1 // pred_check_branch
      %32 = sbr.rel (0) target = $region25
    $region24: #{semg_transformer_forward.1} parent=1 // pred_region
      _
    $region25: #{semg_transformer_forward.1} parent=1 // pred_fallthru
      _
    // Predicated region
    $region26: #{semg_transformer_forward.1} parent=1 // pred_check
      _
    $region27: #{semg_transformer_forward.1} parent=1 // pred_check_branch
      %34 = sbr.rel (0) target = $region29
    $region28: #{semg_transformer_forward.1} parent=1 // pred_region
      _
    $region29: #{semg_transformer_forward.1} parent=1 // pred_fallthru
      _
    // Predicated region
    $region30: #{semg_transformer_forward.1} parent=1 // pred_check
      _
    $region31: #{semg_transformer_forward.1} parent=1 // pred_check_branch
      %36 = sbr.rel (0) target = $region33
    $region32: #{semg_transformer_forward.1} parent=1 // pred_region
      _
    $region33: #{semg_transformer_forward.1} parent=1 // pred_fallthru
      _
    // Predicated region
    $region34: #{semg_transformer_forward.1} parent=1 // pred_check
      _
    $region35: #{semg_transformer_forward.1} parent=1 // pred_check_branch
      %38 = sbr.rel (0) target = $region37
    $region36: #{semg_transformer_forward.1} parent=1 // pred_region
      _
    $region37: #{semg_transformer_forward.1} parent=1 // pred_fallthru
      _
    // Predicated region
    $region38: #{semg_transformer_forward.1} parent=1 // pred_check
      _
    $region39: #{semg_transformer_forward.1} parent=1 // pred_check_branch
      %40 = sbr.rel (0) target = $region41
    $region40: #{semg_transformer_forward.1} parent=1 // pred_region
      _
    $region41: #{semg_transformer_forward.1} parent=1 // pred_fallthru
      _
    // Predicated region
    $region42: #{semg_transformer_forward.1} parent=1 // pred_check
      _
    $region43: #{semg_transformer_forward.1} parent=1 // pred_check_branch
      %42 = sbr.rel (0) target = $region45
    $region44: #{semg_transformer_forward.1} parent=1 // pred_region
      _
    $region45: #{semg_transformer_forward.1} parent=1 // pred_fallthru
      _
    // Predicated region
    $region46: #{semg_transformer_forward.1} parent=1 // pred_check
      _
    $region47: #{semg_transformer_forward.1} parent=1 // pred_check_branch
      %44 = sbr.rel (0) target = $region49
    $region48: #{semg_transformer_forward.1} parent=1 // pred_region
      _
    $region49: #{semg_transformer_forward.1} parent=1 // pred_fallthru
      _
    // Predicated region
    $region50: #{semg_transformer_forward.1} parent=1 // pred_check
      _
    $region51: #{semg_transformer_forward.1} parent=1 // pred_check_branch
      %46 = sbr.rel (0) target = $region53
    $region52: #{semg_transformer_forward.1} parent=1 // pred_region
      _
    $region53: #{semg_transformer_forward.1} parent=1 // pred_fallthru
      _
    // Predicated region
    $region54: #{semg_transformer_forward.1} parent=1 // pred_check
      _
    $region55: #{semg_transformer_forward.1} parent=1 // pred_check_branch
      %48 = sbr.rel (0) target = $region57
    $region56: #{semg_transformer_forward.1} parent=1 // pred_region
      _
    $region57: #{semg_transformer_forward.1} parent=1 // pred_fallthru
      _
    // Predicated region
    $region58: #{semg_transformer_forward.1} parent=1 // pred_check
      _
    $region59: #{semg_transformer_forward.1} parent=1 // pred_check_branch
      %50 = sbr.rel (0) target = $region61
    $region60: #{semg_transformer_forward.1} parent=1 // pred_region
      _
    $region61: #{semg_transformer_forward.1} parent=1 // pred_fallthru
      _
    %v51 = vld [vmem:[%s0] sm:$0xff]
    %v52 = vld [vmem:[%s0 + $0x8] sm:$0xff]
    %v53 = vld [vmem:[%s0 + $0x10] sm:$0xff]
    %v54 = vld [vmem:[%s0 + $0x18] sm:$0xff]
    %v55 = vld [vmem:[%s2] sm:$0xff]
    %v56 = vld [vmem:[%s2 + $0x8] sm:$0xff]
    %v57 = vld [vmem:[%s2 + $0x10] sm:$0xff]
    %v58 = vld [vmem:[%s2 + $0x18] sm:$0xff]
    %v59 = vld [vmem:[%s1] sm:$0xff]
    %v60 = vld [vmem:[%s1 + $0x8] sm:$0xff]
    %v61 = vld [vmem:[%s1 + $0x10] sm:$0xff]
    %v62 = vld [vmem:[%s1 + $0x18] sm:$0xff]
    %vm63 = vcmask 261120
    %v65 = vsel %vm63, %v51, 0
    %v68 = vsel %vm63, %v52, 0
    %v71 = vsel %vm63, %v53, 0
    %v74 = vsel %vm63, %v54, 0
    %76 = vmatprep.subr.mxu0 0.0
    %77 = vmatpush1.msra.mxu0 0.0
    %78 = vmatprep.subr.mxu0 0.0
    %79 = vmatpush1.msra.mxu0 0.0
    %80 = vmatprep.subr.mxu0 0.0
    %81 = vmatpush1.msra.mxu0 0.0
    %82 = vmatprep.subr.mxu0 0.0
    %83 = vmatpush1.msra.mxu0 0.0
    %84 = vmatprep.subr.mxu0 0.0
    %85 = vmatpush1.msra.mxu0 0.0
    %86 = vmatprep.subr.mxu0 0.0
    %87 = vmatpush1.msra.mxu0 0.0
    %88 = vmatprep.subr.mxu0 0.0
    %89 = vmatpush1.msra.mxu0 0.0
    %90 = vmatprep.subr.mxu0 0.0
    %91 = vmatpush1.msra.mxu0 0.0
    %92 = vmatprep.subr.mxu0 0.0
    %93 = vmatpush1.msra.mxu0 0.0
    %94 = vmatprep.subr.mxu0 0.0
    %95 = vmatpush1.msra.mxu0 0.0
    %96 = vmatprep.subr.mxu0 0.0
    %97 = vmatpush1.msra.mxu0 0.0
    %98 = vmatprep.subr.mxu0 0.0
    %99 = vmatpush1.msra.mxu0 0.0
    %100 = vmatprep.subr.mxu0 0.0
    %101 = vmatpush1.msra.mxu0 %v58
    %102 = vmatprep.subr.mxu0 0.0
    %103 = vmatpush1.msra.mxu0 %v57
    %104 = vmatprep.subr.mxu0 0.0
    %105 = vmatpush1.msra.mxu0 %v56
    %106 = vmatprep.subr.mxu0 0.0
    %107 = vmatpush1.msra.mxu0 %v55
    %108 = vmatprep.subr.mxu0 0.0
    %109 = vmatpush2.msra.mxu0 0.0
    %110 = vmatprep.subr.mxu0 0.0
    %111 = vmatpush2.msra.mxu0 0.0
    %112 = vmatprep.subr.mxu0 0.0
    %113 = vmatpush2.msra.mxu0 0.0
    %114 = vmatprep.subr.mxu0 0.0
    %115 = vmatpush2.msra.mxu0 0.0
    %116 = vmatprep.subr.mxu0 0.0
    %117 = vmatpush2.msra.mxu0 0.0
    %118 = vmatprep.subr.mxu0 0.0
    %119 = vmatpush2.msra.mxu0 0.0
    %120 = vmatprep.subr.mxu0 0.0
    %121 = vmatpush2.msra.mxu0 0.0
    %122 = vmatprep.subr.mxu0 0.0
    %123 = vmatpush2.msra.mxu0 0.0
    %124 = vmatprep.subr.mxu0 0.0
    %125 = vmatpush2.msra.mxu0 0.0
    %126 = vmatprep.subr.mxu0 0.0
    %127 = vmatpush2.msra.mxu0 0.0
    %128 = vmatprep.subr.mxu0 0.0
    %129 = vmatpush2.msra.mxu0 0.0
    %130 = vmatprep.subr.mxu0 0.0
    %131 = vmatpush2.msra.mxu0 0.0
    %132 = vmatprep.subr.mxu0 0.0
    %133 = vmatpush2.msra.mxu0 0.0
    %134 = vmatprep.subr.mxu0 0.0
    %135 = vmatpush2.msra.mxu0 0.0
    %136 = vmatprep.subr.mxu0 0.0
    %137 = vmatpush2.msra.mxu0 0.0
    %138 = vmatprep.subr.mxu0 0.0
    %139 = vmatpush2.msra.mxu0 0.0
    %140 = vmatprep.mubr.f32.mxu0 0.0
    %141 = vmatmul.mubr.f32.gmra.mxu0 %v65
    %v142 = vpop.f32.mrf.mxu0
    %v143 = vadd.f32 %v59, %v142
    %v144 = vpop.f32.mrf.mxu0
    %145 = vmatprep.mubr.f32.mxu0 0.0
    %146 = vmatmul.mubr.f32.gmra.mxu0 %v68
    %v147 = vpop.f32.mrf.mxu0
    %v148 = vadd.f32 %v60, %v147
    %v149 = vpop.f32.mrf.mxu0
    %150 = vmatprep.mubr.f32.mxu0 0.0
    %151 = vmatmul.mubr.f32.gmra.mxu0 %v71
    %v152 = vpop.f32.mrf.mxu0
    %v153 = vadd.f32 %v61, %v152
    %v154 = vpop.f32.mrf.mxu0
    %155 = vmatprep.mubr.f32.mxu0 0.0
    %156 = vmatmul.mubr.f32.gmra.mxu0 %v74
    %v157 = vpop.f32.mrf.mxu0
    %v158 = vadd.f32 %v62, %v157
    %v159 = vpop.f32.mrf.mxu0
    %160 = vdwg.mxu0
    %v161 = vsel %vm63, %v143, 0.0
    %162 = vadd.xlane.f32.xlu0 %v161
    %v163 = vpop.xlane.xlu0 %162
    %v164 = vsel %vm63, %v148, 0.0
    %165 = vadd.xlane.f32.xlu0 %v164
    %v166 = vpop.xlane.xlu0 %165
    %v167 = vsel %vm63, %v153, 0.0
    %168 = vadd.xlane.f32.xlu0 %v167
    %v169 = vpop.xlane.xlu0 %168
    %v170 = vsel %vm63, %v158, 0.0
    %171 = vadd.xlane.f32.xlu0 %v170
    %v172 = vpop.xlane.xlu0 %171
    %v173 = vrcp.pop 32.0
    %v174 = vmul.f32 %v163, %v173
    %v175 = vmul.f32 %v166, %v173
    %v176 = vmul.f32 %v169, %v173
    %v177 = vmul.f32 %v172, %v173
    %v178 = vsub.f32 %v143, %v174
    %v179 = vsub.f32 %v148, %v175
    %v180 = vsub.f32 %v153, %v176
    %v181 = vsub.f32 %v158, %v177
    %v182 = vmul.f32 %v178, %v178
    %v183 = vmul.f32 %v179, %v179
    %v184 = vmul.f32 %v180, %v180
    %v185 = vmul.f32 %v181, %v181
    %v186 = vsel %vm63, %v182, 0.0
    %187 = vadd.xlane.f32.xlu0 %v186
    %v188 = vpop.xlane.xlu0 %187
    %v189 = vsel %vm63, %v183, 0.0
    %190 = vadd.xlane.f32.xlu0 %v189
    %v191 = vpop.xlane.xlu0 %190
    %v192 = vsel %vm63, %v184, 0.0
    %193 = vadd.xlane.f32.xlu0 %v192
    %v194 = vpop.xlane.xlu0 %193
    %v195 = vsel %vm63, %v185, 0.0
    %196 = vadd.xlane.f32.xlu0 %v195
    %v197 = vpop.xlane.xlu0 %196
    %v198 = vmul.f32 %v188, %v173
    %v199 = vmul.f32 %v191, %v173
    %v200 = vmul.f32 %v194, %v173
    %v201 = vmul.f32 %v197, %v173
    %v202 = vadd.f32 %v198, 1e-05
    %v203 = vadd.f32 %v199, 1e-05
    %v204 = vadd.f32 %v200, 1e-05
    %v205 = vadd.f32 %v201, 1e-05
    %v206 = vrsqrt.pop %v202
    %v207 = vrsqrt.pop %v203
    %v208 = vrsqrt.pop %v204
    %v209 = vrsqrt.pop %v205
    %v210 = vmul.f32 %v178, %v206
    %v211 = vmul.f32 %v179, %v207
    %v212 = vmul.f32 %v180, %v208
    %v213 = vmul.f32 %v181, %v209
    %v214 = vld [vmem:[%s3] sm:$0xff]
    %v215 = vld [vmem:[%s3 + $0x8] sm:$0xff]
    %v216 = vld [vmem:[%s3 + $0x10] sm:$0xff]
    %v217 = vld [vmem:[%s3 + $0x18] sm:$0xff]
    %v218 = vld [vmem:[%s4] sm:$0x1]
    %v220 = vlaneseq
    %v221 = vshrl.u32 %v220, 7
    %v222 = vsub.s32 0, %v221
    %v223 = vrot.slane %v218, %v222
    %v226 = vsel %vm63, %v210, 0
    %v229 = vsel %vm63, %v211, 0
    %v232 = vsel %vm63, %v212, 0
    %v235 = vsel %vm63, %v213, 0
    %237 = vmatprep.subr.mxu0 0.0
    %238 = vmatpush1.msra.mxu0 0.0
    %239 = vmatprep.subr.mxu0 0.0
    %240 = vmatpush1.msra.mxu0 0.0
    %241 = vmatprep.subr.mxu0 0.0
    %242 = vmatpush1.msra.mxu0 0.0
    %243 = vmatprep.subr.mxu0 0.0
    %244 = vmatpush1.msra.mxu0 0.0
    %245 = vmatprep.subr.mxu0 0.0
    %246 = vmatpush1.msra.mxu0 0.0
    %247 = vmatprep.subr.mxu0 0.0
    %248 = vmatpush1.msra.mxu0 0.0
    %249 = vmatprep.subr.mxu0 0.0
    %250 = vmatpush1.msra.mxu0 0.0
    %251 = vmatprep.subr.mxu0 0.0
    %252 = vmatpush1.msra.mxu0 0.0
    %253 = vmatprep.subr.mxu0 0.0
    %254 = vmatpush1.msra.mxu0 0.0
    %255 = vmatprep.subr.mxu0 0.0
    %256 = vmatpush1.msra.mxu0 0.0
    %257 = vmatprep.subr.mxu0 0.0
    %258 = vmatpush1.msra.mxu0 0.0
    %259 = vmatprep.subr.mxu0 0.0
    %260 = vmatpush1.msra.mxu0 0.0
    %261 = vmatprep.subr.mxu0 0.0
    %262 = vmatpush1.msra.mxu0 %v217
    %263 = vmatprep.subr.mxu0 0.0
    %264 = vmatpush1.msra.mxu0 %v216
    %265 = vmatprep.subr.mxu0 0.0
    %266 = vmatpush1.msra.mxu0 %v215
    %267 = vmatprep.subr.mxu0 0.0
    %268 = vmatpush1.msra.mxu0 %v214
    %269 = vmatprep.subr.mxu0 0.0
    %270 = vmatpush2.msra.mxu0 0.0
    %271 = vmatprep.subr.mxu0 0.0
    %272 = vmatpush2.msra.mxu0 0.0
    %273 = vmatprep.subr.mxu0 0.0
    %274 = vmatpush2.msra.mxu0 0.0
    %275 = vmatprep.subr.mxu0 0.0
    %276 = vmatpush2.msra.mxu0 0.0
    %277 = vmatprep.subr.mxu0 0.0
    %278 = vmatpush2.msra.mxu0 0.0
    %279 = vmatprep.subr.mxu0 0.0
    %280 = vmatpush2.msra.mxu0 0.0
    %281 = vmatprep.subr.mxu0 0.0
    %282 = vmatpush2.msra.mxu0 0.0
    %283 = vmatprep.subr.mxu0 0.0
    %284 = vmatpush2.msra.mxu0 0.0
    %285 = vmatprep.subr.mxu0 0.0
    %286 = vmatpush2.msra.mxu0 0.0
    %287 = vmatprep.subr.mxu0 0.0
    %288 = vmatpush2.msra.mxu0 0.0
    %289 = vmatprep.subr.mxu0 0.0
    %290 = vmatpush2.msra.mxu0 0.0
    %291 = vmatprep.subr.mxu0 0.0
    %292 = vmatpush2.msra.mxu0 0.0
    %293 = vmatprep.subr.mxu0 0.0
    %294 = vmatpush2.msra.mxu0 0.0
    %295 = vmatprep.subr.mxu0 0.0
    %296 = vmatpush2.msra.mxu0 0.0
    %297 = vmatprep.subr.mxu0 0.0
    %298 = vmatpush2.msra.mxu0 0.0
    %299 = vmatprep.subr.mxu0 0.0
    %300 = vmatpush2.msra.mxu0 0.0
    %301 = vmatprep.mubr.f32.mxu0 0.0
    %302 = vmatmul.mubr.f32.gmra.mxu0 %v226
    %v303 = vpop.f32.mrf.mxu0
    %v304 = vadd.f32 %v223, %v303
    %v305 = vpop.f32.mrf.mxu0
    %306 = vmatprep.mubr.f32.mxu0 0.0
    %307 = vmatmul.mubr.f32.gmra.mxu0 %v229
    %v308 = vpop.f32.mrf.mxu0
    %v309 = vadd.f32 %v223, %v308
    %v310 = vpop.f32.mrf.mxu0
    %311 = vmatprep.mubr.f32.mxu0 0.0
    %312 = vmatmul.mubr.f32.gmra.mxu0 %v232
    %v313 = vpop.f32.mrf.mxu0
    %v314 = vadd.f32 %v223, %v313
    %v315 = vpop.f32.mrf.mxu0
    %316 = vmatprep.mubr.f32.mxu0 0.0
    %317 = vmatmul.mubr.f32.gmra.mxu0 %v235
    %v318 = vpop.f32.mrf.mxu0
    %v319 = vadd.f32 %v223, %v318
    %v320 = vpop.f32.mrf.mxu0
    %321 = vdwg.mxu0
    %v322 = vld [vmem:[%s11] sm:$0xff]
    %v323 = vld [vmem:[%s11 + $0x8] sm:$0xff]
    %326 = vrot.lane.b32.xlu0 %v304, 96
    %v327 = vpop.permute.xlu0 %326
    %328 = vrot.lane.b32.xlu0 %v309, 96
    %v329 = vpop.permute.xlu0 %328
    %vm330 = vcmask 64512
    %v331 = vsel %vm330, %v304, 0
    %v333 = vsel %vm330, %v309, 0
    %v335 = vsel %vm330, %v327, 0
    %v337 = vsel %vm330, %v329, 0
    %339 = vmatprep.subr.mxu0 0.0
    %340 = vmatpush1.xpose.msra.mxu0 0.0
    %341 = vmatprep.subr.mxu0 0.0
    %342 = vmatpush1.xpose.msra.mxu0 0.0
    %343 = vmatprep.subr.mxu0 0.0
    %344 = vmatpush1.xpose.msra.mxu0 0.0
    %345 = vmatprep.subr.mxu0 0.0
    %346 = vmatpush1.xpose.msra.mxu0 0.0
    %347 = vmatprep.subr.mxu0 0.0
    %348 = vmatpush1.xpose.msra.mxu0 0.0
    %349 = vmatprep.subr.mxu0 0.0
    %350 = vmatpush1.xpose.msra.mxu0 0.0
    %351 = vmatprep.subr.mxu0 0.0
    %352 = vmatpush1.xpose.msra.mxu0 0.0
    %353 = vmatprep.subr.mxu0 0.0
    %354 = vmatpush1.xpose.msra.mxu0 0.0
    %355 = vmatprep.subr.mxu0 0.0
    %356 = vmatpush1.xpose.msra.mxu0 0.0
    %357 = vmatprep.subr.mxu0 0.0
    %358 = vmatpush1.xpose.msra.mxu0 0.0
    %359 = vmatprep.subr.mxu0 0.0
    %360 = vmatpush1.xpose.msra.mxu0 0.0
    %361 = vmatprep.subr.mxu0 0.0
    %362 = vmatpush1.xpose.msra.mxu0 0.0
    %363 = vmatprep.subr.mxu0 0.0
    %364 = vmatpush1.xpose.msra.mxu0 0.0
    %365 = vmatprep.subr.mxu0 0.0
    %366 = vmatpush1.xpose.msra.mxu0 0.0
    %367 = vmatprep.subr.mxu0 0.0
    %368 = vmatpush1.xpose.msra.mxu0 %v337
    %369 = vmatprep.subr.mxu0 0.0
    %370 = vmatpush1.xpose.msra.mxu0 %v335
    %371 = vmatprep.subr.mxu0 0.0
    %372 = vmatpush2.xpose.msra.mxu0 0.0
    %373 = vmatprep.subr.mxu0 0.0
    %374 = vmatpush2.xpose.msra.mxu0 0.0
    %375 = vmatprep.subr.mxu0 0.0
    %376 = vmatpush2.xpose.msra.mxu0 0.0
    %377 = vmatprep.subr.mxu0 0.0
    %378 = vmatpush2.xpose.msra.mxu0 0.0
    %379 = vmatprep.subr.mxu0 0.0
    %380 = vmatpush2.xpose.msra.mxu0 0.0
    %381 = vmatprep.subr.mxu0 0.0
    %382 = vmatpush2.xpose.msra.mxu0 0.0
    %383 = vmatprep.subr.mxu0 0.0
    %384 = vmatpush2.xpose.msra.mxu0 0.0
    %385 = vmatprep.subr.mxu0 0.0
    %386 = vmatpush2.xpose.msra.mxu0 0.0
    %387 = vmatprep.subr.mxu0 0.0
    %388 = vmatpush2.xpose.msra.mxu0 0.0
    %389 = vmatprep.subr.mxu0 0.0
    %390 = vmatpush2.xpose.msra.mxu0 0.0
    %391 = vmatprep.subr.mxu0 0.0
    %392 = vmatpush2.xpose.msra.mxu0 0.0
    %393 = vmatprep.subr.mxu0 0.0
    %394 = vmatpush2.xpose.msra.mxu0 0.0
    %395 = vmatprep.subr.mxu0 0.0
    %396 = vmatpush2.xpose.msra.mxu0 0.0
    %397 = vmatprep.subr.mxu0 0.0
    %398 = vmatpush2.xpose.msra.mxu0 0.0
    %399 = vmatprep.subr.mxu0 0.0
    %400 = vmatpush2.xpose.msra.mxu0 0.0
    %401 = vmatprep.subr.mxu0 0.0
    %402 = vmatpush2.xpose.msra.mxu0 0.0
    %403 = vmatprep.mubr.f32.mxu0 0.0
    %404 = vmatmul.mubr.f32.gmra.mxu0 %v331
    %v405 = vpop.f32.mrf.mxu0
    %v406 = vadd.f32 %v322, %v405
    %v407 = vpop.f32.mrf.mxu0
    %408 = vmatprep.mubr.f32.mxu0 0.0
    %409 = vmatmul.mubr.f32.gmra.mxu0 %v333
    %v410 = vpop.f32.mrf.mxu0
    %v411 = vadd.f32 %v323, %v410
    %v412 = vpop.f32.mrf.mxu0
    %413 = vdwg.mxu0
    %416 = vrot.lane.b32.xlu0 %v314, 96
    %v417 = vpop.permute.xlu0 %416
    %418 = vrot.lane.b32.xlu0 %v319, 96
    %v419 = vpop.permute.xlu0 %418
    %v420 = vsel %vm330, %v314, 0
    %v422 = vsel %vm330, %v319, 0
    %v424 = vsel %vm330, %v417, 0
    %v426 = vsel %vm330, %v419, 0
    %428 = vmatprep.subr.mxu0 0.0
    %429 = vmatpush1.xpose.msra.mxu0 0.0
    %430 = vmatprep.subr.mxu0 0.0
    %431 = vmatpush1.xpose.msra.mxu0 0.0
    %432 = vmatprep.subr.mxu0 0.0
    %433 = vmatpush1.xpose.msra.mxu0 0.0
    %434 = vmatprep.subr.mxu0 0.0
    %435 = vmatpush1.xpose.msra.mxu0 0.0
    %436 = vmatprep.subr.mxu0 0.0
    %437 = vmatpush1.xpose.msra.mxu0 0.0
    %438 = vmatprep.subr.mxu0 0.0
    %439 = vmatpush1.xpose.msra.mxu0 0.0
    %440 = vmatprep.subr.mxu0 0.0
    %441 = vmatpush1.xpose.msra.mxu0 0.0
    %442 = vmatprep.subr.mxu0 0.0
    %443 = vmatpush1.xpose.msra.mxu0 0.0
    %444 = vmatprep.subr.mxu0 0.0
    %445 = vmatpush1.xpose.msra.mxu0 0.0
    %446 = vmatprep.subr.mxu0 0.0
    %447 = vmatpush1.xpose.msra.mxu0 0.0
    %448 = vmatprep.subr.mxu0 0.0
    %449 = vmatpush1.xpose.msra.mxu0 0.0
    %450 = vmatprep.subr.mxu0 0.0
    %451 = vmatpush1.xpose.msra.mxu0 0.0
    %452 = vmatprep.subr.mxu0 0.0
    %453 = vmatpush1.xpose.msra.mxu0 0.0
    %454 = vmatprep.subr.mxu0 0.0
    %455 = vmatpush1.xpose.msra.mxu0 0.0
    %456 = vmatprep.subr.mxu0 0.0
    %457 = vmatpush1.xpose.msra.mxu0 %v426
    %458 = vmatprep.subr.mxu0 0.0
    %459 = vmatpush1.xpose.msra.mxu0 %v424
    %460 = vmatprep.subr.mxu0 0.0
    %461 = vmatpush2.xpose.msra.mxu0 0.0
    %462 = vmatprep.subr.mxu0 0.0
    %463 = vmatpush2.xpose.msra.mxu0 0.0
    %464 = vmatprep.subr.mxu0 0.0
    %465 = vmatpush2.xpose.msra.mxu0 0.0
    %466 = vmatprep.subr.mxu0 0.0
    %467 = vmatpush2.xpose.msra.mxu0 0.0
    %468 = vmatprep.subr.mxu0 0.0
    %469 = vmatpush2.xpose.msra.mxu0 0.0
    %470 = vmatprep.subr.mxu0 0.0
    %471 = vmatpush2.xpose.msra.mxu0 0.0
    %472 = vmatprep.subr.mxu0 0.0
    %473 = vmatpush2.xpose.msra.mxu0 0.0
    %474 = vmatprep.subr.mxu0 0.0
    %475 = vmatpush2.xpose.msra.mxu0 0.0
    %476 = vmatprep.subr.mxu0 0.0
    %477 = vmatpush2.xpose.msra.mxu0 0.0
    %478 = vmatprep.subr.mxu0 0.0
    %479 = vmatpush2.xpose.msra.mxu0 0.0
    %480 = vmatprep.subr.mxu0 0.0
    %481 = vmatpush2.xpose.msra.mxu0 0.0
    %482 = vmatprep.subr.mxu0 0.0
    %483 = vmatpush2.xpose.msra.mxu0 0.0
    %484 = vmatprep.subr.mxu0 0.0
    %485 = vmatpush2.xpose.msra.mxu0 0.0
    %486 = vmatprep.subr.mxu0 0.0
    %487 = vmatpush2.xpose.msra.mxu0 0.0
    %488 = vmatprep.subr.mxu0 0.0
    %489 = vmatpush2.xpose.msra.mxu0 0.0
    %490 = vmatprep.subr.mxu0 0.0
    %491 = vmatpush2.xpose.msra.mxu0 0.0
    %492 = vmatprep.mubr.f32.mxu0 0.0
    %493 = vmatmul.mubr.f32.gmra.mxu0 %v420
    %v494 = vpop.f32.mrf.mxu0
    %v495 = vadd.f32 %v322, %v494
    %v496 = vpop.f32.mrf.mxu0
    %497 = vmatprep.mubr.f32.mxu0 0.0
    %498 = vmatmul.mubr.f32.gmra.mxu0 %v422
    %v499 = vpop.f32.mrf.mxu0
    %v500 = vadd.f32 %v323, %v499
    %v501 = vpop.f32.mrf.mxu0
    %502 = vdwg.mxu0
    %vm503 = vcmask 130048
    %v504 = vsel %vm503, %v406, -inf
    %505 = vmax.xlane.f32.xlu0 %v504
    %v506 = vpop.xlane.xlu0 %505
    %v507 = vsel %vm503, %v411, -inf
    %508 = vmax.xlane.f32.xlu0 %v507
    %v509 = vpop.xlane.xlu0 %508
    %v510 = vsel %vm503, %v495, -inf
    %511 = vmax.xlane.f32.xlu0 %v510
    %v512 = vpop.xlane.xlu0 %511
    %v513 = vsel %vm503, %v500, -inf
    %514 = vmax.xlane.f32.xlu0 %v513
    %v515 = vpop.xlane.xlu0 %514
    %v516 = vsub.f32 %v406, %v506
    %v517 = vsub.f32 %v411, %v509
    %v518 = vsub.f32 %v495, %v512
    %v519 = vsub.f32 %v500, %v515
    %v520 = vmul.f32 %v516, 1.442695
    %v521 = vpow.pop %v520
    %v522 = vmul.f32 %v517, 1.442695
    %v523 = vpow.pop %v522
    %v524 = vmul.f32 %v518, 1.442695
    %v525 = vpow.pop %v524
    %v526 = vmul.f32 %v519, 1.442695
    %v527 = vpow.pop %v526
    %v528 = vsel %vm503, %v521, 0.0
    %529 = vadd.xlane.f32.xlu0 %v528
    %v530 = vpop.xlane.xlu0 %529
    %v531 = vsel %vm503, %v523, 0.0
    %532 = vadd.xlane.f32.xlu0 %v531
    %v533 = vpop.xlane.xlu0 %532
    %v534 = vsel %vm503, %v525, 0.0
    %535 = vadd.xlane.f32.xlu0 %v534
    %v536 = vpop.xlane.xlu0 %535
    %v537 = vsel %vm503, %v527, 0.0
    %538 = vadd.xlane.f32.xlu0 %v537
    %v539 = vpop.xlane.xlu0 %538
    %v540 = vrcp.pop %v530
    %v541 = vrcp.pop %v533
    %v542 = vrcp.pop %v536
    %v543 = vrcp.pop %v539
    %v544 = vmul.f32 %v521, %v540
    %v545 = vmul.f32 %v523, %v541
    %v546 = vmul.f32 %v525, %v542
    %v547 = vmul.f32 %v527, %v543
    %548 = vrot.lane.b32.xlu0 %v304, 64
    %v549 = vpop.permute.xlu0 %548
    %550 = vrot.lane.b32.xlu0 %v309, 64
    %v551 = vpop.permute.xlu0 %550
    %v555 = vsel %vm503, %v544, 0
    %v558 = vsel %vm503, %v545, 0
    %560 = vmatprep.subr.mxu0 0.0
    %561 = vmatpush1.msra.mxu0 0.0
    %562 = vmatprep.subr.mxu0 0.0
    %563 = vmatpush1.msra.mxu0 0.0
    %564 = vmatprep.subr.mxu0 0.0
    %565 = vmatpush1.msra.mxu0 0.0
    %566 = vmatprep.subr.mxu0 0.0
    %567 = vmatpush1.msra.mxu0 0.0
    %568 = vmatprep.subr.mxu0 0.0
    %569 = vmatpush1.msra.mxu0 0.0
    %570 = vmatprep.subr.mxu0 0.0
    %571 = vmatpush1.msra.mxu0 0.0
    %572 = vmatprep.subr.mxu0 0.0
    %573 = vmatpush1.msra.mxu0 0.0
    %574 = vmatprep.subr.mxu0 0.0
    %575 = vmatpush1.msra.mxu0 0.0
    %576 = vmatprep.subr.mxu0 0.0
    %577 = vmatpush1.msra.mxu0 0.0
    %578 = vmatprep.subr.mxu0 0.0
    %579 = vmatpush1.msra.mxu0 0.0
    %580 = vmatprep.subr.mxu0 0.0
    %581 = vmatpush1.msra.mxu0 0.0
    %582 = vmatprep.subr.mxu0 0.0
    %583 = vmatpush1.msra.mxu0 0.0
    %584 = vmatprep.subr.mxu0 0.0
    %585 = vmatpush1.msra.mxu0 0.0
    %586 = vmatprep.subr.mxu0 0.0
    %587 = vmatpush1.msra.mxu0 0.0
    %588 = vmatprep.subr.mxu0 0.0
    %589 = vmatpush1.msra.mxu0 %v551
    %590 = vmatprep.subr.mxu0 0.0
    %591 = vmatpush1.msra.mxu0 %v549
    %592 = vmatprep.subr.mxu0 0.0
    %593 = vmatpush2.msra.mxu0 0.0
    %594 = vmatprep.subr.mxu0 0.0
    %595 = vmatpush2.msra.mxu0 0.0
    %596 = vmatprep.subr.mxu0 0.0
    %597 = vmatpush2.msra.mxu0 0.0
    %598 = vmatprep.subr.mxu0 0.0
    %599 = vmatpush2.msra.mxu0 0.0
    %600 = vmatprep.subr.mxu0 0.0
    %601 = vmatpush2.msra.mxu0 0.0
    %602 = vmatprep.subr.mxu0 0.0
    %603 = vmatpush2.msra.mxu0 0.0
    %604 = vmatprep.subr.mxu0 0.0
    %605 = vmatpush2.msra.mxu0 0.0
    %606 = vmatprep.subr.mxu0 0.0
    %607 = vmatpush2.msra.mxu0 0.0
    %608 = vmatprep.subr.mxu0 0.0
    %609 = vmatpush2.msra.mxu0 0.0
    %610 = vmatprep.subr.mxu0 0.0
    %611 = vmatpush2.msra.mxu0 0.0
    %612 = vmatprep.subr.mxu0 0.0
    %613 = vmatpush2.msra.mxu0 0.0
    %614 = vmatprep.subr.mxu0 0.0
    %615 = vmatpush2.msra.mxu0 0.0
    %616 = vmatprep.subr.mxu0 0.0
    %617 = vmatpush2.msra.mxu0 0.0
    %618 = vmatprep.subr.mxu0 0.0
    %619 = vmatpush2.msra.mxu0 0.0
    %620 = vmatprep.subr.mxu0 0.0
    %621 = vmatpush2.msra.mxu0 0.0
    %622 = vmatprep.subr.mxu0 0.0
    %623 = vmatpush2.msra.mxu0 0.0
    %624 = vmatprep.mubr.f32.mxu0 0.0
    %625 = vmatmul.mubr.f32.gmra.mxu0 %v555
    %v626 = vpop.f32.mrf.mxu0
    %v627 = vadd.f32 0.0, %v626
    %v628 = vpop.f32.mrf.mxu0
    %629 = vmatprep.mubr.f32.mxu0 0.0
    %630 = vmatmul.mubr.f32.gmra.mxu0 %v558
    %v631 = vpop.f32.mrf.mxu0
    %v632 = vadd.f32 0.0, %v631
    %v633 = vpop.f32.mrf.mxu0
    %634 = vdwg.mxu0
    %635 = vrot.lane.b32.xlu0 %v314, 64
    %v636 = vpop.permute.xlu0 %635
    %637 = vrot.lane.b32.xlu0 %v319, 64
    %v638 = vpop.permute.xlu0 %637
    %v642 = vsel %vm503, %v546, 0
    %v645 = vsel %vm503, %v547, 0
    %647 = vmatprep.subr.mxu0 0.0
    %648 = vmatpush1.msra.mxu0 0.0
    %649 = vmatprep.subr.mxu0 0.0
    %650 = vmatpush1.msra.mxu0 0.0
    %651 = vmatprep.subr.mxu0 0.0
    %652 = vmatpush1.msra.mxu0 0.0
    %653 = vmatprep.subr.mxu0 0.0
    %654 = vmatpush1.msra.mxu0 0.0
    %655 = vmatprep.subr.mxu0 0.0
    %656 = vmatpush1.msra.mxu0 0.0
    %657 = vmatprep.subr.mxu0 0.0
    %658 = vmatpush1.msra.mxu0 0.0
    %659 = vmatprep.subr.mxu0 0.0
    %660 = vmatpush1.msra.mxu0 0.0
    %661 = vmatprep.subr.mxu0 0.0
    %662 = vmatpush1.msra.mxu0 0.0
    %663 = vmatprep.subr.mxu0 0.0
    %664 = vmatpush1.msra.mxu0 0.0
    %665 = vmatprep.subr.mxu0 0.0
    %666 = vmatpush1.msra.mxu0 0.0
    %667 = vmatprep.subr.mxu0 0.0
    %668 = vmatpush1.msra.mxu0 0.0
    %669 = vmatprep.subr.mxu0 0.0
    %670 = vmatpush1.msra.mxu0 0.0
    %671 = vmatprep.subr.mxu0 0.0
    %672 = vmatpush1.msra.mxu0 0.0
    %673 = vmatprep.subr.mxu0 0.0
    %674 = vmatpush1.msra.mxu0 0.0
    %675 = vmatprep.subr.mxu0 0.0
    %676 = vmatpush1.msra.mxu0 %v638
    %677 = vmatprep.subr.mxu0 0.0
    %678 = vmatpush1.msra.mxu0 %v636
    %679 = vmatprep.subr.mxu0 0.0
    %680 = vmatpush2.msra.mxu0 0.0
    %681 = vmatprep.subr.mxu0 0.0
    %682 = vmatpush2.msra.mxu0 0.0
    %683 = vmatprep.subr.mxu0 0.0
    %684 = vmatpush2.msra.mxu0 0.0
    %685 = vmatprep.subr.mxu0 0.0
    %686 = vmatpush2.msra.mxu0 0.0
    %687 = vmatprep.subr.mxu0 0.0
    %688 = vmatpush2.msra.mxu0 0.0
    %689 = vmatprep.subr.mxu0 0.0
    %690 = vmatpush2.msra.mxu0 0.0
    %691 = vmatprep.subr.mxu0 0.0
    %692 = vmatpush2.msra.mxu0 0.0
    %693 = vmatprep.subr.mxu0 0.0
    %694 = vmatpush2.msra.mxu0 0.0
    %695 = vmatprep.subr.mxu0 0.0
    %696 = vmatpush2.msra.mxu0 0.0
    %697 = vmatprep.subr.mxu0 0.0
    %698 = vmatpush2.msra.mxu0 0.0
    %699 = vmatprep.subr.mxu0 0.0
    %700 = vmatpush2.msra.mxu0 0.0
    %701 = vmatprep.subr.mxu0 0.0
    %702 = vmatpush2.msra.mxu0 0.0
    %703 = vmatprep.subr.mxu0 0.0
    %704 = vmatpush2.msra.mxu0 0.0
    %705 = vmatprep.subr.mxu0 0.0
    %706 = vmatpush2.msra.mxu0 0.0
    %707 = vmatprep.subr.mxu0 0.0
    %708 = vmatpush2.msra.mxu0 0.0
    %709 = vmatprep.subr.mxu0 0.0
    %710 = vmatpush2.msra.mxu0 0.0
    %711 = vmatprep.mubr.f32.mxu0 0.0
    %712 = vmatmul.mubr.f32.gmra.mxu0 %v642
    %v713 = vpop.f32.mrf.mxu0
    %v714 = vadd.f32 0.0, %v713
    %v715 = vpop.f32.mrf.mxu0
    %716 = vmatprep.mubr.f32.mxu0 0.0
    %717 = vmatmul.mubr.f32.gmra.mxu0 %v645
    %v718 = vpop.f32.mrf.mxu0
    %v719 = vadd.f32 0.0, %v718
    %v720 = vpop.f32.mrf.mxu0
    %721 = vdwg.mxu0
    %722 = vrot.lane.b32.xlu0 %v304, 120
    %v723 = vpop.permute.xlu0 %722
    %724 = vrot.lane.b32.xlu0 %v309, 120
    %v725 = vpop.permute.xlu0 %724
    %726 = vrot.lane.b32.xlu0 %v304, 88
    %v727 = vpop.permute.xlu0 %726
    %728 = vrot.lane.b32.xlu0 %v309, 88
    %v729 = vpop.permute.xlu0 %728
    %v730 = vsel %vm330, %v723, 0
    %v732 = vsel %vm330, %v725, 0
    %v734 = vsel %vm330, %v727, 0
    %v736 = vsel %vm330, %v729, 0
    %738 = vmatprep.subr.mxu0 0.0
    %739 = vmatpush1.xpose.msra.mxu0 0.0
    %740 = vmatprep.subr.mxu0 0.0
    %741 = vmatpush1.xpose.msra.mxu0 0.0
    %742 = vmatprep.subr.mxu0 0.0
    %743 = vmatpush1.xpose.msra.mxu0 0.0
    %744 = vmatprep.subr.mxu0 0.0
    %745 = vmatpush1.xpose.msra.mxu0 0.0
    %746 = vmatprep.subr.mxu0 0.0
    %747 = vmatpush1.xpose.msra.mxu0 0.0
    %748 = vmatprep.subr.mxu0 0.0
    %749 = vmatpush1.xpose.msra.mxu0 0.0
    %750 = vmatprep.subr.mxu0 0.0
    %751 = vmatpush1.xpose.msra.mxu0 0.0
    %752 = vmatprep.subr.mxu0 0.0
    %753 = vmatpush1.xpose.msra.mxu0 0.0
    %754 = vmatprep.subr.mxu0 0.0
    %755 = vmatpush1.xpose.msra.mxu0 0.0
    %756 = vmatprep.subr.mxu0 0.0
    %757 = vmatpush1.xpose.msra.mxu0 0.0
    %758 = vmatprep.subr.mxu0 0.0
    %759 = vmatpush1.xpose.msra.mxu0 0.0
    %760 = vmatprep.subr.mxu0 0.0
    %761 = vmatpush1.xpose.msra.mxu0 0.0
    %762 = vmatprep.subr.mxu0 0.0
    %763 = vmatpush1.xpose.msra.mxu0 0.0
    %764 = vmatprep.subr.mxu0 0.0
    %765 = vmatpush1.xpose.msra.mxu0 0.0
    %766 = vmatprep.subr.mxu0 0.0
    %767 = vmatpush1.xpose.msra.mxu0 %v736
    %768 = vmatprep.subr.mxu0 0.0
    %769 = vmatpush1.xpose.msra.mxu0 %v734
    %770 = vmatprep.subr.mxu0 0.0
    %771 = vmatpush2.xpose.msra.mxu0 0.0
    %772 = vmatprep.subr.mxu0 0.0
    %773 = vmatpush2.xpose.msra.mxu0 0.0
    %774 = vmatprep.subr.mxu0 0.0
    %775 = vmatpush2.xpose.msra.mxu0 0.0
    %776 = vmatprep.subr.mxu0 0.0
    %777 = vmatpush2.xpose.msra.mxu0 0.0
    %778 = vmatprep.subr.mxu0 0.0
    %779 = vmatpush2.xpose.msra.mxu0 0.0
    %780 = vmatprep.subr.mxu0 0.0
    %781 = vmatpush2.xpose.msra.mxu0 0.0
    %782 = vmatprep.subr.mxu0 0.0
    %783 = vmatpush2.xpose.msra.mxu0 0.0
    %784 = vmatprep.subr.mxu0 0.0
    %785 = vmatpush2.xpose.msra.mxu0 0.0
    %786 = vmatprep.subr.mxu0 0.0
    %787 = vmatpush2.xpose.msra.mxu0 0.0
    %788 = vmatprep.subr.mxu0 0.0
    %789 = vmatpush2.xpose.msra.mxu0 0.0
    %790 = vmatprep.subr.mxu0 0.0
    %791 = vmatpush2.xpose.msra.mxu0 0.0
    %792 = vmatprep.subr.mxu0 0.0
    %793 = vmatpush2.xpose.msra.mxu0 0.0
    %794 = vmatprep.subr.mxu0 0.0
    %795 = vmatpush2.xpose.msra.mxu0 0.0
    %796 = vmatprep.subr.mxu0 0.0
    %797 = vmatpush2.xpose.msra.mxu0 0.0
    %798 = vmatprep.subr.mxu0 0.0
    %799 = vmatpush2.xpose.msra.mxu0 0.0
    %800 = vmatprep.subr.mxu0 0.0
    %801 = vmatpush2.xpose.msra.mxu0 0.0
    %802 = vmatprep.mubr.f32.mxu0 0.0
    %803 = vmatmul.mubr.f32.gmra.mxu0 %v730
    %v804 = vpop.f32.mrf.mxu0
    %v805 = vadd.f32 %v322, %v804
    %v806 = vpop.f32.mrf.mxu0
    %807 = vmatprep.mubr.f32.mxu0 0.0
    %808 = vmatmul.mubr.f32.gmra.mxu0 %v732
    %v809 = vpop.f32.mrf.mxu0
    %v810 = vadd.f32 %v323, %v809
    %v811 = vpop.f32.mrf.mxu0
    %812 = vdwg.mxu0
    %813 = vrot.lane.b32.xlu0 %v314, 120
    %v814 = vpop.permute.xlu0 %813
    %815 = vrot.lane.b32.xlu0 %v319, 120
    %v816 = vpop.permute.xlu0 %815
    %817 = vrot.lane.b32.xlu0 %v314, 88
    %v818 = vpop.permute.xlu0 %817
    %819 = vrot.lane.b32.xlu0 %v319, 88
    %v820 = vpop.permute.xlu0 %819
    %v821 = vsel %vm330, %v814, 0
    %v823 = vsel %vm330, %v816, 0
    %v825 = vsel %vm330, %v818, 0
    %v827 = vsel %vm330, %v820, 0
    %829 = vmatprep.subr.mxu0 0.0
    %830 = vmatpush1.xpose.msra.mxu0 0.0
    %831 = vmatprep.subr.mxu0 0.0
    %832 = vmatpush1.xpose.msra.mxu0 0.0
    %833 = vmatprep.subr.mxu0 0.0
    %834 = vmatpush1.xpose.msra.mxu0 0.0
    %835 = vmatprep.subr.mxu0 0.0
    %836 = vmatpush1.xpose.msra.mxu0 0.0
    %837 = vmatprep.subr.mxu0 0.0
    %838 = vmatpush1.xpose.msra.mxu0 0.0
    %839 = vmatprep.subr.mxu0 0.0
    %840 = vmatpush1.xpose.msra.mxu0 0.0
    %841 = vmatprep.subr.mxu0 0.0
    %842 = vmatpush1.xpose.msra.mxu0 0.0
    %843 = vmatprep.subr.mxu0 0.0
    %844 = vmatpush1.xpose.msra.mxu0 0.0
    %845 = vmatprep.subr.mxu0 0.0
    %846 = vmatpush1.xpose.msra.mxu0 0.0
    %847 = vmatprep.subr.mxu0 0.0
    %848 = vmatpush1.xpose.msra.mxu0 0.0
    %849 = vmatprep.subr.mxu0 0.0
    %850 = vmatpush1.xpose.msra.mxu0 0.0
    %851 = vmatprep.subr.mxu0 0.0
    %852 = vmatpush1.xpose.msra.mxu0 0.0
    %853 = vmatprep.subr.mxu0 0.0
    %854 = vmatpush1.xpose.msra.mxu0 0.0
    %855 = vmatprep.subr.mxu0 0.0
    %856 = vmatpush1.xpose.msra.mxu0 0.0
    %857 = vmatprep.subr.mxu0 0.0
    %858 = vmatpush1.xpose.msra.mxu0 %v827
    %859 = vmatprep.subr.mxu0 0.0
    %860 = vmatpush1.xpose.msra.mxu0 %v825
    %861 = vmatprep.subr.mxu0 0.0
    %862 = vmatpush2.xpose.msra.mxu0 0.0
    %863 = vmatprep.subr.mxu0 0.0
    %864 = vmatpush2.xpose.msra.mxu0 0.0
    %865 = vmatprep.subr.mxu0 0.0
    %866 = vmatpush2.xpose.msra.mxu0 0.0
    %867 = vmatprep.subr.mxu0 0.0
    %868 = vmatpush2.xpose.msra.mxu0 0.0
    %869 = vmatprep.subr.mxu0 0.0
    %870 = vmatpush2.xpose.msra.mxu0 0.0
    %871 = vmatprep.subr.mxu0 0.0
    %872 = vmatpush2.xpose.msra.mxu0 0.0
    %873 = vmatprep.subr.mxu0 0.0
    %874 = vmatpush2.xpose.msra.mxu0 0.0
    %875 = vmatprep.subr.mxu0 0.0
    %876 = vmatpush2.xpose.msra.mxu0 0.0
    %877 = vmatprep.subr.mxu0 0.0
    %878 = vmatpush2.xpose.msra.mxu0 0.0
    %879 = vmatprep.subr.mxu0 0.0
    %880 = vmatpush2.xpose.msra.mxu0 0.0
    %881 = vmatprep.subr.mxu0 0.0
    %882 = vmatpush2.xpose.msra.mxu0 0.0
    %883 = vmatprep.subr.mxu0 0.0
    %884 = vmatpush2.xpose.msra.mxu0 0.0
    %885 = vmatprep.subr.mxu0 0.0
    %886 = vmatpush2.xpose.msra.mxu0 0.0
    %887 = vmatprep.subr.mxu0 0.0
    %888 = vmatpush2.xpose.msra.mxu0 0.0
    %889 = vmatprep.subr.mxu0 0.0
    %890 = vmatpush2.xpose.msra.mxu0 0.0
    %891 = vmatprep.subr.mxu0 0.0
    %892 = vmatpush2.xpose.msra.mxu0 0.0
    %893 = vmatprep.mubr.f32.mxu0 0.0
    %894 = vmatmul.mubr.f32.gmra.mxu0 %v821
    %v895 = vpop.f32.mrf.mxu0
    %v896 = vadd.f32 %v322, %v895
    %v897 = vpop.f32.mrf.mxu0
    %898 = vmatprep.mubr.f32.mxu0 0.0
    %899 = vmatmul.mubr.f32.gmra.mxu0 %v823
    %v900 = vpop.f32.mrf.mxu0
    %v901 = vadd.f32 %v323, %v900
    %v902 = vpop.f32.mrf.mxu0
    %903 = vdwg.mxu0
    %v904 = vsel %vm503, %v805, -inf
    %905 = vmax.xlane.f32.xlu0 %v904
    %v906 = vpop.xlane.xlu0 %905
    %v907 = vsel %vm503, %v810, -inf
    %908 = vmax.xlane.f32.xlu0 %v907
    %v909 = vpop.xlane.xlu0 %908
    %v910 = vsel %vm503, %v896, -inf
    %911 = vmax.xlane.f32.xlu0 %v910
    %v912 = vpop.xlane.xlu0 %911
    %v913 = vsel %vm503, %v901, -inf
    %914 = vmax.xlane.f32.xlu0 %v913
    %v915 = vpop.xlane.xlu0 %914
    %v916 = vsub.f32 %v805, %v906
    %v917 = vsub.f32 %v810, %v909
    %v918 = vsub.f32 %v896, %v912
    %v919 = vsub.f32 %v901, %v915
    %v920 = vmul.f32 %v916, 1.442695
    %v921 = vpow.pop %v920
    %v922 = vmul.f32 %v917, 1.442695
    %v923 = vpow.pop %v922
    %v924 = vmul.f32 %v918, 1.442695
    %v925 = vpow.pop %v924
    %v926 = vmul.f32 %v919, 1.442695
    %v927 = vpow.pop %v926
    %v928 = vsel %vm503, %v921, 0.0
    %929 = vadd.xlane.f32.xlu0 %v928
    %v930 = vpop.xlane.xlu0 %929
    %v931 = vsel %vm503, %v923, 0.0
    %932 = vadd.xlane.f32.xlu0 %v931
    %v933 = vpop.xlane.xlu0 %932
    %v934 = vsel %vm503, %v925, 0.0
    %935 = vadd.xlane.f32.xlu0 %v934
    %v936 = vpop.xlane.xlu0 %935
    %v937 = vsel %vm503, %v927, 0.0
    %938 = vadd.xlane.f32.xlu0 %v937
    %v939 = vpop.xlane.xlu0 %938
    %v940 = vrcp.pop %v930
    %v941 = vrcp.pop %v933
    %v942 = vrcp.pop %v936
    %v943 = vrcp.pop %v939
    %v944 = vmul.f32 %v921, %v940
    %v945 = vmul.f32 %v923, %v941
    %v946 = vmul.f32 %v925, %v942
    %v947 = vmul.f32 %v927, %v943
    %948 = vrot.lane.b32.xlu0 %v304, 56
    %v949 = vpop.permute.xlu0 %948
    %950 = vrot.lane.b32.xlu0 %v309, 56
    %v951 = vpop.permute.xlu0 %950
    %v955 = vsel %vm503, %v944, 0
    %v958 = vsel %vm503, %v945, 0
    %960 = vmatprep.subr.mxu0 0.0
    %961 = vmatpush1.msra.mxu0 0.0
    %962 = vmatprep.subr.mxu0 0.0
    %963 = vmatpush1.msra.mxu0 0.0
    %964 = vmatprep.subr.mxu0 0.0
    %965 = vmatpush1.msra.mxu0 0.0
    %966 = vmatprep.subr.mxu0 0.0
    %967 = vmatpush1.msra.mxu0 0.0
    %968 = vmatprep.subr.mxu0 0.0
    %969 = vmatpush1.msra.mxu0 0.0
    %970 = vmatprep.subr.mxu0 0.0
    %971 = vmatpush1.msra.mxu0 0.0
    %972 = vmatprep.subr.mxu0 0.0
    %973 = vmatpush1.msra.mxu0 0.0
    %974 = vmatprep.subr.mxu0 0.0
    %975 = vmatpush1.msra.mxu0 0.0
    %976 = vmatprep.subr.mxu0 0.0
    %977 = vmatpush1.msra.mxu0 0.0
    %978 = vmatprep.subr.mxu0 0.0
    %979 = vmatpush1.msra.mxu0 0.0
    %980 = vmatprep.subr.mxu0 0.0
    %981 = vmatpush1.msra.mxu0 0.0
    %982 = vmatprep.subr.mxu0 0.0
    %983 = vmatpush1.msra.mxu0 0.0
    %984 = vmatprep.subr.mxu0 0.0
    %985 = vmatpush1.msra.mxu0 0.0
    %986 = vmatprep.subr.mxu0 0.0
    %987 = vmatpush1.msra.mxu0 0.0
    %988 = vmatprep.subr.mxu0 0.0
    %989 = vmatpush1.msra.mxu0 %v951
    %990 = vmatprep.subr.mxu0 0.0
    %991 = vmatpush1.msra.mxu0 %v949
    %992 = vmatprep.subr.mxu0 0.0
    %993 = vmatpush2.msra.mxu0 0.0
    %994 = vmatprep.subr.mxu0 0.0
    %995 = vmatpush2.msra.mxu0 0.0
    %996 = vmatprep.subr.mxu0 0.0
    %997 = vmatpush2.msra.mxu0 0.0
    %998 = vmatprep.subr.mxu0 0.0
    %999 = vmatpush2.msra.mxu0 0.0
    %1000 = vmatprep.subr.mxu0 0.0
    %1001 = vmatpush2.msra.mxu0 0.0
    %1002 = vmatprep.subr.mxu0 0.0
    %1003 = vmatpush2.msra.mxu0 0.0
    %1004 = vmatprep.subr.mxu0 0.0
    %1005 = vmatpush2.msra.mxu0 0.0
    %1006 = vmatprep.subr.mxu0 0.0
    %1007 = vmatpush2.msra.mxu0 0.0
    %1008 = vmatprep.subr.mxu0 0.0
    %1009 = vmatpush2.msra.mxu0 0.0
    %1010 = vmatprep.subr.mxu0 0.0
    %1011 = vmatpush2.msra.mxu0 0.0
    %1012 = vmatprep.subr.mxu0 0.0
    %1013 = vmatpush2.msra.mxu0 0.0
    %1014 = vmatprep.subr.mxu0 0.0
    %1015 = vmatpush2.msra.mxu0 0.0
    %1016 = vmatprep.subr.mxu0 0.0
    %1017 = vmatpush2.msra.mxu0 0.0
    %1018 = vmatprep.subr.mxu0 0.0
    %1019 = vmatpush2.msra.mxu0 0.0
    %1020 = vmatprep.subr.mxu0 0.0
    %1021 = vmatpush2.msra.mxu0 0.0
    %1022 = vmatprep.subr.mxu0 0.0
    %1023 = vmatpush2.msra.mxu0 0.0
    %1024 = vmatprep.mubr.f32.mxu0 0.0
    %1025 = vmatmul.mubr.f32.gmra.mxu0 %v955
    %v1026 = vpop.f32.mrf.mxu0
    %v1027 = vadd.f32 0.0, %v1026
    %v1028 = vpop.f32.mrf.mxu0
    %1029 = vmatprep.mubr.f32.mxu0 0.0
    %1030 = vmatmul.mubr.f32.gmra.mxu0 %v958
    %v1031 = vpop.f32.mrf.mxu0
    %v1032 = vadd.f32 0.0, %v1031
    %v1033 = vpop.f32.mrf.mxu0
    %1034 = vdwg.mxu0
    %1035 = vrot.lane.b32.xlu0 %v314, 56
    %v1036 = vpop.permute.xlu0 %1035
    %1037 = vrot.lane.b32.xlu0 %v319, 56
    %v1038 = vpop.permute.xlu0 %1037
    %v1042 = vsel %vm503, %v946, 0
    %v1045 = vsel %vm503, %v947, 0
    %1047 = vmatprep.subr.mxu0 0.0
    %1048 = vmatpush1.msra.mxu0 0.0
    %1049 = vmatprep.subr.mxu0 0.0
    %1050 = vmatpush1.msra.mxu0 0.0
    %1051 = vmatprep.subr.mxu0 0.0
    %1052 = vmatpush1.msra.mxu0 0.0
    %1053 = vmatprep.subr.mxu0 0.0
    %1054 = vmatpush1.msra.mxu0 0.0
    %1055 = vmatprep.subr.mxu0 0.0
    %1056 = vmatpush1.msra.mxu0 0.0
    %1057 = vmatprep.subr.mxu0 0.0
    %1058 = vmatpush1.msra.mxu0 0.0
    %1059 = vmatprep.subr.mxu0 0.0
    %1060 = vmatpush1.msra.mxu0 0.0
    %1061 = vmatprep.subr.mxu0 0.0
    %1062 = vmatpush1.msra.mxu0 0.0
    %1063 = vmatprep.subr.mxu0 0.0
    %1064 = vmatpush1.msra.mxu0 0.0
    %1065 = vmatprep.subr.mxu0 0.0
    %1066 = vmatpush1.msra.mxu0 0.0
    %1067 = vmatprep.subr.mxu0 0.0
    %1068 = vmatpush1.msra.mxu0 0.0
    %1069 = vmatprep.subr.mxu0 0.0
    %1070 = vmatpush1.msra.mxu0 0.0
    %1071 = vmatprep.subr.mxu0 0.0
    %1072 = vmatpush1.msra.mxu0 0.0
    %1073 = vmatprep.subr.mxu0 0.0
    %1074 = vmatpush1.msra.mxu0 0.0
    %1075 = vmatprep.subr.mxu0 0.0
    %1076 = vmatpush1.msra.mxu0 %v1038
    %1077 = vmatprep.subr.mxu0 0.0
    %1078 = vmatpush1.msra.mxu0 %v1036
    %1079 = vmatprep.subr.mxu0 0.0
    %1080 = vmatpush2.msra.mxu0 0.0
    %1081 = vmatprep.subr.mxu0 0.0
    %1082 = vmatpush2.msra.mxu0 0.0
    %1083 = vmatprep.subr.mxu0 0.0
    %1084 = vmatpush2.msra.mxu0 0.0
    %1085 = vmatprep.subr.mxu0 0.0
    %1086 = vmatpush2.msra.mxu0 0.0
    %1087 = vmatprep.subr.mxu0 0.0
    %1088 = vmatpush2.msra.mxu0 0.0
    %1089 = vmatprep.subr.mxu0 0.0
    %1090 = vmatpush2.msra.mxu0 0.0
    %1091 = vmatprep.subr.mxu0 0.0
    %1092 = vmatpush2.msra.mxu0 0.0
    %1093 = vmatprep.subr.mxu0 0.0
    %1094 = vmatpush2.msra.mxu0 0.0
    %1095 = vmatprep.subr.mxu0 0.0
    %1096 = vmatpush2.msra.mxu0 0.0
    %1097 = vmatprep.subr.mxu0 0.0
    %1098 = vmatpush2.msra.mxu0 0.0
    %1099 = vmatprep.subr.mxu0 0.0
    %1100 = vmatpush2.msra.mxu0 0.0
    %1101 = vmatprep.subr.mxu0 0.0
    %1102 = vmatpush2.msra.mxu0 0.0
    %1103 = vmatprep.subr.mxu0 0.0
    %1104 = vmatpush2.msra.mxu0 0.0
    %1105 = vmatprep.subr.mxu0 0.0
    %1106 = vmatpush2.msra.mxu0 0.0
    %1107 = vmatprep.subr.mxu0 0.0
    %1108 = vmatpush2.msra.mxu0 0.0
    %1109 = vmatprep.subr.mxu0 0.0
    %1110 = vmatpush2.msra.mxu0 0.0
    %1111 = vmatprep.mubr.f32.mxu0 0.0
    %1112 = vmatmul.mubr.f32.gmra.mxu0 %v1042
    %v1113 = vpop.f32.mrf.mxu0
    %v1114 = vadd.f32 0.0, %v1113
    %v1115 = vpop.f32.mrf.mxu0
    %1116 = vmatprep.mubr.f32.mxu0 0.0
    %1117 = vmatmul.mubr.f32.gmra.mxu0 %v1045
    %v1118 = vpop.f32.mrf.mxu0
    %v1119 = vadd.f32 0.0, %v1118
    %v1120 = vpop.f32.mrf.mxu0
    %1121 = vdwg.mxu0
    %1122 = vrot.lane.b32.xlu0 %v304, 112
    %v1123 = vpop.permute.xlu0 %1122
    %1124 = vrot.lane.b32.xlu0 %v309, 112
    %v1125 = vpop.permute.xlu0 %1124
    %1126 = vrot.lane.b32.xlu0 %v304, 80
    %v1127 = vpop.permute.xlu0 %1126
    %1128 = vrot.lane.b32.xlu0 %v309, 80
    %v1129 = vpop.permute.xlu0 %1128
    %v1130 = vsel %vm330, %v1123, 0
    %v1132 = vsel %vm330, %v1125, 0
    %v1134 = vsel %vm330, %v1127, 0
    %v1136 = vsel %vm330, %v1129, 0
    %1138 = vmatprep.subr.mxu0 0.0
    %1139 = vmatpush1.xpose.msra.mxu0 0.0
    %1140 = vmatprep.subr.mxu0 0.0
    %1141 = vmatpush1.xpose.msra.mxu0 0.0
    %1142 = vmatprep.subr.mxu0 0.0
    %1143 = vmatpush1.xpose.msra.mxu0 0.0
    %1144 = vmatprep.subr.mxu0 0.0
    %1145 = vmatpush1.xpose.msra.mxu0 0.0
    %1146 = vmatprep.subr.mxu0 0.0
    %1147 = vmatpush1.xpose.msra.mxu0 0.0
    %1148 = vmatprep.subr.mxu0 0.0
    %1149 = vmatpush1.xpose.msra.mxu0 0.0
    %1150 = vmatprep.subr.mxu0 0.0
    %1151 = vmatpush1.xpose.msra.mxu0 0.0
    %1152 = vmatprep.subr.mxu0 0.0
    %1153 = vmatpush1.xpose.msra.mxu0 0.0
    %1154 = vmatprep.subr.mxu0 0.0
    %1155 = vmatpush1.xpose.msra.mxu0 0.0
    %1156 = vmatprep.subr.mxu0 0.0
    %1157 = vmatpush1.xpose.msra.mxu0 0.0
    %1158 = vmatprep.subr.mxu0 0.0
    %1159 = vmatpush1.xpose.msra.mxu0 0.0
    %1160 = vmatprep.subr.mxu0 0.0
    %1161 = vmatpush1.xpose.msra.mxu0 0.0
    %1162 = vmatprep.subr.mxu0 0.0
    %1163 = vmatpush1.xpose.msra.mxu0 0.0
    %1164 = vmatprep.subr.mxu0 0.0
    %1165 = vmatpush1.xpose.msra.mxu0 0.0
    %1166 = vmatprep.subr.mxu0 0.0
    %1167 = vmatpush1.xpose.msra.mxu0 %v1136
    %1168 = vmatprep.subr.mxu0 0.0
    %1169 = vmatpush1.xpose.msra.mxu0 %v1134
    %1170 = vmatprep.subr.mxu0 0.0
    %1171 = vmatpush2.xpose.msra.mxu0 0.0
    %1172 = vmatprep.subr.mxu0 0.0
    %1173 = vmatpush2.xpose.msra.mxu0 0.0
    %1174 = vmatprep.subr.mxu0 0.0
    %1175 = vmatpush2.xpose.msra.mxu0 0.0
    %1176 = vmatprep.subr.mxu0 0.0
    %1177 = vmatpush2.xpose.msra.mxu0 0.0
    %1178 = vmatprep.subr.mxu0 0.0
    %1179 = vmatpush2.xpose.msra.mxu0 0.0
    %1180 = vmatprep.subr.mxu0 0.0
    %1181 = vmatpush2.xpose.msra.mxu0 0.0
    %1182 = vmatprep.subr.mxu0 0.0
    %1183 = vmatpush2.xpose.msra.mxu0 0.0
    %1184 = vmatprep.subr.mxu0 0.0
    %1185 = vmatpush2.xpose.msra.mxu0 0.0
    %1186 = vmatprep.subr.mxu0 0.0
    %1187 = vmatpush2.xpose.msra.mxu0 0.0
    %1188 = vmatprep.subr.mxu0 0.0
    %1189 = vmatpush2.xpose.msra.mxu0 0.0
    %1190 = vmatprep.subr.mxu0 0.0
    %1191 = vmatpush2.xpose.msra.mxu0 0.0
    %1192 = vmatprep.subr.mxu0 0.0
    %1193 = vmatpush2.xpose.msra.mxu0 0.0
    %1194 = vmatprep.subr.mxu0 0.0
    %1195 = vmatpush2.xpose.msra.mxu0 0.0
    %1196 = vmatprep.subr.mxu0 0.0
    %1197 = vmatpush2.xpose.msra.mxu0 0.0
    %1198 = vmatprep.subr.mxu0 0.0
    %1199 = vmatpush2.xpose.msra.mxu0 0.0
    %1200 = vmatprep.subr.mxu0 0.0
    %1201 = vmatpush2.xpose.msra.mxu0 0.0
    %1202 = vmatprep.mubr.f32.mxu0 0.0
    %1203 = vmatmul.mubr.f32.gmra.mxu0 %v1130
    %v1204 = vpop.f32.mrf.mxu0
    %v1205 = vadd.f32 %v322, %v1204
    %v1206 = vpop.f32.mrf.mxu0
    %1207 = vmatprep.mubr.f32.mxu0 0.0
    %1208 = vmatmul.mubr.f32.gmra.mxu0 %v1132
    %v1209 = vpop.f32.mrf.mxu0
    %v1210 = vadd.f32 %v323, %v1209
    %v1211 = vpop.f32.mrf.mxu0
    %1212 = vdwg.mxu0
    %1213 = vrot.lane.b32.xlu0 %v314, 112
    %v1214 = vpop.permute.xlu0 %1213
    %1215 = vrot.lane.b32.xlu0 %v319, 112
    %v1216 = vpop.permute.xlu0 %1215
    %1217 = vrot.lane.b32.xlu0 %v314, 80
    %v1218 = vpop.permute.xlu0 %1217
    %1219 = vrot.lane.b32.xlu0 %v319, 80
    %v1220 = vpop.permute.xlu0 %1219
    %v1221 = vsel %vm330, %v1214, 0
    %v1223 = vsel %vm330, %v1216, 0
    %v1225 = vsel %vm330, %v1218, 0
    %v1227 = vsel %vm330, %v1220, 0
    %1229 = vmatprep.subr.mxu0 0.0
    %1230 = vmatpush1.xpose.msra.mxu0 0.0
    %1231 = vmatprep.subr.mxu0 0.0
    %1232 = vmatpush1.xpose.msra.mxu0 0.0
    %1233 = vmatprep.subr.mxu0 0.0
    %1234 = vmatpush1.xpose.msra.mxu0 0.0
    %1235 = vmatprep.subr.mxu0 0.0
    %1236 = vmatpush1.xpose.msra.mxu0 0.0
    %1237 = vmatprep.subr.mxu0 0.0
    %1238 = vmatpush1.xpose.msra.mxu0 0.0
    %1239 = vmatprep.subr.mxu0 0.0
    %1240 = vmatpush1.xpose.msra.mxu0 0.0
    %1241 = vmatprep.subr.mxu0 0.0
    %1242 = vmatpush1.xpose.msra.mxu0 0.0
    %1243 = vmatprep.subr.mxu0 0.0
    %1244 = vmatpush1.xpose.msra.mxu0 0.0
    %1245 = vmatprep.subr.mxu0 0.0
    %1246 = vmatpush1.xpose.msra.mxu0 0.0
    %1247 = vmatprep.subr.mxu0 0.0
    %1248 = vmatpush1.xpose.msra.mxu0 0.0
    %1249 = vmatprep.subr.mxu0 0.0
    %1250 = vmatpush1.xpose.msra.mxu0 0.0
    %1251 = vmatprep.subr.mxu0 0.0
    %1252 = vmatpush1.xpose.msra.mxu0 0.0
    %1253 = vmatprep.subr.mxu0 0.0
    %1254 = vmatpush1.xpose.msra.mxu0 0.0
    %1255 = vmatprep.subr.mxu0 0.0
    %1256 = vmatpush1.xpose.msra.mxu0 0.0
    %1257 = vmatprep.subr.mxu0 0.0
    %1258 = vmatpush1.xpose.msra.mxu0 %v1227
    %1259 = vmatprep.subr.mxu0 0.0
    %1260 = vmatpush1.xpose.msra.mxu0 %v1225
    %1261 = vmatprep.subr.mxu0 0.0
    %1262 = vmatpush2.xpose.msra.mxu0 0.0
    %1263 = vmatprep.subr.mxu0 0.0
    %1264 = vmatpush2.xpose.msra.mxu0 0.0
    %1265 = vmatprep.subr.mxu0 0.0
    %1266 = vmatpush2.xpose.msra.mxu0 0.0
    %1267 = vmatprep.subr.mxu0 0.0
    %1268 = vmatpush2.xpose.msra.mxu0 0.0
    %1269 = vmatprep.subr.mxu0 0.0
    %1270 = vmatpush2.xpose.msra.mxu0 0.0
    %1271 = vmatprep.subr.mxu0 0.0
    %1272 = vmatpush2.xpose.msra.mxu0 0.0
    %1273 = vmatprep.subr.mxu0 0.0
    %1274 = vmatpush2.xpose.msra.mxu0 0.0
    %1275 = vmatprep.subr.mxu0 0.0
    %1276 = vmatpush2.xpose.msra.mxu0 0.0
    %1277 = vmatprep.subr.mxu0 0.0
    %1278 = vmatpush2.xpose.msra.mxu0 0.0
    %1279 = vmatprep.subr.mxu0 0.0
    %1280 = vmatpush2.xpose.msra.mxu0 0.0
    %1281 = vmatprep.subr.mxu0 0.0
    %1282 = vmatpush2.xpose.msra.mxu0 0.0
    %1283 = vmatprep.subr.mxu0 0.0
    %1284 = vmatpush2.xpose.msra.mxu0 0.0
    %1285 = vmatprep.subr.mxu0 0.0
    %1286 = vmatpush2.xpose.msra.mxu0 0.0
    %1287 = vmatprep.subr.mxu0 0.0
    %1288 = vmatpush2.xpose.msra.mxu0 0.0
    %1289 = vmatprep.subr.mxu0 0.0
    %1290 = vmatpush2.xpose.msra.mxu0 0.0
    %1291 = vmatprep.subr.mxu0 0.0
    %1292 = vmatpush2.xpose.msra.mxu0 0.0
    %1293 = vmatprep.mubr.f32.mxu0 0.0
    %1294 = vmatmul.mubr.f32.gmra.mxu0 %v1221
    %v1295 = vpop.f32.mrf.mxu0
    %v1296 = vadd.f32 %v322, %v1295
    %v1297 = vpop.f32.mrf.mxu0
    %1298 = vmatprep.mubr.f32.mxu0 0.0
    %1299 = vmatmul.mubr.f32.gmra.mxu0 %v1223
    %v1300 = vpop.f32.mrf.mxu0
    %v1301 = vadd.f32 %v323, %v1300
    %v1302 = vpop.f32.mrf.mxu0
    %1303 = vdwg.mxu0
    %v1304 = vsel %vm503, %v1205, -inf
    %1305 = vmax.xlane.f32.xlu0 %v1304
    %v1306 = vpop.xlane.xlu0 %1305
    %v1307 = vsel %vm503, %v1210, -inf
    %1308 = vmax.xlane.f32.xlu0 %v1307
    %v1309 = vpop.xlane.xlu0 %1308
    %v1310 = vsel %vm503, %v1296, -inf
    %1311 = vmax.xlane.f32.xlu0 %v1310
    %v1312 = vpop.xlane.xlu0 %1311
    %v1313 = vsel %vm503, %v1301, -inf
    %1314 = vmax.xlane.f32.xlu0 %v1313
    %v1315 = vpop.xlane.xlu0 %1314
    %v1316 = vsub.f32 %v1205, %v1306
    %v1317 = vsub.f32 %v1210, %v1309
    %v1318 = vsub.f32 %v1296, %v1312
    %v1319 = vsub.f32 %v1301, %v1315
    %v1320 = vmul.f32 %v1316, 1.442695
    %v1321 = vpow.pop %v1320
    %v1322 = vmul.f32 %v1317, 1.442695
    %v1323 = vpow.pop %v1322
    %v1324 = vmul.f32 %v1318, 1.442695
    %v1325 = vpow.pop %v1324
    %v1326 = vmul.f32 %v1319, 1.442695
    %v1327 = vpow.pop %v1326
    %v1328 = vsel %vm503, %v1321, 0.0
    %1329 = vadd.xlane.f32.xlu0 %v1328
    %v1330 = vpop.xlane.xlu0 %1329
    %v1331 = vsel %vm503, %v1323, 0.0
    %1332 = vadd.xlane.f32.xlu0 %v1331
    %v1333 = vpop.xlane.xlu0 %1332
    %v1334 = vsel %vm503, %v1325, 0.0
    %1335 = vadd.xlane.f32.xlu0 %v1334
    %v1336 = vpop.xlane.xlu0 %1335
    %v1337 = vsel %vm503, %v1327, 0.0
    %1338 = vadd.xlane.f32.xlu0 %v1337
    %v1339 = vpop.xlane.xlu0 %1338
    %v1340 = vrcp.pop %v1330
    %v1341 = vrcp.pop %v1333
    %v1342 = vrcp.pop %v1336
    %v1343 = vrcp.pop %v1339
    %v1344 = vmul.f32 %v1321, %v1340
    %v1345 = vmul.f32 %v1323, %v1341
    %v1346 = vmul.f32 %v1325, %v1342
    %v1347 = vmul.f32 %v1327, %v1343
    %1348 = vrot.lane.b32.xlu0 %v304, 48
    %v1349 = vpop.permute.xlu0 %1348
    %1350 = vrot.lane.b32.xlu0 %v309, 48
    %v1351 = vpop.permute.xlu0 %1350
    %v1355 = vsel %vm503, %v1344, 0
    %v1358 = vsel %vm503, %v1345, 0
    %1360 = vmatprep.subr.mxu0 0.0
    %1361 = vmatpush1.msra.mxu0 0.0
    %1362 = vmatprep.subr.mxu0 0.0
    %1363 = vmatpush1.msra.mxu0 0.0
    %1364 = vmatprep.subr.mxu0 0.0
    %1365 = vmatpush1.msra.mxu0 0.0
    %1366 = vmatprep.subr.mxu0 0.0
    %1367 = vmatpush1.msra.mxu0 0.0
    %1368 = vmatprep.subr.mxu0 0.0
    %1369 = vmatpush1.msra.mxu0 0.0
    %1370 = vmatprep.subr.mxu0 0.0
    %1371 = vmatpush1.msra.mxu0 0.0
    %1372 = vmatprep.subr.mxu0 0.0
    %1373 = vmatpush1.msra.mxu0 0.0
    %1374 = vmatprep.subr.mxu0 0.0
    %1375 = vmatpush1.msra.mxu0 0.0
    %1376 = vmatprep.subr.mxu0 0.0
    %1377 = vmatpush1.msra.mxu0 0.0
    %1378 = vmatprep.subr.mxu0 0.0
    %1379 = vmatpush1.msra.mxu0 0.0
    %1380 = vmatprep.subr.mxu0 0.0
    %1381 = vmatpush1.msra.mxu0 0.0
    %1382 = vmatprep.subr.mxu0 0.0
    %1383 = vmatpush1.msra.mxu0 0.0
    %1384 = vmatprep.subr.mxu0 0.0
    %1385 = vmatpush1.msra.mxu0 0.0
    %1386 = vmatprep.subr.mxu0 0.0
    %1387 = vmatpush1.msra.mxu0 0.0
    %1388 = vmatprep.subr.mxu0 0.0
    %1389 = vmatpush1.msra.mxu0 %v1351
    %1390 = vmatprep.subr.mxu0 0.0
    %1391 = vmatpush1.msra.mxu0 %v1349
    %1392 = vmatprep.subr.mxu0 0.0
    %1393 = vmatpush2.msra.mxu0 0.0
    %1394 = vmatprep.subr.mxu0 0.0
    %1395 = vmatpush2.msra.mxu0 0.0
    %1396 = vmatprep.subr.mxu0 0.0
    %1397 = vmatpush2.msra.mxu0 0.0
    %1398 = vmatprep.subr.mxu0 0.0
    %1399 = vmatpush2.msra.mxu0 0.0
    %1400 = vmatprep.subr.mxu0 0.0
    %1401 = vmatpush2.msra.mxu0 0.0
    %1402 = vmatprep.subr.mxu0 0.0
    %1403 = vmatpush2.msra.mxu0 0.0
    %1404 = vmatprep.subr.mxu0 0.0
    %1405 = vmatpush2.msra.mxu0 0.0
    %1406 = vmatprep.subr.mxu0 0.0
    %1407 = vmatpush2.msra.mxu0 0.0
    %1408 = vmatprep.subr.mxu0 0.0
    %1409 = vmatpush2.msra.mxu0 0.0
    %1410 = vmatprep.subr.mxu0 0.0
    %1411 = vmatpush2.msra.mxu0 0.0
    %1412 = vmatprep.subr.mxu0 0.0
    %1413 = vmatpush2.msra.mxu0 0.0
    %1414 = vmatprep.subr.mxu0 0.0
    %1415 = vmatpush2.msra.mxu0 0.0
    %1416 = vmatprep.subr.mxu0 0.0
    %1417 = vmatpush2.msra.mxu0 0.0
    %1418 = vmatprep.subr.mxu0 0.0
    %1419 = vmatpush2.msra.mxu0 0.0
    %1420 = vmatprep.subr.mxu0 0.0
    %1421 = vmatpush2.msra.mxu0 0.0
    %1422 = vmatprep.subr.mxu0 0.0
    %1423 = vmatpush2.msra.mxu0 0.0
    %1424 = vmatprep.mubr.f32.mxu0 0.0
    %1425 = vmatmul.mubr.f32.gmra.mxu0 %v1355
    %v1426 = vpop.f32.mrf.mxu0
    %v1427 = vadd.f32 0.0, %v1426
    %v1428 = vpop.f32.mrf.mxu0
    %1429 = vmatprep.mubr.f32.mxu0 0.0
    %1430 = vmatmul.mubr.f32.gmra.mxu0 %v1358
    %v1431 = vpop.f32.mrf.mxu0
    %v1432 = vadd.f32 0.0, %v1431
    %v1433 = vpop.f32.mrf.mxu0
    %1434 = vdwg.mxu0
    %1435 = vrot.lane.b32.xlu0 %v314, 48
    %v1436 = vpop.permute.xlu0 %1435
    %1437 = vrot.lane.b32.xlu0 %v319, 48
    %v1438 = vpop.permute.xlu0 %1437
    %v1442 = vsel %vm503, %v1346, 0
    %v1445 = vsel %vm503, %v1347, 0
    %1447 = vmatprep.subr.mxu0 0.0
    %1448 = vmatpush1.msra.mxu0 0.0
    %1449 = vmatprep.subr.mxu0 0.0
    %1450 = vmatpush1.msra.mxu0 0.0
    %1451 = vmatprep.subr.mxu0 0.0
    %1452 = vmatpush1.msra.mxu0 0.0
    %1453 = vmatprep.subr.mxu0 0.0
    %1454 = vmatpush1.msra.mxu0 0.0
    %1455 = vmatprep.subr.mxu0 0.0
    %1456 = vmatpush1.msra.mxu0 0.0
    %1457 = vmatprep.subr.mxu0 0.0
    %1458 = vmatpush1.msra.mxu0 0.0
    %1459 = vmatprep.subr.mxu0 0.0
    %1460 = vmatpush1.msra.mxu0 0.0
    %1461 = vmatprep.subr.mxu0 0.0
    %1462 = vmatpush1.msra.mxu0 0.0
    %1463 = vmatprep.subr.mxu0 0.0
    %1464 = vmatpush1.msra.mxu0 0.0
    %1465 = vmatprep.subr.mxu0 0.0
    %1466 = vmatpush1.msra.mxu0 0.0
    %1467 = vmatprep.subr.mxu0 0.0
    %1468 = vmatpush1.msra.mxu0 0.0
    %1469 = vmatprep.subr.mxu0 0.0
    %1470 = vmatpush1.msra.mxu0 0.0
    %1471 = vmatprep.subr.mxu0 0.0
    %1472 = vmatpush1.msra.mxu0 0.0
    %1473 = vmatprep.subr.mxu0 0.0
    %1474 = vmatpush1.msra.mxu0 0.0
    %1475 = vmatprep.subr.mxu0 0.0
    %1476 = vmatpush1.msra.mxu0 %v1438
    %1477 = vmatprep.subr.mxu0 0.0
    %1478 = vmatpush1.msra.mxu0 %v1436
    %1479 = vmatprep.subr.mxu0 0.0
    %1480 = vmatpush2.msra.mxu0 0.0
    %1481 = vmatprep.subr.mxu0 0.0
    %1482 = vmatpush2.msra.mxu0 0.0
    %1483 = vmatprep.subr.mxu0 0.0
    %1484 = vmatpush2.msra.mxu0 0.0
    %1485 = vmatprep.subr.mxu0 0.0
    %1486 = vmatpush2.msra.mxu0 0.0
    %1487 = vmatprep.subr.mxu0 0.0
    %1488 = vmatpush2.msra.mxu0 0.0
    %1489 = vmatprep.subr.mxu0 0.0
    %1490 = vmatpush2.msra.mxu0 0.0
    %1491 = vmatprep.subr.mxu0 0.0
    %1492 = vmatpush2.msra.mxu0 0.0
    %1493 = vmatprep.subr.mxu0 0.0
    %1494 = vmatpush2.msra.mxu0 0.0
    %1495 = vmatprep.subr.mxu0 0.0
    %1496 = vmatpush2.msra.mxu0 0.0
    %1497 = vmatprep.subr.mxu0 0.0
    %1498 = vmatpush2.msra.mxu0 0.0
    %1499 = vmatprep.subr.mxu0 0.0
    %1500 = vmatpush2.msra.mxu0 0.0
    %1501 = vmatprep.subr.mxu0 0.0
    %1502 = vmatpush2.msra.mxu0 0.0
    %1503 = vmatprep.subr.mxu0 0.0
    %1504 = vmatpush2.msra.mxu0 0.0
    %1505 = vmatprep.subr.mxu0 0.0
    %1506 = vmatpush2.msra.mxu0 0.0
    %1507 = vmatprep.subr.mxu0 0.0
    %1508 = vmatpush2.msra.mxu0 0.0
    %1509 = vmatprep.subr.mxu0 0.0
    %1510 = vmatpush2.msra.mxu0 0.0
    %1511 = vmatprep.mubr.f32.mxu0 0.0
    %1512 = vmatmul.mubr.f32.gmra.mxu0 %v1442
    %v1513 = vpop.f32.mrf.mxu0
    %v1514 = vadd.f32 0.0, %v1513
    %v1515 = vpop.f32.mrf.mxu0
    %1516 = vmatprep.mubr.f32.mxu0 0.0
    %1517 = vmatmul.mubr.f32.gmra.mxu0 %v1445
    %v1518 = vpop.f32.mrf.mxu0
    %v1519 = vadd.f32 0.0, %v1518
    %v1520 = vpop.f32.mrf.mxu0
    %1521 = vdwg.mxu0
    %1522 = vrot.lane.b32.xlu0 %v304, 104
    %v1523 = vpop.permute.xlu0 %1522
    %1524 = vrot.lane.b32.xlu0 %v309, 104
    %v1525 = vpop.permute.xlu0 %1524
    %1526 = vrot.lane.b32.xlu0 %v304, 72
    %v1527 = vpop.permute.xlu0 %1526
    %1528 = vrot.lane.b32.xlu0 %v309, 72
    %v1529 = vpop.permute.xlu0 %1528
    %v1530 = vsel %vm330, %v1523, 0
    %v1532 = vsel %vm330, %v1525, 0
    %v1534 = vsel %vm330, %v1527, 0
    %v1536 = vsel %vm330, %v1529, 0
    %1538 = vmatprep.subr.mxu0 0.0
    %1539 = vmatpush1.xpose.msra.mxu0 0.0
    %1540 = vmatprep.subr.mxu0 0.0
    %1541 = vmatpush1.xpose.msra.mxu0 0.0
    %1542 = vmatprep.subr.mxu0 0.0
    %1543 = vmatpush1.xpose.msra.mxu0 0.0
    %1544 = vmatprep.subr.mxu0 0.0
    %1545 = vmatpush1.xpose.msra.mxu0 0.0
    %1546 = vmatprep.subr.mxu0 0.0
    %1547 = vmatpush1.xpose.msra.mxu0 0.0
    %1548 = vmatprep.subr.mxu0 0.0
    %1549 = vmatpush1.xpose.msra.mxu0 0.0
    %1550 = vmatprep.subr.mxu0 0.0
    %1551 = vmatpush1.xpose.msra.mxu0 0.0
    %1552 = vmatprep.subr.mxu0 0.0
    %1553 = vmatpush1.xpose.msra.mxu0 0.0
    %1554 = vmatprep.subr.mxu0 0.0
    %1555 = vmatpush1.xpose.msra.mxu0 0.0
    %1556 = vmatprep.subr.mxu0 0.0
    %1557 = vmatpush1.xpose.msra.mxu0 0.0
    %1558 = vmatprep.subr.mxu0 0.0
    %1559 = vmatpush1.xpose.msra.mxu0 0.0
    %1560 = vmatprep.subr.mxu0 0.0
    %1561 = vmatpush1.xpose.msra.mxu0 0.0
    %1562 = vmatprep.subr.mxu0 0.0
    %1563 = vmatpush1.xpose.msra.mxu0 0.0
    %1564 = vmatprep.subr.mxu0 0.0
    %1565 = vmatpush1.xpose.msra.mxu0 0.0
    %1566 = vmatprep.subr.mxu0 0.0
    %1567 = vmatpush1.xpose.msra.mxu0 %v1536
    %1568 = vmatprep.subr.mxu0 0.0
    %1569 = vmatpush1.xpose.msra.mxu0 %v1534
    %1570 = vmatprep.subr.mxu0 0.0
    %1571 = vmatpush2.xpose.msra.mxu0 0.0
    %1572 = vmatprep.subr.mxu0 0.0
    %1573 = vmatpush2.xpose.msra.mxu0 0.0
    %1574 = vmatprep.subr.mxu0 0.0
    %1575 = vmatpush2.xpose.msra.mxu0 0.0
    %1576 = vmatprep.subr.mxu0 0.0
    %1577 = vmatpush2.xpose.msra.mxu0 0.0
    %1578 = vmatprep.subr.mxu0 0.0
    %1579 = vmatpush2.xpose.msra.mxu0 0.0
    %1580 = vmatprep.subr.mxu0 0.0
    %1581 = vmatpush2.xpose.msra.mxu0 0.0
    %1582 = vmatprep.subr.mxu0 0.0
    %1583 = vmatpush2.xpose.msra.mxu0 0.0
    %1584 = vmatprep.subr.mxu0 0.0
    %1585 = vmatpush2.xpose.msra.mxu0 0.0
    %1586 = vmatprep.subr.mxu0 0.0
    %1587 = vmatpush2.xpose.msra.mxu0 0.0
    %1588 = vmatprep.subr.mxu0 0.0
    %1589 = vmatpush2.xpose.msra.mxu0 0.0
    %1590 = vmatprep.subr.mxu0 0.0
    %1591 = vmatpush2.xpose.msra.mxu0 0.0
    %1592 = vmatprep.subr.mxu0 0.0
    %1593 = vmatpush2.xpose.msra.mxu0 0.0
    %1594 = vmatprep.subr.mxu0 0.0
    %1595 = vmatpush2.xpose.msra.mxu0 0.0
    %1596 = vmatprep.subr.mxu0 0.0
    %1597 = vmatpush2.xpose.msra.mxu0 0.0
    %1598 = vmatprep.subr.mxu0 0.0
    %1599 = vmatpush2.xpose.msra.mxu0 0.0
    %1600 = vmatprep.subr.mxu0 0.0
    %1601 = vmatpush2.xpose.msra.mxu0 0.0
    %1602 = vmatprep.mubr.f32.mxu0 0.0
    %1603 = vmatmul.mubr.f32.gmra.mxu0 %v1530
    %v1604 = vpop.f32.mrf.mxu0
    %v1605 = vadd.f32 %v322, %v1604
    %v1606 = vpop.f32.mrf.mxu0
    %1607 = vmatprep.mubr.f32.mxu0 0.0
    %1608 = vmatmul.mubr.f32.gmra.mxu0 %v1532
    %v1609 = vpop.f32.mrf.mxu0
    %v1610 = vadd.f32 %v323, %v1609
    %v1611 = vpop.f32.mrf.mxu0
    %1612 = vdwg.mxu0
    %1613 = vrot.lane.b32.xlu0 %v314, 104
    %v1614 = vpop.permute.xlu0 %1613
    %1615 = vrot.lane.b32.xlu0 %v319, 104
    %v1616 = vpop.permute.xlu0 %1615
    %1617 = vrot.lane.b32.xlu0 %v314, 72
    %v1618 = vpop.permute.xlu0 %1617
    %1619 = vrot.lane.b32.xlu0 %v319, 72
    %v1620 = vpop.permute.xlu0 %1619
    %v1621 = vsel %vm330, %v1614, 0
    %v1623 = vsel %vm330, %v1616, 0
    %v1625 = vsel %vm330, %v1618, 0
    %v1627 = vsel %vm330, %v1620, 0
    %1629 = vmatprep.subr.mxu0 0.0
    %1630 = vmatpush1.xpose.msra.mxu0 0.0
    %1631 = vmatprep.subr.mxu0 0.0
    %1632 = vmatpush1.xpose.msra.mxu0 0.0
    %1633 = vmatprep.subr.mxu0 0.0
    %1634 = vmatpush1.xpose.msra.mxu0 0.0
    %1635 = vmatprep.subr.mxu0 0.0
    %1636 = vmatpush1.xpose.msra.mxu0 0.0
    %1637 = vmatprep.subr.mxu0 0.0
    %1638 = vmatpush1.xpose.msra.mxu0 0.0
    %1639 = vmatprep.subr.mxu0 0.0
    %1640 = vmatpush1.xpose.msra.mxu0 0.0
    %1641 = vmatprep.subr.mxu0 0.0
    %1642 = vmatpush1.xpose.msra.mxu0 0.0
    %1643 = vmatprep.subr.mxu0 0.0
    %1644 = vmatpush1.xpose.msra.mxu0 0.0
    %1645 = vmatprep.subr.mxu0 0.0
    %1646 = vmatpush1.xpose.msra.mxu0 0.0
    %1647 = vmatprep.subr.mxu0 0.0
    %1648 = vmatpush1.xpose.msra.mxu0 0.0
    %1649 = vmatprep.subr.mxu0 0.0
    %1650 = vmatpush1.xpose.msra.mxu0 0.0
    %1651 = vmatprep.subr.mxu0 0.0
    %1652 = vmatpush1.xpose.msra.mxu0 0.0
    %1653 = vmatprep.subr.mxu0 0.0
    %1654 = vmatpush1.xpose.msra.mxu0 0.0
    %1655 = vmatprep.subr.mxu0 0.0
    %1656 = vmatpush1.xpose.msra.mxu0 0.0
    %1657 = vmatprep.subr.mxu0 0.0
    %1658 = vmatpush1.xpose.msra.mxu0 %v1627
    %1659 = vmatprep.subr.mxu0 0.0
    %1660 = vmatpush1.xpose.msra.mxu0 %v1625
    %1661 = vmatprep.subr.mxu0 0.0
    %1662 = vmatpush2.xpose.msra.mxu0 0.0
    %1663 = vmatprep.subr.mxu0 0.0
    %1664 = vmatpush2.xpose.msra.mxu0 0.0
    %1665 = vmatprep.subr.mxu0 0.0
    %1666 = vmatpush2.xpose.msra.mxu0 0.0
    %1667 = vmatprep.subr.mxu0 0.0
    %1668 = vmatpush2.xpose.msra.mxu0 0.0
    %1669 = vmatprep.subr.mxu0 0.0
    %1670 = vmatpush2.xpose.msra.mxu0 0.0
    %1671 = vmatprep.subr.mxu0 0.0
    %1672 = vmatpush2.xpose.msra.mxu0 0.0
    %1673 = vmatprep.subr.mxu0 0.0
    %1674 = vmatpush2.xpose.msra.mxu0 0.0
    %1675 = vmatprep.subr.mxu0 0.0
    %1676 = vmatpush2.xpose.msra.mxu0 0.0
    %1677 = vmatprep.subr.mxu0 0.0
    %1678 = vmatpush2.xpose.msra.mxu0 0.0
    %1679 = vmatprep.subr.mxu0 0.0
    %1680 = vmatpush2.xpose.msra.mxu0 0.0
    %1681 = vmatprep.subr.mxu0 0.0
    %1682 = vmatpush2.xpose.msra.mxu0 0.0
    %1683 = vmatprep.subr.mxu0 0.0
    %1684 = vmatpush2.xpose.msra.mxu0 0.0
    %1685 = vmatprep.subr.mxu0 0.0
    %1686 = vmatpush2.xpose.msra.mxu0 0.0
    %1687 = vmatprep.subr.mxu0 0.0
    %1688 = vmatpush2.xpose.msra.mxu0 0.0
    %1689 = vmatprep.subr.mxu0 0.0
    %1690 = vmatpush2.xpose.msra.mxu0 0.0
    %1691 = vmatprep.subr.mxu0 0.0
    %1692 = vmatpush2.xpose.msra.mxu0 0.0
    %1693 = vmatprep.mubr.f32.mxu0 0.0
    %1694 = vmatmul.mubr.f32.gmra.mxu0 %v1621
    %v1695 = vpop.f32.mrf.mxu0
    %v1696 = vadd.f32 %v322, %v1695
    %v1697 = vpop.f32.mrf.mxu0
    %1698 = vmatprep.mubr.f32.mxu0 0.0
    %1699 = vmatmul.mubr.f32.gmra.mxu0 %v1623
    %v1700 = vpop.f32.mrf.mxu0
    %v1701 = vadd.f32 %v323, %v1700
    %v1702 = vpop.f32.mrf.mxu0
    %1703 = vdwg.mxu0
    %v1704 = vsel %vm503, %v1605, -inf
    %1705 = vmax.xlane.f32.xlu0 %v1704
    %v1706 = vpop.xlane.xlu0 %1705
    %v1707 = vsel %vm503, %v1610, -inf
    %1708 = vmax.xlane.f32.xlu0 %v1707
    %v1709 = vpop.xlane.xlu0 %1708
    %v1710 = vsel %vm503, %v1696, -inf
    %1711 = vmax.xlane.f32.xlu0 %v1710
    %v1712 = vpop.xlane.xlu0 %1711
    %v1713 = vsel %vm503, %v1701, -inf
    %1714 = vmax.xlane.f32.xlu0 %v1713
    %v1715 = vpop.xlane.xlu0 %1714
    %v1716 = vsub.f32 %v1605, %v1706
    %v1717 = vsub.f32 %v1610, %v1709
    %v1718 = vsub.f32 %v1696, %v1712
    %v1719 = vsub.f32 %v1701, %v1715
    %v1720 = vmul.f32 %v1716, 1.442695
    %v1721 = vpow.pop %v1720
    %v1722 = vmul.f32 %v1717, 1.442695
    %v1723 = vpow.pop %v1722
    %v1724 = vmul.f32 %v1718, 1.442695
    %v1725 = vpow.pop %v1724
    %v1726 = vmul.f32 %v1719, 1.442695
    %v1727 = vpow.pop %v1726
    %v1728 = vsel %vm503, %v1721, 0.0
    %1729 = vadd.xlane.f32.xlu0 %v1728
    %v1730 = vpop.xlane.xlu0 %1729
    %v1731 = vsel %vm503, %v1723, 0.0
    %1732 = vadd.xlane.f32.xlu0 %v1731
    %v1733 = vpop.xlane.xlu0 %1732
    %v1734 = vsel %vm503, %v1725, 0.0
    %1735 = vadd.xlane.f32.xlu0 %v1734
    %v1736 = vpop.xlane.xlu0 %1735
    %v1737 = vsel %vm503, %v1727, 0.0
    %1738 = vadd.xlane.f32.xlu0 %v1737
    %v1739 = vpop.xlane.xlu0 %1738
    %v1740 = vrcp.pop %v1730
    %v1741 = vrcp.pop %v1733
    %v1742 = vrcp.pop %v1736
    %v1743 = vrcp.pop %v1739
    %v1744 = vmul.f32 %v1721, %v1740
    %v1745 = vmul.f32 %v1723, %v1741
    %v1746 = vmul.f32 %v1725, %v1742
    %v1747 = vmul.f32 %v1727, %v1743
    %1748 = vrot.lane.b32.xlu0 %v304, 40
    %v1749 = vpop.permute.xlu0 %1748
    %1750 = vrot.lane.b32.xlu0 %v309, 40
    %v1751 = vpop.permute.xlu0 %1750
    %v1755 = vsel %vm503, %v1744, 0
    %v1758 = vsel %vm503, %v1745, 0
    %1760 = vmatprep.subr.mxu0 0.0
    %1761 = vmatpush1.msra.mxu0 0.0
    %1762 = vmatprep.subr.mxu0 0.0
    %1763 = vmatpush1.msra.mxu0 0.0
    %1764 = vmatprep.subr.mxu0 0.0
    %1765 = vmatpush1.msra.mxu0 0.0
    %1766 = vmatprep.subr.mxu0 0.0
    %1767 = vmatpush1.msra.mxu0 0.0
    %1768 = vmatprep.subr.mxu0 0.0
    %1769 = vmatpush1.msra.mxu0 0.0
    %1770 = vmatprep.subr.mxu0 0.0
    %1771 = vmatpush1.msra.mxu0 0.0
    %1772 = vmatprep.subr.mxu0 0.0
    %1773 = vmatpush1.msra.mxu0 0.0
    %1774 = vmatprep.subr.mxu0 0.0
    %1775 = vmatpush1.msra.mxu0 0.0
    %1776 = vmatprep.subr.mxu0 0.0
    %1777 = vmatpush1.msra.mxu0 0.0
    %1778 = vmatprep.subr.mxu0 0.0
    %1779 = vmatpush1.msra.mxu0 0.0
    %1780 = vmatprep.subr.mxu0 0.0
    %1781 = vmatpush1.msra.mxu0 0.0
    %1782 = vmatprep.subr.mxu0 0.0
    %1783 = vmatpush1.msra.mxu0 0.0
    %1784 = vmatprep.subr.mxu0 0.0
    %1785 = vmatpush1.msra.mxu0 0.0
    %1786 = vmatprep.subr.mxu0 0.0
    %1787 = vmatpush1.msra.mxu0 0.0
    %1788 = vmatprep.subr.mxu0 0.0
    %1789 = vmatpush1.msra.mxu0 %v1751
    %1790 = vmatprep.subr.mxu0 0.0
    %1791 = vmatpush1.msra.mxu0 %v1749
    %1792 = vmatprep.subr.mxu0 0.0
    %1793 = vmatpush2.msra.mxu0 0.0
    %1794 = vmatprep.subr.mxu0 0.0
    %1795 = vmatpush2.msra.mxu0 0.0
    %1796 = vmatprep.subr.mxu0 0.0
    %1797 = vmatpush2.msra.mxu0 0.0
    %1798 = vmatprep.subr.mxu0 0.0
    %1799 = vmatpush2.msra.mxu0 0.0
    %1800 = vmatprep.subr.mxu0 0.0
    %1801 = vmatpush2.msra.mxu0 0.0
    %1802 = vmatprep.subr.mxu0 0.0
    %1803 = vmatpush2.msra.mxu0 0.0
    %1804 = vmatprep.subr.mxu0 0.0
    %1805 = vmatpush2.msra.mxu0 0.0
    %1806 = vmatprep.subr.mxu0 0.0
    %1807 = vmatpush2.msra.mxu0 0.0
    %1808 = vmatprep.subr.mxu0 0.0
    %1809 = vmatpush2.msra.mxu0 0.0
    %1810 = vmatprep.subr.mxu0 0.0
    %1811 = vmatpush2.msra.mxu0 0.0
    %1812 = vmatprep.subr.mxu0 0.0
    %1813 = vmatpush2.msra.mxu0 0.0
    %1814 = vmatprep.subr.mxu0 0.0
    %1815 = vmatpush2.msra.mxu0 0.0
    %1816 = vmatprep.subr.mxu0 0.0
    %1817 = vmatpush2.msra.mxu0 0.0
    %1818 = vmatprep.subr.mxu0 0.0
    %1819 = vmatpush2.msra.mxu0 0.0
    %1820 = vmatprep.subr.mxu0 0.0
    %1821 = vmatpush2.msra.mxu0 0.0
    %1822 = vmatprep.subr.mxu0 0.0
    %1823 = vmatpush2.msra.mxu0 0.0
    %1824 = vmatprep.mubr.f32.mxu0 0.0
    %1825 = vmatmul.mubr.f32.gmra.mxu0 %v1755
    %v1826 = vpop.f32.mrf.mxu0
    %v1827 = vadd.f32 0.0, %v1826
    %v1828 = vpop.f32.mrf.mxu0
    %1829 = vmatprep.mubr.f32.mxu0 0.0
    %1830 = vmatmul.mubr.f32.gmra.mxu0 %v1758
    %v1831 = vpop.f32.mrf.mxu0
    %v1832 = vadd.f32 0.0, %v1831
    %v1833 = vpop.f32.mrf.mxu0
    %1834 = vdwg.mxu0
    %1835 = vrot.lane.b32.xlu0 %v314, 40
    %v1836 = vpop.permute.xlu0 %1835
    %1837 = vrot.lane.b32.xlu0 %v319, 40
    %v1838 = vpop.permute.xlu0 %1837
    %v1842 = vsel %vm503, %v1746, 0
    %v1845 = vsel %vm503, %v1747, 0
    %1847 = vmatprep.subr.mxu0 0.0
    %1848 = vmatpush1.msra.mxu0 0.0
    %1849 = vmatprep.subr.mxu0 0.0
    %1850 = vmatpush1.msra.mxu0 0.0
    %1851 = vmatprep.subr.mxu0 0.0
    %1852 = vmatpush1.msra.mxu0 0.0
    %1853 = vmatprep.subr.mxu0 0.0
    %1854 = vmatpush1.msra.mxu0 0.0
    %1855 = vmatprep.subr.mxu0 0.0
    %1856 = vmatpush1.msra.mxu0 0.0
    %1857 = vmatprep.subr.mxu0 0.0
    %1858 = vmatpush1.msra.mxu0 0.0
    %1859 = vmatprep.subr.mxu0 0.0
    %1860 = vmatpush1.msra.mxu0 0.0
    %1861 = vmatprep.subr.mxu0 0.0
    %1862 = vmatpush1.msra.mxu0 0.0
    %1863 = vmatprep.subr.mxu0 0.0
    %1864 = vmatpush1.msra.mxu0 0.0
    %1865 = vmatprep.subr.mxu0 0.0
    %1866 = vmatpush1.msra.mxu0 0.0
    %1867 = vmatprep.subr.mxu0 0.0
    %1868 = vmatpush1.msra.mxu0 0.0
    %1869 = vmatprep.subr.mxu0 0.0
    %1870 = vmatpush1.msra.mxu0 0.0
    %1871 = vmatprep.subr.mxu0 0.0
    %1872 = vmatpush1.msra.mxu0 0.0
    %1873 = vmatprep.subr.mxu0 0.0
    %1874 = vmatpush1.msra.mxu0 0.0
    %1875 = vmatprep.subr.mxu0 0.0
    %1876 = vmatpush1.msra.mxu0 %v1838
    %1877 = vmatprep.subr.mxu0 0.0
    %1878 = vmatpush1.msra.mxu0 %v1836
    %1879 = vmatprep.subr.mxu0 0.0
    %1880 = vmatpush2.msra.mxu0 0.0
    %1881 = vmatprep.subr.mxu0 0.0
    %1882 = vmatpush2.msra.mxu0 0.0
    %1883 = vmatprep.subr.mxu0 0.0
    %1884 = vmatpush2.msra.mxu0 0.0
    %1885 = vmatprep.subr.mxu0 0.0
    %1886 = vmatpush2.msra.mxu0 0.0
    %1887 = vmatprep.subr.mxu0 0.0
    %1888 = vmatpush2.msra.mxu0 0.0
    %1889 = vmatprep.subr.mxu0 0.0
    %1890 = vmatpush2.msra.mxu0 0.0
    %1891 = vmatprep.subr.mxu0 0.0
    %1892 = vmatpush2.msra.mxu0 0.0
    %1893 = vmatprep.subr.mxu0 0.0
    %1894 = vmatpush2.msra.mxu0 0.0
    %1895 = vmatprep.subr.mxu0 0.0
    %1896 = vmatpush2.msra.mxu0 0.0
    %1897 = vmatprep.subr.mxu0 0.0
    %1898 = vmatpush2.msra.mxu0 0.0
    %1899 = vmatprep.subr.mxu0 0.0
    %1900 = vmatpush2.msra.mxu0 0.0
    %1901 = vmatprep.subr.mxu0 0.0
    %1902 = vmatpush2.msra.mxu0 0.0
    %1903 = vmatprep.subr.mxu0 0.0
    %1904 = vmatpush2.msra.mxu0 0.0
    %1905 = vmatprep.subr.mxu0 0.0
    %1906 = vmatpush2.msra.mxu0 0.0
    %1907 = vmatprep.subr.mxu0 0.0
    %1908 = vmatpush2.msra.mxu0 0.0
    %1909 = vmatprep.subr.mxu0 0.0
    %1910 = vmatpush2.msra.mxu0 0.0
    %1911 = vmatprep.mubr.f32.mxu0 0.0
    %1912 = vmatmul.mubr.f32.gmra.mxu0 %v1842
    %v1913 = vpop.f32.mrf.mxu0
    %v1914 = vadd.f32 0.0, %v1913
    %v1915 = vpop.f32.mrf.mxu0
    %1916 = vmatprep.mubr.f32.mxu0 0.0
    %1917 = vmatmul.mubr.f32.gmra.mxu0 %v1845
    %v1918 = vpop.f32.mrf.mxu0
    %v1919 = vadd.f32 0.0, %v1918
    %v1920 = vpop.f32.mrf.mxu0
    %1921 = vdwg.mxu0
    %1926 = vrot.lane.b32.xlu0 %v1027, 8
    %v1927 = vpop.permute.xlu0 %1926
    %1928 = vrot.lane.b32.xlu0 %v1032, 8
    %v1929 = vpop.permute.xlu0 %1928
    %1930 = vrot.lane.b32.xlu0 %v1114, 8
    %v1931 = vpop.permute.xlu0 %1930
    %1932 = vrot.lane.b32.xlu0 %v1119, 8
    %v1933 = vpop.permute.xlu0 %1932
    %1942 = vrot.lane.b32.xlu0 %v1427, 16
    %v1943 = vpop.permute.xlu0 %1942
    %1944 = vrot.lane.b32.xlu0 %v1432, 16
    %v1945 = vpop.permute.xlu0 %1944
    %1946 = vrot.lane.b32.xlu0 %v1514, 16
    %v1947 = vpop.permute.xlu0 %1946
    %1948 = vrot.lane.b32.xlu0 %v1519, 16
    %v1949 = vpop.permute.xlu0 %1948
    %1958 = vrot.lane.b32.xlu0 %v1827, 24
    %v1959 = vpop.permute.xlu0 %1958
    %1960 = vrot.lane.b32.xlu0 %v1832, 24
    %v1961 = vpop.permute.xlu0 %1960
    %1962 = vrot.lane.b32.xlu0 %v1914, 24
    %v1963 = vpop.permute.xlu0 %1962
    %1964 = vrot.lane.b32.xlu0 %v1919, 24
    %v1965 = vpop.permute.xlu0 %1964
    %v1970 = vsel %vm330, %v627, %v1927
    %v1971 = vsel %vm330, %v632, %v1929
    %v1972 = vsel %vm330, %v714, %v1931
    %v1973 = vsel %vm330, %v719, %v1933
    %v1974 = vsel %vm503, %v1970, %v1943
    %v1975 = vsel %vm503, %v1971, %v1945
    %v1976 = vsel %vm503, %v1972, %v1947
    %v1977 = vsel %vm503, %v1973, %v1949
    %vm1978 = vcmask 195584
    %v1979 = vsel %vm1978, %v1974, %v1959
    %v1980 = vsel %vm1978, %v1975, %v1961
    %v1981 = vsel %vm1978, %v1976, %v1963
    %v1982 = vsel %vm1978, %v1977, %v1965
    %v1983 = vld [vmem:[%s5] sm:$0xff]
    %v1984 = vld [vmem:[%s5 + $0x8] sm:$0xff]
    %v1985 = vld [vmem:[%s5 + $0x10] sm:$0xff]
    %v1986 = vld [vmem:[%s5 + $0x18] sm:$0xff]
    %v1988 = vsel %vm63, %v1979, 0
    %v1991 = vsel %vm63, %v1980, 0
    %v1994 = vsel %vm63, %v1981, 0
    %v1997 = vsel %vm63, %v1982, 0
    %1999 = vmatprep.subr.mxu0 0.0
    %2000 = vmatpush1.msra.mxu0 0.0
    %2001 = vmatprep.subr.mxu0 0.0
    %2002 = vmatpush1.msra.mxu0 0.0
    %2003 = vmatprep.subr.mxu0 0.0
    %2004 = vmatpush1.msra.mxu0 0.0
    %2005 = vmatprep.subr.mxu0 0.0
    %2006 = vmatpush1.msra.mxu0 0.0
    %2007 = vmatprep.subr.mxu0 0.0
    %2008 = vmatpush1.msra.mxu0 0.0
    %2009 = vmatprep.subr.mxu0 0.0
    %2010 = vmatpush1.msra.mxu0 0.0
    %2011 = vmatprep.subr.mxu0 0.0
    %2012 = vmatpush1.msra.mxu0 0.0
    %2013 = vmatprep.subr.mxu0 0.0
    %2014 = vmatpush1.msra.mxu0 0.0
    %2015 = vmatprep.subr.mxu0 0.0
    %2016 = vmatpush1.msra.mxu0 0.0
    %2017 = vmatprep.subr.mxu0 0.0
    %2018 = vmatpush1.msra.mxu0 0.0
    %2019 = vmatprep.subr.mxu0 0.0
    %2020 = vmatpush1.msra.mxu0 0.0
    %2021 = vmatprep.subr.mxu0 0.0
    %2022 = vmatpush1.msra.mxu0 0.0
    %2023 = vmatprep.subr.mxu0 0.0
    %2024 = vmatpush1.msra.mxu0 %v1986
    %2025 = vmatprep.subr.mxu0 0.0
    %2026 = vmatpush1.msra.mxu0 %v1985
    %2027 = vmatprep.subr.mxu0 0.0
    %2028 = vmatpush1.msra.mxu0 %v1984
    %2029 = vmatprep.subr.mxu0 0.0
    %2030 = vmatpush1.msra.mxu0 %v1983
    %2031 = vmatprep.subr.mxu0 0.0
    %2032 = vmatpush2.msra.mxu0 0.0
    %2033 = vmatprep.subr.mxu0 0.0
    %2034 = vmatpush2.msra.mxu0 0.0
    %2035 = vmatprep.subr.mxu0 0.0
    %2036 = vmatpush2.msra.mxu0 0.0
    %2037 = vmatprep.subr.mxu0 0.0
    %2038 = vmatpush2.msra.mxu0 0.0
    %2039 = vmatprep.subr.mxu0 0.0
    %2040 = vmatpush2.msra.mxu0 0.0
    %2041 = vmatprep.subr.mxu0 0.0
    %2042 = vmatpush2.msra.mxu0 0.0
    %2043 = vmatprep.subr.mxu0 0.0
    %2044 = vmatpush2.msra.mxu0 0.0
    %2045 = vmatprep.subr.mxu0 0.0
    %2046 = vmatpush2.msra.mxu0 0.0
    %2047 = vmatprep.subr.mxu0 0.0
    %2048 = vmatpush2.msra.mxu0 0.0
    %2049 = vmatprep.subr.mxu0 0.0
    %2050 = vmatpush2.msra.mxu0 0.0
    %2051 = vmatprep.subr.mxu0 0.0
    %2052 = vmatpush2.msra.mxu0 0.0
    %2053 = vmatprep.subr.mxu0 0.0
    %2054 = vmatpush2.msra.mxu0 0.0
    %2055 = vmatprep.subr.mxu0 0.0
    %2056 = vmatpush2.msra.mxu0 0.0
    %2057 = vmatprep.subr.mxu0 0.0
    %2058 = vmatpush2.msra.mxu0 0.0
    %2059 = vmatprep.subr.mxu0 0.0
    %2060 = vmatpush2.msra.mxu0 0.0
    %2061 = vmatprep.subr.mxu0 0.0
    %2062 = vmatpush2.msra.mxu0 0.0
    %2063 = vmatprep.mubr.f32.mxu0 0.0
    %2064 = vmatmul.mubr.f32.gmra.mxu0 %v1988
    %v2065 = vpop.f32.mrf.mxu0
    %v2066 = vadd.f32 0.0, %v2065
    %v2067 = vpop.f32.mrf.mxu0
    %2068 = vmatprep.mubr.f32.mxu0 0.0
    %2069 = vmatmul.mubr.f32.gmra.mxu0 %v1991
    %v2070 = vpop.f32.mrf.mxu0
    %v2071 = vadd.f32 0.0, %v2070
    %v2072 = vpop.f32.mrf.mxu0
    %2073 = vmatprep.mubr.f32.mxu0 0.0
    %2074 = vmatmul.mubr.f32.gmra.mxu0 %v1994
    %v2075 = vpop.f32.mrf.mxu0
    %v2076 = vadd.f32 0.0, %v2075
    %v2077 = vpop.f32.mrf.mxu0
    %2078 = vmatprep.mubr.f32.mxu0 0.0
    %2079 = vmatmul.mubr.f32.gmra.mxu0 %v1997
    %v2080 = vpop.f32.mrf.mxu0
    %v2081 = vadd.f32 0.0, %v2080
    %v2082 = vpop.f32.mrf.mxu0
    %2083 = vdwg.mxu0
    %v2084 = vadd.f32 %v143, %v2066
    %v2085 = vadd.f32 %v148, %v2071
    %v2086 = vadd.f32 %v153, %v2076
    %v2087 = vadd.f32 %v158, %v2081
    %v2088 = vld [vmem:[%s6] sm:$0x1]
    %v2090 = vlaneseq
    %v2091 = vshrl.u32 %v2090, 7
    %v2092 = vsub.s32 0, %v2091
    %v2093 = vrot.slane %v2088, %v2092
    %v2095 = vadd.f32 %v2084, %v2093
    %v2096 = vadd.f32 %v2085, %v2093
    %v2097 = vadd.f32 %v2086, %v2093
    %v2098 = vadd.f32 %v2087, %v2093
    %v2099 = vsel %vm63, %v2095, 0.0
    %2100 = vadd.xlane.f32.xlu0 %v2099
    %v2101 = vpop.xlane.xlu0 %2100
    %v2102 = vsel %vm63, %v2096, 0.0
    %2103 = vadd.xlane.f32.xlu0 %v2102
    %v2104 = vpop.xlane.xlu0 %2103
    %v2105 = vsel %vm63, %v2097, 0.0
    %2106 = vadd.xlane.f32.xlu0 %v2105
    %v2107 = vpop.xlane.xlu0 %2106
    %v2108 = vsel %vm63, %v2098, 0.0
    %2109 = vadd.xlane.f32.xlu0 %v2108
    %v2110 = vpop.xlane.xlu0 %2109
    %v2111 = vmul.f32 %v2101, %v173
    %v2112 = vmul.f32 %v2104, %v173
    %v2113 = vmul.f32 %v2107, %v173
    %v2114 = vmul.f32 %v2110, %v173
    %v2115 = vsub.f32 %v2095, %v2111
    %v2116 = vsub.f32 %v2096, %v2112
    %v2117 = vsub.f32 %v2097, %v2113
    %v2118 = vsub.f32 %v2098, %v2114
    %v2119 = vmul.f32 %v2115, %v2115
    %v2120 = vmul.f32 %v2116, %v2116
    %v2121 = vmul.f32 %v2117, %v2117
    %v2122 = vmul.f32 %v2118, %v2118
    %v2123 = vsel %vm63, %v2119, 0.0
    %2124 = vadd.xlane.f32.xlu0 %v2123
    %v2125 = vpop.xlane.xlu0 %2124
    %v2126 = vsel %vm63, %v2120, 0.0
    %2127 = vadd.xlane.f32.xlu0 %v2126
    %v2128 = vpop.xlane.xlu0 %2127
    %v2129 = vsel %vm63, %v2121, 0.0
    %2130 = vadd.xlane.f32.xlu0 %v2129
    %v2131 = vpop.xlane.xlu0 %2130
    %v2132 = vsel %vm63, %v2122, 0.0
    %2133 = vadd.xlane.f32.xlu0 %v2132
    %v2134 = vpop.xlane.xlu0 %2133
    %v2135 = vmul.f32 %v2125, %v173
    %v2136 = vmul.f32 %v2128, %v173
    %v2137 = vmul.f32 %v2131, %v173
    %v2138 = vmul.f32 %v2134, %v173
    %v2139 = vadd.f32 %v2135, 1e-05
    %v2140 = vadd.f32 %v2136, 1e-05
    %v2141 = vadd.f32 %v2137, 1e-05
    %v2142 = vadd.f32 %v2138, 1e-05
    %v2143 = vrsqrt.pop %v2139
    %v2144 = vrsqrt.pop %v2140
    %v2145 = vrsqrt.pop %v2141
    %v2146 = vrsqrt.pop %v2142
    %v2147 = vmul.f32 %v2115, %v2143
    %v2148 = vmul.f32 %v2116, %v2144
    %v2149 = vmul.f32 %v2117, %v2145
    %v2150 = vmul.f32 %v2118, %v2146
    %v2151 = vld [vmem:[%s7] sm:$0xff]
    %v2152 = vld [vmem:[%s7 + $0x8] sm:$0xff]
    %v2153 = vld [vmem:[%s7 + $0x10] sm:$0xff]
    %v2154 = vld [vmem:[%s7 + $0x18] sm:$0xff]
    %v2155 = vld [vmem:[%s8] sm:$0x1]
    %v2157 = vlaneseq
    %v2158 = vshrl.u32 %v2157, 7
    %v2159 = vsub.s32 0, %v2158
    %v2160 = vrot.slane %v2155, %v2159
    %v2163 = vsel %vm63, %v2147, 0
    %v2166 = vsel %vm63, %v2148, 0
    %v2169 = vsel %vm63, %v2149, 0
    %v2172 = vsel %vm63, %v2150, 0
    %2174 = vmatprep.subr.mxu0 0.0
    %2175 = vmatpush1.msra.mxu0 0.0
    %2176 = vmatprep.subr.mxu0 0.0
    %2177 = vmatpush1.msra.mxu0 0.0
    %2178 = vmatprep.subr.mxu0 0.0
    %2179 = vmatpush1.msra.mxu0 0.0
    %2180 = vmatprep.subr.mxu0 0.0
    %2181 = vmatpush1.msra.mxu0 0.0
    %2182 = vmatprep.subr.mxu0 0.0
    %2183 = vmatpush1.msra.mxu0 0.0
    %2184 = vmatprep.subr.mxu0 0.0
    %2185 = vmatpush1.msra.mxu0 0.0
    %2186 = vmatprep.subr.mxu0 0.0
    %2187 = vmatpush1.msra.mxu0 0.0
    %2188 = vmatprep.subr.mxu0 0.0
    %2189 = vmatpush1.msra.mxu0 0.0
    %2190 = vmatprep.subr.mxu0 0.0
    %2191 = vmatpush1.msra.mxu0 0.0
    %2192 = vmatprep.subr.mxu0 0.0
    %2193 = vmatpush1.msra.mxu0 0.0
    %2194 = vmatprep.subr.mxu0 0.0
    %2195 = vmatpush1.msra.mxu0 0.0
    %2196 = vmatprep.subr.mxu0 0.0
    %2197 = vmatpush1.msra.mxu0 0.0
    %2198 = vmatprep.subr.mxu0 0.0
    %2199 = vmatpush1.msra.mxu0 %v2154
    %2200 = vmatprep.subr.mxu0 0.0
    %2201 = vmatpush1.msra.mxu0 %v2153
    %2202 = vmatprep.subr.mxu0 0.0
    %2203 = vmatpush1.msra.mxu0 %v2152
    %2204 = vmatprep.subr.mxu0 0.0
    %2205 = vmatpush1.msra.mxu0 %v2151
    %2206 = vmatprep.subr.mxu0 0.0
    %2207 = vmatpush2.msra.mxu0 0.0
    %2208 = vmatprep.subr.mxu0 0.0
    %2209 = vmatpush2.msra.mxu0 0.0
    %2210 = vmatprep.subr.mxu0 0.0
    %2211 = vmatpush2.msra.mxu0 0.0
    %2212 = vmatprep.subr.mxu0 0.0
    %2213 = vmatpush2.msra.mxu0 0.0
    %2214 = vmatprep.subr.mxu0 0.0
    %2215 = vmatpush2.msra.mxu0 0.0
    %2216 = vmatprep.subr.mxu0 0.0
    %2217 = vmatpush2.msra.mxu0 0.0
    %2218 = vmatprep.subr.mxu0 0.0
    %2219 = vmatpush2.msra.mxu0 0.0
    %2220 = vmatprep.subr.mxu0 0.0
    %2221 = vmatpush2.msra.mxu0 0.0
    %2222 = vmatprep.subr.mxu0 0.0
    %2223 = vmatpush2.msra.mxu0 0.0
    %2224 = vmatprep.subr.mxu0 0.0
    %2225 = vmatpush2.msra.mxu0 0.0
    %2226 = vmatprep.subr.mxu0 0.0
    %2227 = vmatpush2.msra.mxu0 0.0
    %2228 = vmatprep.subr.mxu0 0.0
    %2229 = vmatpush2.msra.mxu0 0.0
    %2230 = vmatprep.subr.mxu0 0.0
    %2231 = vmatpush2.msra.mxu0 0.0
    %2232 = vmatprep.subr.mxu0 0.0
    %2233 = vmatpush2.msra.mxu0 0.0
    %2234 = vmatprep.subr.mxu0 0.0
    %2235 = vmatpush2.msra.mxu0 0.0
    %2236 = vmatprep.subr.mxu0 0.0
    %2237 = vmatpush2.msra.mxu0 0.0
    %2238 = vmatprep.mubr.f32.mxu0 0.0
    %2239 = vmatmul.mubr.f32.gmra.mxu0 %v2163
    %v2240 = vpop.f32.mrf.mxu0
    %v2241 = vadd.f32 %v2160, %v2240
    %v2242 = vpop.f32.mrf.mxu0
    %2243 = vmatprep.mubr.f32.mxu0 0.0
    %2244 = vmatmul.mubr.f32.gmra.mxu0 %v2166
    %v2245 = vpop.f32.mrf.mxu0
    %v2246 = vadd.f32 %v2160, %v2245
    %v2247 = vpop.f32.mrf.mxu0
    %2248 = vmatprep.mubr.f32.mxu0 0.0
    %2249 = vmatmul.mubr.f32.gmra.mxu0 %v2169
    %v2250 = vpop.f32.mrf.mxu0
    %v2251 = vadd.f32 %v2160, %v2250
    %v2252 = vpop.f32.mrf.mxu0
    %2253 = vmatprep.mubr.f32.mxu0 0.0
    %2254 = vmatmul.mubr.f32.gmra.mxu0 %v2172
    %v2255 = vpop.f32.mrf.mxu0
    %v2256 = vadd.f32 %v2160, %v2255
    %v2257 = vpop.f32.mrf.mxu0
    %2258 = vdwg.mxu0
    %v2259 = vmul.f32 %v2241, 0.5
    %v2260 = vmul.f32 %v2246, 0.5
    %v2261 = vmul.f32 %v2251, 0.5
    %v2262 = vmul.f32 %v2256, 0.5
    %v2263 = vmul.f32 %v2241, 0.70710677
    %v2264 = vmul.f32 %v2246, 0.70710677
    %v2265 = vmul.f32 %v2251, 0.70710677
    %v2266 = vmul.f32 %v2256, 0.70710677
    %v2267 = vand.u32 2147483647, %v2263
    %v2268 = vand.u32 2147483647, %v2264
    %v2269 = vand.u32 2147483647, %v2265
    %v2270 = vand.u32 2147483647, %v2266
    %v2271 = vmul.f32 %v2267, 0.3275911
    %v2272 = vmul.f32 %v2268, 0.3275911
    %v2273 = vmul.f32 %v2269, 0.3275911
    %v2274 = vmul.f32 %v2270, 0.3275911
    %v2275 = vadd.f32 %v2271, 1.0
    %v2276 = vadd.f32 %v2272, 1.0
    %v2277 = vadd.f32 %v2273, 1.0
    %v2278 = vadd.f32 %v2274, 1.0
    %v2279 = vrcp.pop %v2275
    %v2280 = vmul.f32 1.0, %v2279
    %v2281 = vrcp.pop %v2276
    %v2282 = vmul.f32 1.0, %v2281
    %v2283 = vrcp.pop %v2277
    %v2284 = vmul.f32 1.0, %v2283
    %v2285 = vrcp.pop %v2278
    %v2286 = vmul.f32 1.0, %v2285
    %v2287 = vmul.f32 %v2280, 1.0614054
    %v2288 = vmul.f32 %v2282, 1.0614054
    %v2289 = vmul.f32 %v2284, 1.0614054
    %v2290 = vmul.f32 %v2286, 1.0614054
    %v2291 = vadd.f32 %v2287, -1.4531521
    %v2292 = vadd.f32 %v2288, -1.4531521
    %v2293 = vadd.f32 %v2289, -1.4531521
    %v2294 = vadd.f32 %v2290, -1.4531521
    %v2295 = vmul.f32 %v2291, %v2280
    %v2296 = vmul.f32 %v2292, %v2282
    %v2297 = vmul.f32 %v2293, %v2284
    %v2298 = vmul.f32 %v2294, %v2286
    %v2299 = vadd.f32 %v2295, 1.4214138
    %v2300 = vadd.f32 %v2296, 1.4214138
    %v2301 = vadd.f32 %v2297, 1.4214138
    %v2302 = vadd.f32 %v2298, 1.4214138
    %v2303 = vmul.f32 %v2299, %v2280
    %v2304 = vmul.f32 %v2300, %v2282
    %v2305 = vmul.f32 %v2301, %v2284
    %v2306 = vmul.f32 %v2302, %v2286
    %v2307 = vadd.f32 %v2303, -0.28449672
    %v2308 = vadd.f32 %v2304, -0.28449672
    %v2309 = vadd.f32 %v2305, -0.28449672
    %v2310 = vadd.f32 %v2306, -0.28449672
    %v2311 = vmul.f32 %v2307, %v2280
    %v2312 = vmul.f32 %v2308, %v2282
    %v2313 = vmul.f32 %v2309, %v2284
    %v2314 = vmul.f32 %v2310, %v2286
    %v2315 = vadd.f32 %v2311, 0.2548296
    %v2316 = vadd.f32 %v2312, 0.2548296
    %v2317 = vadd.f32 %v2313, 0.2548296
    %v2318 = vadd.f32 %v2314, 0.2548296
    %v2319 = vmul.f32 %v2315, %v2280
    %v2320 = vmul.f32 %v2316, %v2282
    %v2321 = vmul.f32 %v2317, %v2284
    %v2322 = vmul.f32 %v2318, %v2286
    %v2323 = vsub.f32 0.0, %v2267
    %v2324 = vsub.f32 0.0, %v2268
    %v2325 = vsub.f32 0.0, %v2269
    %v2326 = vsub.f32 0.0, %v2270
    %v2327 = vmul.f32 %v2323, %v2267
    %v2328 = vmul.f32 %v2324, %v2268
    %v2329 = vmul.f32 %v2325, %v2269
    %v2330 = vmul.f32 %v2326, %v2270
    %v2331 = vmul.f32 %v2327, 1.442695
    %v2332 = vpow.pop %v2331
    %v2333 = vmul.f32 %v2328, 1.442695
    %v2334 = vpow.pop %v2333
    %v2335 = vmul.f32 %v2329, 1.442695
    %v2336 = vpow.pop %v2335
    %v2337 = vmul.f32 %v2330, 1.442695
    %v2338 = vpow.pop %v2337
    %v2339 = vmul.f32 %v2319, %v2332
    %v2340 = vmul.f32 %v2320, %v2334
    %v2341 = vmul.f32 %v2321, %v2336
    %v2342 = vmul.f32 %v2322, %v2338
    %v2343 = vsub.f32 1.0, %v2339
    %v2344 = vsub.f32 1.0, %v2340
    %v2345 = vsub.f32 1.0, %v2341
    %v2346 = vsub.f32 1.0, %v2342
    %vm2347 = vcmp.lt.f32.partialorder %v2263, 0.0
    %vm2348 = vcmp.lt.f32.partialorder %v2264, 0.0
    %vm2349 = vcmp.lt.f32.partialorder %v2265, 0.0
    %vm2350 = vcmp.lt.f32.partialorder %v2266, 0.0
    %v2351 = vsub.f32 0.0, %v2343
    %v2352 = vsub.f32 0.0, %v2344
    %v2353 = vsub.f32 0.0, %v2345
    %v2354 = vsub.f32 0.0, %v2346
    %v2355 = vsel %vm2347, %v2351, %v2343
    %v2356 = vsel %vm2348, %v2352, %v2344
    %v2357 = vsel %vm2349, %v2353, %v2345
    %v2358 = vsel %vm2350, %v2354, %v2346
    %v2359 = vadd.f32 %v2355, 1.0
    %v2360 = vadd.f32 %v2356, 1.0
    %v2361 = vadd.f32 %v2357, 1.0
    %v2362 = vadd.f32 %v2358, 1.0
    %v2363 = vmul.f32 %v2259, %v2359
    %v2364 = vmul.f32 %v2260, %v2360
    %v2365 = vmul.f32 %v2261, %v2361
    %v2366 = vmul.f32 %v2262, %v2362
    %v2367 = vld [vmem:[%s9] sm:$0xff]
    %v2368 = vld [vmem:[%s9 + $0x8] sm:$0xff]
    %v2369 = vld [vmem:[%s9 + $0x10] sm:$0xff]
    %v2370 = vld [vmem:[%s9 + $0x18] sm:$0xff]
    %v2371 = vld [vmem:[%s9 + $0x20] sm:$0xff]
    %v2372 = vld [vmem:[%s9 + $0x28] sm:$0xff]
    %v2373 = vld [vmem:[%s9 + $0x30] sm:$0xff]
    %v2374 = vld [vmem:[%s9 + $0x38] sm:$0xff]
    %vm2375 = vcmask 523264
    %v2377 = vsel %vm2375, %v2363, 0
    %v2380 = vsel %vm2375, %v2364, 0
    %v2383 = vsel %vm2375, %v2365, 0
    %v2386 = vsel %vm2375, %v2366, 0
    %2388 = vmatprep.subr.mxu0 0.0
    %2389 = vmatpush1.msra.mxu0 0.0
    %2390 = vmatprep.subr.mxu0 0.0
    %2391 = vmatpush1.msra.mxu0 0.0
    %2392 = vmatprep.subr.mxu0 0.0
    %2393 = vmatpush1.msra.mxu0 0.0
    %2394 = vmatprep.subr.mxu0 0.0
    %2395 = vmatpush1.msra.mxu0 0.0
    %2396 = vmatprep.subr.mxu0 0.0
    %2397 = vmatpush1.msra.mxu0 0.0
    %2398 = vmatprep.subr.mxu0 0.0
    %2399 = vmatpush1.msra.mxu0 0.0
    %2400 = vmatprep.subr.mxu0 0.0
    %2401 = vmatpush1.msra.mxu0 0.0
    %2402 = vmatprep.subr.mxu0 0.0
    %2403 = vmatpush1.msra.mxu0 0.0
    %2404 = vmatprep.subr.mxu0 0.0
    %2405 = vmatpush1.msra.mxu0 %v2374
    %2406 = vmatprep.subr.mxu0 0.0
    %2407 = vmatpush1.msra.mxu0 %v2373
    %2408 = vmatprep.subr.mxu0 0.0
    %2409 = vmatpush1.msra.mxu0 %v2372
    %2410 = vmatprep.subr.mxu0 0.0
    %2411 = vmatpush1.msra.mxu0 %v2371
    %2412 = vmatprep.subr.mxu0 0.0
    %2413 = vmatpush1.msra.mxu0 %v2370
    %2414 = vmatprep.subr.mxu0 0.0
    %2415 = vmatpush1.msra.mxu0 %v2369
    %2416 = vmatprep.subr.mxu0 0.0
    %2417 = vmatpush1.msra.mxu0 %v2368
    %2418 = vmatprep.subr.mxu0 0.0
    %2419 = vmatpush1.msra.mxu0 %v2367
    %2420 = vmatprep.subr.mxu0 0.0
    %2421 = vmatpush2.msra.mxu0 0.0
    %2422 = vmatprep.subr.mxu0 0.0
    %2423 = vmatpush2.msra.mxu0 0.0
    %2424 = vmatprep.subr.mxu0 0.0
    %2425 = vmatpush2.msra.mxu0 0.0
    %2426 = vmatprep.subr.mxu0 0.0
    %2427 = vmatpush2.msra.mxu0 0.0
    %2428 = vmatprep.subr.mxu0 0.0
    %2429 = vmatpush2.msra.mxu0 0.0
    %2430 = vmatprep.subr.mxu0 0.0
    %2431 = vmatpush2.msra.mxu0 0.0
    %2432 = vmatprep.subr.mxu0 0.0
    %2433 = vmatpush2.msra.mxu0 0.0
    %2434 = vmatprep.subr.mxu0 0.0
    %2435 = vmatpush2.msra.mxu0 0.0
    %2436 = vmatprep.subr.mxu0 0.0
    %2437 = vmatpush2.msra.mxu0 0.0
    %2438 = vmatprep.subr.mxu0 0.0
    %2439 = vmatpush2.msra.mxu0 0.0
    %2440 = vmatprep.subr.mxu0 0.0
    %2441 = vmatpush2.msra.mxu0 0.0
    %2442 = vmatprep.subr.mxu0 0.0
    %2443 = vmatpush2.msra.mxu0 0.0
    %2444 = vmatprep.subr.mxu0 0.0
    %2445 = vmatpush2.msra.mxu0 0.0
    %2446 = vmatprep.subr.mxu0 0.0
    %2447 = vmatpush2.msra.mxu0 0.0
    %2448 = vmatprep.subr.mxu0 0.0
    %2449 = vmatpush2.msra.mxu0 0.0
    %2450 = vmatprep.subr.mxu0 0.0
    %2451 = vmatpush2.msra.mxu0 0.0
    %2452 = vmatprep.mubr.f32.mxu0 0.0
    %2453 = vmatmul.mubr.f32.gmra.mxu0 %v2377
    %v2454 = vpop.f32.mrf.mxu0
    %v2455 = vadd.f32 0.0, %v2454
    %v2456 = vpop.f32.mrf.mxu0
    %2457 = vmatprep.mubr.f32.mxu0 0.0
    %2458 = vmatmul.mubr.f32.gmra.mxu0 %v2380
    %v2459 = vpop.f32.mrf.mxu0
    %v2460 = vadd.f32 0.0, %v2459
    %v2461 = vpop.f32.mrf.mxu0
    %2462 = vmatprep.mubr.f32.mxu0 0.0
    %2463 = vmatmul.mubr.f32.gmra.mxu0 %v2383
    %v2464 = vpop.f32.mrf.mxu0
    %v2465 = vadd.f32 0.0, %v2464
    %v2466 = vpop.f32.mrf.mxu0
    %2467 = vmatprep.mubr.f32.mxu0 0.0
    %2468 = vmatmul.mubr.f32.gmra.mxu0 %v2386
    %v2469 = vpop.f32.mrf.mxu0
    %v2470 = vadd.f32 0.0, %v2469
    %v2471 = vpop.f32.mrf.mxu0
    %2472 = vdwg.mxu0
    %v2473 = vadd.f32 %v2095, %v2455
    %v2474 = vadd.f32 %v2096, %v2460
    %v2475 = vadd.f32 %v2097, %v2465
    %v2476 = vadd.f32 %v2098, %v2470
    %v2477 = vld [vmem:[%s10] sm:$0x1]
    %v2479 = vlaneseq
    %v2480 = vshrl.u32 %v2479, 7
    %v2481 = vsub.s32 0, %v2480
    %v2482 = vrot.slane %v2477, %v2481
    %v2484 = vadd.f32 %v2473, %v2482
    %v2485 = vadd.f32 %v2474, %v2482
    %v2486 = vadd.f32 %v2475, %v2482
    %v2487 = vadd.f32 %v2476, %v2482
    %v2488 = vld [vmem:[%s12] sm:$0x3]
    %v2490 = vsel %vm63, %v2488, 0
    %2492 = vmatprep.subr.mxu0 0.0
    %2493 = vmatpush1.msra.mxu0 0.0
    %2494 = vmatprep.subr.mxu0 0.0
    %2495 = vmatpush1.msra.mxu0 0.0
    %2496 = vmatprep.subr.mxu0 0.0
    %2497 = vmatpush1.msra.mxu0 0.0
    %2498 = vmatprep.subr.mxu0 0.0
    %2499 = vmatpush1.msra.mxu0 0.0
    %2500 = vmatprep.subr.mxu0 0.0
    %2501 = vmatpush1.msra.mxu0 0.0
    %2502 = vmatprep.subr.mxu0 0.0
    %2503 = vmatpush1.msra.mxu0 0.0
    %2504 = vmatprep.subr.mxu0 0.0
    %2505 = vmatpush1.msra.mxu0 0.0
    %2506 = vmatprep.subr.mxu0 0.0
    %2507 = vmatpush1.msra.mxu0 0.0
    %2508 = vmatprep.subr.mxu0 0.0
    %2509 = vmatpush1.msra.mxu0 0.0
    %2510 = vmatprep.subr.mxu0 0.0
    %2511 = vmatpush1.msra.mxu0 0.0
    %2512 = vmatprep.subr.mxu0 0.0
    %2513 = vmatpush1.msra.mxu0 0.0
    %2514 = vmatprep.subr.mxu0 0.0
    %2515 = vmatpush1.msra.mxu0 0.0
    %2516 = vmatprep.subr.mxu0 0.0
    %2517 = vmatpush1.msra.mxu0 %v2487
    %2518 = vmatprep.subr.mxu0 0.0
    %2519 = vmatpush1.msra.mxu0 %v2486
    %2520 = vmatprep.subr.mxu0 0.0
    %2521 = vmatpush1.msra.mxu0 %v2485
    %2522 = vmatprep.subr.mxu0 0.0
    %2523 = vmatpush1.msra.mxu0 %v2484
    %2524 = vmatprep.subr.mxu0 0.0
    %2525 = vmatpush2.msra.mxu0 0.0
    %2526 = vmatprep.subr.mxu0 0.0
    %2527 = vmatpush2.msra.mxu0 0.0
    %2528 = vmatprep.subr.mxu0 0.0
    %2529 = vmatpush2.msra.mxu0 0.0
    %2530 = vmatprep.subr.mxu0 0.0
    %2531 = vmatpush2.msra.mxu0 0.0
    %2532 = vmatprep.subr.mxu0 0.0
    %2533 = vmatpush2.msra.mxu0 0.0
    %2534 = vmatprep.subr.mxu0 0.0
    %2535 = vmatpush2.msra.mxu0 0.0
    %2536 = vmatprep.subr.mxu0 0.0
    %2537 = vmatpush2.msra.mxu0 0.0
    %2538 = vmatprep.subr.mxu0 0.0
    %2539 = vmatpush2.msra.mxu0 0.0
    %2540 = vmatprep.subr.mxu0 0.0
    %2541 = vmatpush2.msra.mxu0 0.0
    %2542 = vmatprep.subr.mxu0 0.0
    %2543 = vmatpush2.msra.mxu0 0.0
    %2544 = vmatprep.subr.mxu0 0.0
    %2545 = vmatpush2.msra.mxu0 0.0
    %2546 = vmatprep.subr.mxu0 0.0
    %2547 = vmatpush2.msra.mxu0 0.0
    %2548 = vmatprep.subr.mxu0 0.0
    %2549 = vmatpush2.msra.mxu0 0.0
    %2550 = vmatprep.subr.mxu0 0.0
    %2551 = vmatpush2.msra.mxu0 0.0
    %2552 = vmatprep.subr.mxu0 0.0
    %2553 = vmatpush2.msra.mxu0 0.0
    %2554 = vmatprep.subr.mxu0 0.0
    %2555 = vmatpush2.msra.mxu0 0.0
    %2556 = vmatprep.mubr.f32.mxu0 0.0
    %2557 = vmatmul.mubr.f32.gmra.mxu0 %v2490
    %v2558 = vpop.f32.mrf.mxu0
    %v2559 = vadd.f32 0.0, %v2558
    %v2560 = vpop.f32.mrf.mxu0
    %2561 = vdwg.mxu0
    %v2562 = vld [vmem:[%s13] sm:$0xff]
    %v2563 = vld [vmem:[%s13 + $0x8] sm:$0xff]
    %v2564 = vld [vmem:[%s13 + $0x10] sm:$0xff]
    %v2565 = vld [vmem:[%s13 + $0x18] sm:$0xff]
    %v2566 = vld [vmem:[%s14] sm:$0x1]
    %v2568 = vlaneseq
    %v2569 = vshrl.u32 %v2568, 7
    %v2570 = vsub.s32 0, %v2569
    %v2571 = vrot.slane %v2566, %v2570
    %v2574 = vsel %vm63, %v2559, 0
    %2576 = vmatprep.subr.mxu0 0.0
    %2577 = vmatpush1.msra.mxu0 0.0
    %2578 = vmatprep.subr.mxu0 0.0
    %2579 = vmatpush1.msra.mxu0 0.0
    %2580 = vmatprep.subr.mxu0 0.0
    %2581 = vmatpush1.msra.mxu0 0.0
    %2582 = vmatprep.subr.mxu0 0.0
    %2583 = vmatpush1.msra.mxu0 0.0
    %2584 = vmatprep.subr.mxu0 0.0
    %2585 = vmatpush1.msra.mxu0 0.0
    %2586 = vmatprep.subr.mxu0 0.0
    %2587 = vmatpush1.msra.mxu0 0.0
    %2588 = vmatprep.subr.mxu0 0.0
    %2589 = vmatpush1.msra.mxu0 0.0
    %2590 = vmatprep.subr.mxu0 0.0
    %2591 = vmatpush1.msra.mxu0 0.0
    %2592 = vmatprep.subr.mxu0 0.0
    %2593 = vmatpush1.msra.mxu0 0.0
    %2594 = vmatprep.subr.mxu0 0.0
    %2595 = vmatpush1.msra.mxu0 0.0
    %2596 = vmatprep.subr.mxu0 0.0
    %2597 = vmatpush1.msra.mxu0 0.0
    %2598 = vmatprep.subr.mxu0 0.0
    %2599 = vmatpush1.msra.mxu0 0.0
    %2600 = vmatprep.subr.mxu0 0.0
    %2601 = vmatpush1.msra.mxu0 %v2565
    %2602 = vmatprep.subr.mxu0 0.0
    %2603 = vmatpush1.msra.mxu0 %v2564
    %2604 = vmatprep.subr.mxu0 0.0
    %2605 = vmatpush1.msra.mxu0 %v2563
    %2606 = vmatprep.subr.mxu0 0.0
    %2607 = vmatpush1.msra.mxu0 %v2562
    %2608 = vmatprep.subr.mxu0 0.0
    %2609 = vmatpush2.msra.mxu0 0.0
    %2610 = vmatprep.subr.mxu0 0.0
    %2611 = vmatpush2.msra.mxu0 0.0
    %2612 = vmatprep.subr.mxu0 0.0
    %2613 = vmatpush2.msra.mxu0 0.0
    %2614 = vmatprep.subr.mxu0 0.0
    %2615 = vmatpush2.msra.mxu0 0.0
    %2616 = vmatprep.subr.mxu0 0.0
    %2617 = vmatpush2.msra.mxu0 0.0
    %2618 = vmatprep.subr.mxu0 0.0
    %2619 = vmatpush2.msra.mxu0 0.0
    %2620 = vmatprep.subr.mxu0 0.0
    %2621 = vmatpush2.msra.mxu0 0.0
    %2622 = vmatprep.subr.mxu0 0.0
    %2623 = vmatpush2.msra.mxu0 0.0
    %2624 = vmatprep.subr.mxu0 0.0
    %2625 = vmatpush2.msra.mxu0 0.0
    %2626 = vmatprep.subr.mxu0 0.0
    %2627 = vmatpush2.msra.mxu0 0.0
    %2628 = vmatprep.subr.mxu0 0.0
    %2629 = vmatpush2.msra.mxu0 0.0
    %2630 = vmatprep.subr.mxu0 0.0
    %2631 = vmatpush2.msra.mxu0 0.0
    %2632 = vmatprep.subr.mxu0 0.0
    %2633 = vmatpush2.msra.mxu0 0.0
    %2634 = vmatprep.subr.mxu0 0.0
    %2635 = vmatpush2.msra.mxu0 0.0
    %2636 = vmatprep.subr.mxu0 0.0
    %2637 = vmatpush2.msra.mxu0 0.0
    %2638 = vmatprep.subr.mxu0 0.0
    %2639 = vmatpush2.msra.mxu0 0.0
    %2640 = vmatprep.mubr.f32.mxu0 0.0
    %2641 = vmatmul.mubr.f32.gmra.mxu0 %v2574
    %v2642 = vpop.f32.mrf.mxu0
    %v2643 = vadd.f32 %v2571, %v2642
    %v2644 = vpop.f32.mrf.mxu0
    %2645 = vdwg.mxu0
    %2646 = vst [vmem:[#allocation2] sm:$0x3] %v2643
    // Predicated region
    $region62: #{semg_transformer_forward.1} parent=1 // pred_check
      _
    $region63: #{semg_transformer_forward.1} parent=1 // pred_check_branch
      %2648 = sbr.rel (0) target = $region65
    $region64: #{semg_transformer_forward.1} parent=1 // pred_region
      %s2650 = ssub.s32 32, 32
      %2651 = vsyncadd [#allocation3], %s2650
      %s2653 = sshll.u32 [#allocation2], 4
      %s2654 = int_to_ptr.vmem [resolvable:$true] %s2653
      %2656 = dma.vmem_to_hbm [thread:$0]  %s2654, 32, %s15, [#allocation3]
    $region65: #{semg_transformer_forward.1} parent=1 // pred_fallthru
      _
    // Predicated region
    $region66: #{semg_transformer_forward.1} parent=1 // pred_check
      _
    $region67: #{semg_transformer_forward.1} parent=1 // pred_check_branch
      %2658 = sbr.rel (0) target = $region69
    $region68: #{semg_transformer_forward.1} parent=1 // pred_region
      %2659 = dma.done [#allocation3], 32
    $region69: #{semg_transformer_forward.1} parent=1 // pred_fallthru
      _
    %2660 = vsyncpa [#allocation3], 1

</llo_original>
